<compile_context>
chip_gen: v6e
topology: v6e:2x2x1
jax: 0.10.0
libtpu: 0.0.40
codegen_flags: <defaults>
</compile_context>

<pallas_src>
import jax
import jax.numpy as jnp
from jax.experimental import pallas as pl
from jax.experimental.pallas import tpu as pltpu

_SUB = 8      # sublanes of the lane-dense output tile
_LANE = 128   # lanes of the lane-dense output tile


# ----------------------------------------------------------------------------
# In-kernel helpers (traced inside the Pallas body)
# ----------------------------------------------------------------------------
def _cumsum_last(v):
    """Inclusive prefix sum along the last (lane) axis via log-depth shifted
    adds (exact f32 VPU adds, no MXU precision involved)."""
    b, n = v.shape
    shift = 1
    while shift < n:
        pad = jnp.zeros((b, shift), v.dtype)
        v = v + jnp.concatenate([pad, v[:, : n - shift]], axis=-1)
        shift *= 2
    return v


def _solve_goursat_rows(g3m1, lm1):
    """Batched solver-0 recursion for the signature-kernel Goursat PDE.

    g3m1 : (B, L-1, L-1) increment-Gram matrices minus 1.
    Returns the final PDE row K[L-1, 1:L] per batch element, shape (B, L-1);
    the signature kernel value is its last lane.

    Recursion:  K[i+1, j+1] = K[i+1, j] + K[i, j+1] + K[i, j] * (g[i, j] - 1)
    carried as two lane-dense rows
        r[j]      = K[i, j+1]
        r_prev[j] = K[i, j]
    so each row update is
        d      = r + r_prev * (g_i - 1)
        r      = 1 + inclusive_cumsum(d)
        r_prev = 1 + exclusive_cumsum(d)     (= 1 + (incl - d))
    with no slicing / concatenation of the carried state.
    """
    b = g3m1.shape[0]
    r = jnp.ones((b, lm1), jnp.float32)
    r_prev = jnp.ones((b, lm1), jnp.float32)
    # Static unroll: L is small here.
    # TODO(synk): switch to lax.fori_loop + a VMEM scratch holding g3m1 once L
    # grows beyond ~64 (static unrolling bloats code size / live ranges).
    for i in range(lm1):
        d = r + r_prev * g3m1[:, i, :]
        incl = _cumsum_last(d)
        r = 1.0 + incl
        r_prev = 1.0 + (incl - d)
    return r


def _sig_partial_kernel(x_ref, y_ref, o_ref):
    """Per batch-tile partial sums of the SigLoss terms.

    Writes a lane-dense (1, 8, 128) output tile with
      [0, 0, 0] = sum_b ( k(x,x) + k(y,y) - 2 k(x,y) )
      [0, 0, 1] = sum_{b,d} ( x[b,0,d] - y[b,0,d] )**2
    Zero-padded batch rows contribute exactly 0 to both terms (a constant path
    has signature kernel 1, so the combination 1 + 1 - 2*1 vanishes).
    """
    x = x_ref[...].astype(jnp.float32)            # (At, L, D)
    y = y_ref[...].astype(jnp.float32)
    at, l, _ = x.shape
    lm1 = l - 1

    # Path increments.
    dx = x[:, 1:, :] - x[:, :-1, :]               # (At, L-1, D)
    dy = y[:, 1:, :] - y[:, :-1, :]

    # Fused increment-Gram matmul: one MXU pass yields all three blocks.
    z = jnp.concatenate([dx, dy], axis=1)         # (At, 2(L-1), D)
    gram = jnp.einsum('aid,ajd->aij', z, z,
                      preferred_element_type=jnp.float32)   # (At, 2(L-1), 2(L-1))
    gram_xx = gram[:, :lm1, :lm1]
    gram_yy = gram[:, lm1:, lm1:]
    gram_xy = gram[:, :lm1, lm1:]

    # Batch the three PDE solves into a single (3*At)-wide recursion.
    g3m1 = jnp.concatenate([gram_xx, gram_yy, gram_xy], axis=0) - 1.0  # (3At, L-1, L-1)
    rows = _solve_goursat_rows(g3m1, lm1)         # (3At, L-1); k value = last lane

    # Single fused reduction over the stacked k-vector:
    #   +1 weights for the xx / yy blocks, -2 for the xy block.
    b3 = 3 * at
    lane = jax.lax.broadcasted_iota(jnp.int32, (b3, lm1), 1)
    row = jax.lax.broadcasted_iota(jnp.int32, (b3, lm1), 0)
    w = jnp.where(row < 2 * at, 1.0, -2.0)
    dist_part = jnp.sum(jnp.where(lane == lm1 - 1, rows * w, 0.0))

    init_part = jnp.sum((x[:, 0, :] - y[:, 0, :]) ** 2)

    # Lane-dense output tile: scalars in lanes 0 / 1 of sublane 0, zeros elsewhere.
    rid = jax.lax.broadcasted_iota(jnp.int32, (_SUB, _LANE), 0)
    lid = jax.lax.broadcasted_iota(jnp.int32, (_SUB, _LANE), 1)
    tile = jnp.where((rid == 0) & (lid == 0), dist_part,
                     jnp.where((rid == 0) & (lid == 1), init_part, 0.0))
    o_ref[0] = tile


# ----------------------------------------------------------------------------
# Wrapper (plain-JAX glue)
# ----------------------------------------------------------------------------
def _sig_partial_sums(x, y, *, a_tile=8):
    """Runs the Pallas kernel over batch tiles; returns (dist_sum, init_sum)
    summed over the (unpadded) batch rows of x/y."""
    x = x.astype(jnp.float32)
    y = y.astype(jnp.float32)
    b, l, d = x.shape

    # Batch-axis tiling keeps the per-step working set (inputs, fused gram,
    # recursion state) bounded in VMEM.  For large L, size a_tile so that
    # a_tile * (2(L-1))**2 * 4B plus the double-buffered inputs stays well
    # under the scoped VMEM limit; halve it again when targeting v7x (64 MiB).
    a_tile = int(min(a_tile, b))
    num_tiles = int(pl.cdiv(b, a_tile))
    b_pad = num_tiles * a_tile
    if b_pad != b:
        # Zero-padded paths contribute exactly 0 to both partial sums.
        pad = ((0, b_pad - b), (0, 0), (0, 0))
        x = jnp.pad(x, pad)
        y = jnp.pad(y, pad)

    out = pl.pallas_call(
        _sig_partial_kernel,
        out_shape=jax.ShapeDtypeStruct((num_tiles, _SUB, _LANE), jnp.float32),
        grid_spec=pltpu.PrefetchScalarGridSpec(
            num_scalar_prefetch=0,
            grid=(num_tiles,),
            in_specs=[pl.BlockSpec((a_tile, l, d), lambda i: (i, 0, 0)),
                      pl.BlockSpec((a_tile, l, d), lambda i: (i, 0, 0))],
            out_specs=pl.BlockSpec((1, _SUB, _LANE), lambda i: (i, 0, 0)),
        ),
        compiler_params=pltpu.CompilerParams(
            # Batch tiles are independent -> megacore-parallel on v7x.
            dimension_semantics=("parallel",),
            vmem_limit_bytes=32 * 1024 * 1024,
        ),
    )(x, y)

    return jnp.sum(out[:, 0, 0]), jnp.sum(out[:, 0, 1])


def sig_distance_pallas(x, y, *, a_tile=8):
    a, _, d = x.shape
    dist_sum, init_sum = _sig_partial_sums(x, y, a_tile=a_tile)
    return dist_sum / a + init_sum / (a * d)


def _torch_chunk(x, chunks, axis):
    """Mimics torch.chunk semantics (chunk size ceil(n/chunks); fewer chunks OK)."""
    size = x.shape[axis]
    cs = -(-size // chunks)
    n = -(-size // cs)
    return [jax.lax.slice_in_dim(x, i * cs, min((i + 1) * cs, size), axis=axis)
            for i in range(n)]


class SigLoss:
    """JAX/Pallas port of the PyTorch SigLoss module (forward pass only)."""

    def __init__(self, n=0, solver=0, rbf=False, sigma=1.0, n_chunks=1):
        if n != 0 or solver != 0 or rbf:
            # TODO(synk): dyadic refinement (n > 0), higher-order PDE solvers
            # (solver 1/2) and the RBF static kernel are not implemented; only
            # the module defaults are supported.
            raise NotImplementedError("only n=0, solver=0, rbf=False supported")
        self.n = n
        self.solver = solver
        self.rbf = rbf
        self.sigma = sigma
        self.n_chunks = n_chunks

    def sig_distance(self, x, y):
        return sig_distance_pallas(x, y)

    def __call__(self, X, Y):
        # (`Y.requires_grad` assertion is a PyTorch autograd concern; N/A here.)
        if self.n_chunks == 1:
            return self.sig_distance(X, Y)

        a, _, d = X.shape
        # PyTorch accumulates in float64; we accumulate in float32 on TPU.
        total = jnp.zeros((), jnp.float32)
        # All chunk pairs of a given k are stacked along the batch axis and
        # evaluated by ONE gridded pallas_call (grid = batch tiles) instead of
        # one kernel launch per pair.
        # TODO(synk): fold the remaining per-k loop into a single pallas_call
        # with scalar-prefetched chunk offsets (ragged pair lengths).
        for k in range(2, self.n_chunks + 1):
            xs = _torch_chunk(X, k, 1)
            ys = _torch_chunk(Y, k, 1)
            pair_lens = [x1.shape[1] + x2.shape[1] for x1, x2 in zip(xs[:-1], xs[1:])]
            max_len = max(pair_lens)
            px, py = [], []
            for x1, x2, y1, y2 in zip(xs[:-1], xs[1:], ys[:-1], ys[1:]):
                cx = jnp.concatenate([x1, x2], axis=1)
                cy = jnp.concatenate([y1, y2], axis=1)
                padn = max_len - cx.shape[1]
                if padn:
                    # Repeat the final point: zero increments leave the
                    # signature kernel exactly unchanged.
                    cx = jnp.concatenate(
                        [cx, jnp.broadcast_to(cx[:, -1:, :], (a, padn, d))], axis=1)
                    cy = jnp.concatenate(
                        [cy, jnp.broadcast_to(cy[:, -1:, :], (a, padn, d))], axis=1)
                px.append(cx)
                py.append(cy)
            x_stack = jnp.concatenate(px, axis=0)      # (n_pairs * A, max_len, D)
            y_stack = jnp.concatenate(py, axis=0)
            dist_sum, init_sum = _sig_partial_sums(x_stack, y_stack)
            # Summing per-pair distances == dividing the pooled sums once,
            # since every pair's means are over the same batch A (and A*D).
            total = total + dist_sum / a + init_sum / (a * d)
        return total


# ----------------------------------------------------------------------------
# Pure-JAX reference (sequential PDE recursion) for the correctness check
# ----------------------------------------------------------------------------
def _sig_kernel_ref(x, y):
    dx = x[:, 1:, :] - x[:, :-1, :]
    dy = y[:, 1:, :] - y[:, :-1, :]
    g = jnp.einsum('aid,ajd->aij', dx, dy)
    a, lm1, _ = g.shape
    K = jnp.ones((a, lm1 + 1, lm1 + 1), jnp.float32)
    for i in range(lm1):
        for j in range(lm1):
            K = K.at[:, i + 1, j + 1].set(
                K[:, i + 1, j] + K[:, i, j + 1] + K[:, i, j] * (g[:, i, j] - 1.0))
    return K[:, -1, -1]


def _sig_distance_ref(x, y):
    k_xx = _sig_kernel_ref(x, x)
    k_yy = _sig_kernel_ref(y, y)
    k_xy = _sig_kernel_ref(x, y)
    dist = jnp.mean(k_xx) + jnp.mean(k_yy) - 2.0 * jnp.mean(k_xy)
    return jnp.mean((x[:, 0, :] - y[:, 0, :]) ** 2) + dist


def _sig_loss_ref(X, Y, n_chunks):
    if n_chunks == 1:
        return _sig_distance_ref(X, Y)
    total = jnp.zeros((), jnp.float32)
    for k in range(2, n_chunks + 1):
        xs = _torch_chunk(X, k, 1)
        ys = _torch_chunk(Y, k, 1)
        for x1, x2, y1, y2 in zip(xs[:-1], xs[1:], ys[:-1], ys[1:]):
            total = total + _sig_distance_ref(jnp.concatenate([x1, x2], axis=1),
                                              jnp.concatenate([y1, y2], axis=1))
    return total


if __name__ == "__main__":
    key = jax.random.PRNGKey(0)
    kx, ky = jax.random.split(key)
    A, L, D = 6, 8, 4                       # batch, path length, channel dim
    X = 0.3 * jax.random.normal(kx, (A, L, D), jnp.float32)
    Y = 0.3 * jax.random.normal(ky, (A, L, D), jnp.float32)

    # Default module: n=0, solver=0, rbf=False, n_chunks=1.
    loss_fn = SigLoss()
    out = jax.block_until_ready(loss_fn(X, Y))
    ref = _sig_loss_ref(X, Y, 1)
    assert jnp.allclose(out, ref, rtol=2e-3, atol=2e-3), (out, ref)

    # Chunked mode (exercises the multi-tile grid + zero-padded batch path).
    loss_fn3 = SigLoss(n_chunks=3)
    out3 = jax.block_until_ready(loss_fn3(X, Y))
    ref3 = _sig_loss_ref(X, Y, 3)
    assert jnp.allclose(out3, ref3, rtol=2e-3, atol=2e-3), (out3, ref3)

    print("KERNEL_OK")
</pallas_src>

<mosaic_0001>
module attributes {stable_mosaic.version = 11 : i64} {
  func.func @_sig_partial_kernel(%arg0: i32, %arg1: memref<6x8x4xf32, #tpu.memory_space<vmem>>, %arg2: memref<6x8x4xf32, #tpu.memory_space<vmem>>, %arg3: memref<1x8x128xf32, #tpu.memory_space<vmem>>) attributes {dimension_semantics = [#tpu.dimension_semantics<parallel>], iteration_bounds = array<i64: 1>, scalar_prefetch = 0 : i64, scratch_operands = 0 : i64, tpu.core_type = #tpu.core_type<tc>, window_params = [{transform_indices = @transform_0, window_bounds = array<i64: 6, 8, 4>}, {transform_indices = @transform_1, window_bounds = array<i64: 6, 8, 4>}, {transform_indices = @transform_2, window_bounds = array<i64: 1, 8, 128>}]} {
    %c0 = arith.constant 0 : index
    %c0_0 = arith.constant 0 : index
    %c0_1 = arith.constant 0 : index
    %0 = vector.load %arg1[%c0, %c0_0, %c0_1] : memref<6x8x4xf32, #tpu.memory_space<vmem>>, vector<6x8x4xf32>
    %c0_2 = arith.constant 0 : index
    %c0_3 = arith.constant 0 : index
    %c0_4 = arith.constant 0 : index
    %1 = vector.load %arg2[%c0_2, %c0_3, %c0_4] : memref<6x8x4xf32, #tpu.memory_space<vmem>>, vector<6x8x4xf32>
    %2 = vector.extract_strided_slice %0 {offsets = [0, 1, 0], sizes = [6, 7, 4], strides = [1, 1, 1]} : vector<6x8x4xf32> to vector<6x7x4xf32>
    %3 = vector.extract_strided_slice %0 {offsets = [0, 0, 0], sizes = [6, 7, 4], strides = [1, 1, 1]} : vector<6x8x4xf32> to vector<6x7x4xf32>
    %4 = arith.subf %2, %3 : vector<6x7x4xf32>
    %5 = vector.extract_strided_slice %1 {offsets = [0, 1, 0], sizes = [6, 7, 4], strides = [1, 1, 1]} : vector<6x8x4xf32> to vector<6x7x4xf32>
    %6 = vector.extract_strided_slice %1 {offsets = [0, 0, 0], sizes = [6, 7, 4], strides = [1, 1, 1]} : vector<6x8x4xf32> to vector<6x7x4xf32>
    %7 = arith.subf %5, %6 : vector<6x7x4xf32>
    %8 = tpu.concatenate %4, %7 in 1 : vector<6x7x4xf32>, vector<6x7x4xf32> -> vector<6x14x4xf32>
    "tpu.trace_start"() <{level = 10 : i32, message = "aid,ajd->aij"}> : () -> ()
    %cst = arith.constant dense<0.000000e+00> : vector<6x14x14xf32>
    %9 = tpu.matmul %8, %8, %cst {dimension_numbers = #tpu.dot_dimension_numbers<[2], [2], [1], [1], [0, 0, 0, 1, 1, 1], [0], [0]>} : vector<6x14x4xf32>, vector<6x14x4xf32>, vector<6x14x14xf32> -> vector<6x14x14xf32>
    "tpu.trace_stop"() : () -> ()
    %10 = vector.extract_strided_slice %9 {offsets = [0, 0, 0], sizes = [6, 7, 7], strides = [1, 1, 1]} : vector<6x14x14xf32> to vector<6x7x7xf32>
    %11 = vector.extract_strided_slice %9 {offsets = [0, 7, 7], sizes = [6, 7, 7], strides = [1, 1, 1]} : vector<6x14x14xf32> to vector<6x7x7xf32>
    %12 = vector.extract_strided_slice %9 {offsets = [0, 0, 7], sizes = [6, 7, 7], strides = [1, 1, 1]} : vector<6x14x14xf32> to vector<6x7x7xf32>
    %13 = tpu.concatenate %10, %11, %12 in 0 : vector<6x7x7xf32>, vector<6x7x7xf32>, vector<6x7x7xf32> -> vector<18x7x7xf32>
    %cst_5 = arith.constant 1.000000e+00 : f32
    %14 = vector.broadcast %cst_5 : f32 to vector<18x7x7xf32>
    %15 = arith.subf %13, %14 : vector<18x7x7xf32>
    %cst_6 = arith.constant 1.000000e+00 : f32
    %16 = vector.broadcast %cst_6 : f32 to vector<18x7xf32>
    %cst_7 = arith.constant 1.000000e+00 : f32
    %17 = vector.broadcast %cst_7 : f32 to vector<18x7xf32>
    %18 = vector.extract_strided_slice %15 {offsets = [0, 0, 0], sizes = [18, 1, 7], strides = [1, 1, 1]} : vector<18x7x7xf32> to vector<18x1x7xf32>
    %19 = vector.shape_cast %18 : vector<18x1x7xf32> to vector<18x7xf32>
    %20 = arith.mulf %17, %19 : vector<18x7xf32>
    %21 = arith.addf %16, %20 : vector<18x7xf32>
    %cst_8 = arith.constant 0.000000e+00 : f32
    %22 = vector.broadcast %cst_8 : f32 to vector<18x1xf32>
    %23 = vector.extract_strided_slice %21 {offsets = [0, 0], sizes = [18, 6], strides = [1, 1]} : vector<18x7xf32> to vector<18x6xf32>
    %24 = tpu.concatenate %22, %23 in 1 : vector<18x1xf32>, vector<18x6xf32> -> vector<18x7xf32>
    %25 = arith.addf %21, %24 : vector<18x7xf32>
    %cst_9 = arith.constant 0.000000e+00 : f32
    %26 = vector.broadcast %cst_9 : f32 to vector<18x2xf32>
    %27 = vector.extract_strided_slice %25 {offsets = [0, 0], sizes = [18, 5], strides = [1, 1]} : vector<18x7xf32> to vector<18x5xf32>
    %28 = tpu.concatenate %26, %27 in 1 : vector<18x2xf32>, vector<18x5xf32> -> vector<18x7xf32>
    %29 = arith.addf %25, %28 : vector<18x7xf32>
    %cst_10 = arith.constant 0.000000e+00 : f32
    %30 = vector.broadcast %cst_10 : f32 to vector<18x4xf32>
    %31 = vector.extract_strided_slice %29 {offsets = [0, 0], sizes = [18, 3], strides = [1, 1]} : vector<18x7xf32> to vector<18x3xf32>
    %32 = tpu.concatenate %30, %31 in 1 : vector<18x4xf32>, vector<18x3xf32> -> vector<18x7xf32>
    %33 = arith.addf %29, %32 : vector<18x7xf32>
    %cst_11 = arith.constant 1.000000e+00 : f32
    %34 = vector.broadcast %cst_11 : f32 to vector<18x7xf32>
    %35 = arith.addf %34, %33 : vector<18x7xf32>
    %36 = arith.subf %33, %21 : vector<18x7xf32>
    %cst_12 = arith.constant 1.000000e+00 : f32
    %37 = vector.broadcast %cst_12 : f32 to vector<18x7xf32>
    %38 = arith.addf %37, %36 : vector<18x7xf32>
    %39 = vector.extract_strided_slice %15 {offsets = [0, 1, 0], sizes = [18, 1, 7], strides = [1, 1, 1]} : vector<18x7x7xf32> to vector<18x1x7xf32>
    %40 = vector.shape_cast %39 : vector<18x1x7xf32> to vector<18x7xf32>
    %41 = arith.mulf %38, %40 : vector<18x7xf32>
    %42 = arith.addf %35, %41 : vector<18x7xf32>
    %cst_13 = arith.constant 0.000000e+00 : f32
    %43 = vector.broadcast %cst_13 : f32 to vector<18x1xf32>
    %44 = vector.extract_strided_slice %42 {offsets = [0, 0], sizes = [18, 6], strides = [1, 1]} : vector<18x7xf32> to vector<18x6xf32>
    %45 = tpu.concatenate %43, %44 in 1 : vector<18x1xf32>, vector<18x6xf32> -> vector<18x7xf32>
    %46 = arith.addf %42, %45 : vector<18x7xf32>
    %cst_14 = arith.constant 0.000000e+00 : f32
    %47 = vector.broadcast %cst_14 : f32 to vector<18x2xf32>
    %48 = vector.extract_strided_slice %46 {offsets = [0, 0], sizes = [18, 5], strides = [1, 1]} : vector<18x7xf32> to vector<18x5xf32>
    %49 = tpu.concatenate %47, %48 in 1 : vector<18x2xf32>, vector<18x5xf32> -> vector<18x7xf32>
    %50 = arith.addf %46, %49 : vector<18x7xf32>
    %cst_15 = arith.constant 0.000000e+00 : f32
    %51 = vector.broadcast %cst_15 : f32 to vector<18x4xf32>
    %52 = vector.extract_strided_slice %50 {offsets = [0, 0], sizes = [18, 3], strides = [1, 1]} : vector<18x7xf32> to vector<18x3xf32>
    %53 = tpu.concatenate %51, %52 in 1 : vector<18x4xf32>, vector<18x3xf32> -> vector<18x7xf32>
    %54 = arith.addf %50, %53 : vector<18x7xf32>
    %cst_16 = arith.constant 1.000000e+00 : f32
    %55 = vector.broadcast %cst_16 : f32 to vector<18x7xf32>
    %56 = arith.addf %55, %54 : vector<18x7xf32>
    %57 = arith.subf %54, %42 : vector<18x7xf32>
    %cst_17 = arith.constant 1.000000e+00 : f32
    %58 = vector.broadcast %cst_17 : f32 to vector<18x7xf32>
    %59 = arith.addf %58, %57 : vector<18x7xf32>
    %60 = vector.extract_strided_slice %15 {offsets = [0, 2, 0], sizes = [18, 1, 7], strides = [1, 1, 1]} : vector<18x7x7xf32> to vector<18x1x7xf32>
    %61 = vector.shape_cast %60 : vector<18x1x7xf32> to vector<18x7xf32>
    %62 = arith.mulf %59, %61 : vector<18x7xf32>
    %63 = arith.addf %56, %62 : vector<18x7xf32>
    %cst_18 = arith.constant 0.000000e+00 : f32
    %64 = vector.broadcast %cst_18 : f32 to vector<18x1xf32>
    %65 = vector.extract_strided_slice %63 {offsets = [0, 0], sizes = [18, 6], strides = [1, 1]} : vector<18x7xf32> to vector<18x6xf32>
    %66 = tpu.concatenate %64, %65 in 1 : vector<18x1xf32>, vector<18x6xf32> -> vector<18x7xf32>
    %67 = arith.addf %63, %66 : vector<18x7xf32>
    %cst_19 = arith.constant 0.000000e+00 : f32
    %68 = vector.broadcast %cst_19 : f32 to vector<18x2xf32>
    %69 = vector.extract_strided_slice %67 {offsets = [0, 0], sizes = [18, 5], strides = [1, 1]} : vector<18x7xf32> to vector<18x5xf32>
    %70 = tpu.concatenate %68, %69 in 1 : vector<18x2xf32>, vector<18x5xf32> -> vector<18x7xf32>
    %71 = arith.addf %67, %70 : vector<18x7xf32>
    %cst_20 = arith.constant 0.000000e+00 : f32
    %72 = vector.broadcast %cst_20 : f32 to vector<18x4xf32>
    %73 = vector.extract_strided_slice %71 {offsets = [0, 0], sizes = [18, 3], strides = [1, 1]} : vector<18x7xf32> to vector<18x3xf32>
    %74 = tpu.concatenate %72, %73 in 1 : vector<18x4xf32>, vector<18x3xf32> -> vector<18x7xf32>
    %75 = arith.addf %71, %74 : vector<18x7xf32>
    %cst_21 = arith.constant 1.000000e+00 : f32
    %76 = vector.broadcast %cst_21 : f32 to vector<18x7xf32>
    %77 = arith.addf %76, %75 : vector<18x7xf32>
    %78 = arith.subf %75, %63 : vector<18x7xf32>
    %cst_22 = arith.constant 1.000000e+00 : f32
    %79 = vector.broadcast %cst_22 : f32 to vector<18x7xf32>
    %80 = arith.addf %79, %78 : vector<18x7xf32>
    %81 = vector.extract_strided_slice %15 {offsets = [0, 3, 0], sizes = [18, 1, 7], strides = [1, 1, 1]} : vector<18x7x7xf32> to vector<18x1x7xf32>
    %82 = vector.shape_cast %81 : vector<18x1x7xf32> to vector<18x7xf32>
    %83 = arith.mulf %80, %82 : vector<18x7xf32>
    %84 = arith.addf %77, %83 : vector<18x7xf32>
    %cst_23 = arith.constant 0.000000e+00 : f32
    %85 = vector.broadcast %cst_23 : f32 to vector<18x1xf32>
    %86 = vector.extract_strided_slice %84 {offsets = [0, 0], sizes = [18, 6], strides = [1, 1]} : vector<18x7xf32> to vector<18x6xf32>
    %87 = tpu.concatenate %85, %86 in 1 : vector<18x1xf32>, vector<18x6xf32> -> vector<18x7xf32>
    %88 = arith.addf %84, %87 : vector<18x7xf32>
    %cst_24 = arith.constant 0.000000e+00 : f32
    %89 = vector.broadcast %cst_24 : f32 to vector<18x2xf32>
    %90 = vector.extract_strided_slice %88 {offsets = [0, 0], sizes = [18, 5], strides = [1, 1]} : vector<18x7xf32> to vector<18x5xf32>
    %91 = tpu.concatenate %89, %90 in 1 : vector<18x2xf32>, vector<18x5xf32> -> vector<18x7xf32>
    %92 = arith.addf %88, %91 : vector<18x7xf32>
    %cst_25 = arith.constant 0.000000e+00 : f32
    %93 = vector.broadcast %cst_25 : f32 to vector<18x4xf32>
    %94 = vector.extract_strided_slice %92 {offsets = [0, 0], sizes = [18, 3], strides = [1, 1]} : vector<18x7xf32> to vector<18x3xf32>
    %95 = tpu.concatenate %93, %94 in 1 : vector<18x4xf32>, vector<18x3xf32> -> vector<18x7xf32>
    %96 = arith.addf %92, %95 : vector<18x7xf32>
    %cst_26 = arith.constant 1.000000e+00 : f32
    %97 = vector.broadcast %cst_26 : f32 to vector<18x7xf32>
    %98 = arith.addf %97, %96 : vector<18x7xf32>
    %99 = arith.subf %96, %84 : vector<18x7xf32>
    %cst_27 = arith.constant 1.000000e+00 : f32
    %100 = vector.broadcast %cst_27 : f32 to vector<18x7xf32>
    %101 = arith.addf %100, %99 : vector<18x7xf32>
    %102 = vector.extract_strided_slice %15 {offsets = [0, 4, 0], sizes = [18, 1, 7], strides = [1, 1, 1]} : vector<18x7x7xf32> to vector<18x1x7xf32>
    %103 = vector.shape_cast %102 : vector<18x1x7xf32> to vector<18x7xf32>
    %104 = arith.mulf %101, %103 : vector<18x7xf32>
    %105 = arith.addf %98, %104 : vector<18x7xf32>
    %cst_28 = arith.constant 0.000000e+00 : f32
    %106 = vector.broadcast %cst_28 : f32 to vector<18x1xf32>
    %107 = vector.extract_strided_slice %105 {offsets = [0, 0], sizes = [18, 6], strides = [1, 1]} : vector<18x7xf32> to vector<18x6xf32>
    %108 = tpu.concatenate %106, %107 in 1 : vector<18x1xf32>, vector<18x6xf32> -> vector<18x7xf32>
    %109 = arith.addf %105, %108 : vector<18x7xf32>
    %cst_29 = arith.constant 0.000000e+00 : f32
    %110 = vector.broadcast %cst_29 : f32 to vector<18x2xf32>
    %111 = vector.extract_strided_slice %109 {offsets = [0, 0], sizes = [18, 5], strides = [1, 1]} : vector<18x7xf32> to vector<18x5xf32>
    %112 = tpu.concatenate %110, %111 in 1 : vector<18x2xf32>, vector<18x5xf32> -> vector<18x7xf32>
    %113 = arith.addf %109, %112 : vector<18x7xf32>
    %cst_30 = arith.constant 0.000000e+00 : f32
    %114 = vector.broadcast %cst_30 : f32 to vector<18x4xf32>
    %115 = vector.extract_strided_slice %113 {offsets = [0, 0], sizes = [18, 3], strides = [1, 1]} : vector<18x7xf32> to vector<18x3xf32>
    %116 = tpu.concatenate %114, %115 in 1 : vector<18x4xf32>, vector<18x3xf32> -> vector<18x7xf32>
    %117 = arith.addf %113, %116 : vector<18x7xf32>
    %cst_31 = arith.constant 1.000000e+00 : f32
    %118 = vector.broadcast %cst_31 : f32 to vector<18x7xf32>
    %119 = arith.addf %118, %117 : vector<18x7xf32>
    %120 = arith.subf %117, %105 : vector<18x7xf32>
    %cst_32 = arith.constant 1.000000e+00 : f32
    %121 = vector.broadcast %cst_32 : f32 to vector<18x7xf32>
    %122 = arith.addf %121, %120 : vector<18x7xf32>
    %123 = vector.extract_strided_slice %15 {offsets = [0, 5, 0], sizes = [18, 1, 7], strides = [1, 1, 1]} : vector<18x7x7xf32> to vector<18x1x7xf32>
    %124 = vector.shape_cast %123 : vector<18x1x7xf32> to vector<18x7xf32>
    %125 = arith.mulf %122, %124 : vector<18x7xf32>
    %126 = arith.addf %119, %125 : vector<18x7xf32>
    %cst_33 = arith.constant 0.000000e+00 : f32
    %127 = vector.broadcast %cst_33 : f32 to vector<18x1xf32>
    %128 = vector.extract_strided_slice %126 {offsets = [0, 0], sizes = [18, 6], strides = [1, 1]} : vector<18x7xf32> to vector<18x6xf32>
    %129 = tpu.concatenate %127, %128 in 1 : vector<18x1xf32>, vector<18x6xf32> -> vector<18x7xf32>
    %130 = arith.addf %126, %129 : vector<18x7xf32>
    %cst_34 = arith.constant 0.000000e+00 : f32
    %131 = vector.broadcast %cst_34 : f32 to vector<18x2xf32>
    %132 = vector.extract_strided_slice %130 {offsets = [0, 0], sizes = [18, 5], strides = [1, 1]} : vector<18x7xf32> to vector<18x5xf32>
    %133 = tpu.concatenate %131, %132 in 1 : vector<18x2xf32>, vector<18x5xf32> -> vector<18x7xf32>
    %134 = arith.addf %130, %133 : vector<18x7xf32>
    %cst_35 = arith.constant 0.000000e+00 : f32
    %135 = vector.broadcast %cst_35 : f32 to vector<18x4xf32>
    %136 = vector.extract_strided_slice %134 {offsets = [0, 0], sizes = [18, 3], strides = [1, 1]} : vector<18x7xf32> to vector<18x3xf32>
    %137 = tpu.concatenate %135, %136 in 1 : vector<18x4xf32>, vector<18x3xf32> -> vector<18x7xf32>
    %138 = arith.addf %134, %137 : vector<18x7xf32>
    %cst_36 = arith.constant 1.000000e+00 : f32
    %139 = vector.broadcast %cst_36 : f32 to vector<18x7xf32>
    %140 = arith.addf %139, %138 : vector<18x7xf32>
    %141 = arith.subf %138, %126 : vector<18x7xf32>
    %cst_37 = arith.constant 1.000000e+00 : f32
    %142 = vector.broadcast %cst_37 : f32 to vector<18x7xf32>
    %143 = arith.addf %142, %141 : vector<18x7xf32>
    %144 = vector.extract_strided_slice %15 {offsets = [0, 6, 0], sizes = [18, 1, 7], strides = [1, 1, 1]} : vector<18x7x7xf32> to vector<18x1x7xf32>
    %145 = vector.shape_cast %144 : vector<18x1x7xf32> to vector<18x7xf32>
    %146 = arith.mulf %143, %145 : vector<18x7xf32>
    %147 = arith.addf %140, %146 : vector<18x7xf32>
    %cst_38 = arith.constant 0.000000e+00 : f32
    %148 = vector.broadcast %cst_38 : f32 to vector<18x1xf32>
    %149 = vector.extract_strided_slice %147 {offsets = [0, 0], sizes = [18, 6], strides = [1, 1]} : vector<18x7xf32> to vector<18x6xf32>
    %150 = tpu.concatenate %148, %149 in 1 : vector<18x1xf32>, vector<18x6xf32> -> vector<18x7xf32>
    %151 = arith.addf %147, %150 : vector<18x7xf32>
    %cst_39 = arith.constant 0.000000e+00 : f32
    %152 = vector.broadcast %cst_39 : f32 to vector<18x2xf32>
    %153 = vector.extract_strided_slice %151 {offsets = [0, 0], sizes = [18, 5], strides = [1, 1]} : vector<18x7xf32> to vector<18x5xf32>
    %154 = tpu.concatenate %152, %153 in 1 : vector<18x2xf32>, vector<18x5xf32> -> vector<18x7xf32>
    %155 = arith.addf %151, %154 : vector<18x7xf32>
    %cst_40 = arith.constant 0.000000e+00 : f32
    %156 = vector.broadcast %cst_40 : f32 to vector<18x4xf32>
    %157 = vector.extract_strided_slice %155 {offsets = [0, 0], sizes = [18, 3], strides = [1, 1]} : vector<18x7xf32> to vector<18x3xf32>
    %158 = tpu.concatenate %156, %157 in 1 : vector<18x4xf32>, vector<18x3xf32> -> vector<18x7xf32>
    %159 = arith.addf %155, %158 : vector<18x7xf32>
    %cst_41 = arith.constant 1.000000e+00 : f32
    %160 = vector.broadcast %cst_41 : f32 to vector<18x7xf32>
    %161 = arith.addf %160, %159 : vector<18x7xf32>
    %162 = tpu.iota {dimensions = array<i32: 1>} : vector<18x7xi32>
    %163 = tpu.iota {dimensions = array<i32: 0>} : vector<18x7xi32>
    %c12_i32 = arith.constant 12 : i32
    %164 = vector.broadcast %c12_i32 : i32 to vector<18x7xi32>
    %165 = arith.cmpi slt, %163, %164 : vector<18x7xi32>
    %cst_42 = arith.constant 1.000000e+00 : f32
    %cst_43 = arith.constant -2.000000e+00 : f32
    %166 = vector.broadcast %cst_42 : f32 to vector<18x7xf32>
    %167 = vector.broadcast %cst_43 : f32 to vector<18x7xf32>
    %168 = arith.select %165, %166, %167 : vector<18x7xi1>, vector<18x7xf32>
    %c6_i32 = arith.constant 6 : i32
    %169 = vector.broadcast %c6_i32 : i32 to vector<18x7xi32>
    %170 = arith.cmpi eq, %162, %169 : vector<18x7xi32>
    %171 = arith.mulf %161, %168 : vector<18x7xf32>
    %cst_44 = arith.constant 0.000000e+00 : f32
    %172 = vector.broadcast %cst_44 : f32 to vector<18x7xf32>
    %173 = arith.select %170, %171, %172 : vector<18x7xi1>, vector<18x7xf32>
    %174 = vector.shape_cast %173 : vector<18x7xf32> to vector<1x18x7xf32>
    %cst_45 = arith.constant dense<0.000000e+00> : vector<1xf32>
    %175 = vector.multi_reduction <add>, %174, %cst_45 [1, 2] : vector<1x18x7xf32> to vector<1xf32>
    %176 = vector.shape_cast %175 : vector<1xf32> to vector<1x1x1xf32>
    %177 = vector.extract %176[0, 0, 0] : f32 from vector<1x1x1xf32>
    %178 = vector.extract_strided_slice %0 {offsets = [0, 0, 0], sizes = [6, 1, 4], strides = [1, 1, 1]} : vector<6x8x4xf32> to vector<6x1x4xf32>
    %179 = vector.shape_cast %178 : vector<6x1x4xf32> to vector<6x4xf32>
    %180 = vector.extract_strided_slice %1 {offsets = [0, 0, 0], sizes = [6, 1, 4], strides = [1, 1, 1]} : vector<6x8x4xf32> to vector<6x1x4xf32>
    %181 = vector.shape_cast %180 : vector<6x1x4xf32> to vector<6x4xf32>
    %182 = arith.subf %179, %181 : vector<6x4xf32>
    %183 = arith.mulf %182, %182 : vector<6x4xf32>
    %184 = vector.shape_cast %183 : vector<6x4xf32> to vector<1x6x4xf32>
    %cst_46 = arith.constant dense<0.000000e+00> : vector<1xf32>
    %185 = vector.multi_reduction <add>, %184, %cst_46 [1, 2] : vector<1x6x4xf32> to vector<1xf32>
    %186 = vector.shape_cast %185 : vector<1xf32> to vector<1x1x1xf32>
    %187 = vector.extract %186[0, 0, 0] : f32 from vector<1x1x1xf32>
    %188 = tpu.iota {dimensions = array<i32: 0>} : vector<8x128xi32>
    %189 = tpu.iota {dimensions = array<i32: 1>} : vector<8x128xi32>
    %c0_i32 = arith.constant 0 : i32
    %190 = vector.broadcast %c0_i32 : i32 to vector<8x128xi32>
    %191 = arith.cmpi eq, %188, %190 : vector<8x128xi32>
    %c0_i32_47 = arith.constant 0 : i32
    %192 = vector.broadcast %c0_i32_47 : i32 to vector<8x128xi32>
    %193 = arith.cmpi eq, %189, %192 : vector<8x128xi32>
    %194 = arith.andi %191, %193 : vector<8x128xi1>
    %c0_i32_48 = arith.constant 0 : i32
    %195 = vector.broadcast %c0_i32_48 : i32 to vector<8x128xi32>
    %196 = arith.cmpi eq, %188, %195 : vector<8x128xi32>
    %c1_i32 = arith.constant 1 : i32
    %197 = vector.broadcast %c1_i32 : i32 to vector<8x128xi32>
    %198 = arith.cmpi eq, %189, %197 : vector<8x128xi32>
    %199 = arith.andi %196, %198 : vector<8x128xi1>
    %cst_49 = arith.constant 0.000000e+00 : f32
    %200 = vector.broadcast %187 : f32 to vector<8x128xf32>
    %201 = vector.broadcast %cst_49 : f32 to vector<8x128xf32>
    %202 = arith.select %199, %200, %201 : vector<8x128xi1>, vector<8x128xf32>
    %203 = vector.broadcast %177 : f32 to vector<8x128xf32>
    %204 = arith.select %194, %203, %202 : vector<8x128xi1>, vector<8x128xf32>
    %c0_50 = arith.constant 0 : index
    %c0_51 = arith.constant 0 : index
    %c0_52 = arith.constant 0 : index
    %205 = vector.load %arg3[%c0_50, %c0_51, %c0_52] : memref<1x8x128xf32, #tpu.memory_space<vmem>>, vector<1x8x128xf32>
    %206 = vector.shape_cast %205 : vector<1x8x128xf32> to vector<8x128xf32>
    %207 = vector.shape_cast %204 : vector<8x128xf32> to vector<1x8x128xf32>
    tpu.vector_store %arg3[%c0_50, %c0_51, %c0_52], %207 {strides = array<i32>} : memref<1x8x128xf32, #tpu.memory_space<vmem>>, vector<1x8x128xf32>,
    return
  }
  func.func @transform_0(%arg0: i32) -> (i32, i32, i32) {
    %c0_i32 = arith.constant 0 : i32
    %c0_i32_0 = arith.constant 0 : i32
    %c0_i32_1 = arith.constant 0 : i32
    return %arg0, %c0_i32, %c0_i32_0 : i32, i32, i32
  }
  func.func @transform_1(%arg0: i32) -> (i32, i32, i32) {
    %c0_i32 = arith.constant 0 : i32
    %c0_i32_0 = arith.constant 0 : i32
    %c0_i32_1 = arith.constant 0 : i32
    return %arg0, %c0_i32, %c0_i32_0 : i32, i32, i32
  }
  func.func @transform_2(%arg0: i32) -> (i32, i32, i32) {
    %c0_i32 = arith.constant 0 : i32
    %c0_i32_0 = arith.constant 0 : i32
    %c0_i32_1 = arith.constant 0 : i32
    return %arg0, %c0_i32, %c0_i32_0 : i32, i32, i32
  }
}

</mosaic_0001>

<llo_original>
// kernel: tpu_custom_call.1
$region0: #{tpu_custom_call.1}
  #allocation0 [shape = 'u32[]', space=smem, size = 0x4, offset = 0x4, fixed_abs, tag = 'smem constant byte address 0x4 - core index']
  #allocation1 [shape = 'u32[144,128]{1,0:T(1,128)}', space=vmem, size = 0x12000, scoped, tag = 'internal scratch']
  %s0 = inlined_call_operand.vmem [shape: f32[6,8,4], index: 0, kind: input, shape index: {}]
  %s1 = inlined_call_operand.vmem [shape: f32[6,8,4], index: 1, kind: input, shape index: {}]
  %s2 = inlined_call_operand.hbm [shape: f32[1,8,128], index: 2, kind: output, shape index: {}]
  %s3 = sld [smem:[#allocation0]]
  $region18: #{tpu_custom_call.1} parent=0
    _
  %s5 = ssub.s32 1, %s3
  %s6 = scalar_select 0, %s5, %s3
  $region1: #{tpu_custom_call.1} parent=0
    #allocation2 [shape = 'u8[4096]{0}', space=vmem, size = 0x1000, scoped, tag = 'output window, operand 0, single buffered']
    #allocation3 [shape = 's32[1]{0}', space=sflag, size = 0x4, scoped, tag = 'scoped memory for tpu_custom_call.1']
    %7 = vsyncpa [#allocation3], 0
    // Predicated region
    $region2: #{tpu_custom_call.1} parent=1 // pred_check
      _
    $region3: #{tpu_custom_call.1} parent=1 // pred_check_branch
      %9 = sbr.rel (0) target = $region5
    $region4: #{tpu_custom_call.1} parent=1 // pred_region
      _
    $region5: #{tpu_custom_call.1} parent=1 // pred_fallthru
      _
    // Predicated region
    $region6: #{tpu_custom_call.1} parent=1 // pred_check
      _
    $region7: #{tpu_custom_call.1} parent=1 // pred_check_branch
      %11 = sbr.rel (0) target = $region9
    $region8: #{tpu_custom_call.1} parent=1 // pred_region
      _
    $region9: #{tpu_custom_call.1} parent=1 // pred_fallthru
      _
    %v12 = vld [vmem:[%s0] sm:$0xff]
    %v13 = vld [vmem:[%s0 + $0x8] sm:$0xff]
    %v14 = vld [vmem:[%s0 + $0x10] sm:$0xff]
    %v15 = vld [vmem:[%s0 + $0x18] sm:$0xff]
    %v16 = vld [vmem:[%s0 + $0x20] sm:$0xff]
    %v17 = vld [vmem:[%s0 + $0x28] sm:$0xff]
    %v18 = vld [vmem:[%s1] sm:$0xff]
    %v19 = vld [vmem:[%s1 + $0x8] sm:$0xff]
    %v20 = vld [vmem:[%s1 + $0x10] sm:$0xff]
    %v21 = vld [vmem:[%s1 + $0x18] sm:$0xff]
    %v22 = vld [vmem:[%s1 + $0x20] sm:$0xff]
    %v23 = vld [vmem:[%s1 + $0x28] sm:$0xff]
    %v30 = vrot.slane %v12, 7
    %v31 = vrot.slane %v13, 7
    %v32 = vrot.slane %v14, 7
    %v33 = vrot.slane %v15, 7
    %v34 = vrot.slane %v16, 7
    %v35 = vrot.slane %v17, 7
    %v42 = vsub.f32 %v12, %v30
    %v43 = vsub.f32 %v13, %v31
    %v44 = vsub.f32 %v14, %v32
    %v45 = vsub.f32 %v15, %v33
    %v46 = vsub.f32 %v16, %v34
    %v47 = vsub.f32 %v17, %v35
    %v54 = vrot.slane %v18, 7
    %v55 = vrot.slane %v19, 7
    %v56 = vrot.slane %v20, 7
    %v57 = vrot.slane %v21, 7
    %v58 = vrot.slane %v22, 7
    %v59 = vrot.slane %v23, 7
    %v66 = vsub.f32 %v18, %v54
    %v67 = vsub.f32 %v19, %v55
    %v68 = vsub.f32 %v20, %v56
    %v69 = vsub.f32 %v21, %v57
    %v70 = vsub.f32 %v22, %v58
    %v71 = vsub.f32 %v23, %v59
    %v78 = vrot.slane %v42, 1
    %v79 = vrot.slane %v43, 1
    %v80 = vrot.slane %v44, 1
    %v81 = vrot.slane %v45, 1
    %v82 = vrot.slane %v46, 1
    %v83 = vrot.slane %v47, 1
    %v96 = vrot.slane %v66, 2
    %v97 = vrot.slane %v67, 2
    %v98 = vrot.slane %v68, 2
    %v99 = vrot.slane %v69, 2
    %v100 = vrot.slane %v70, 2
    %v101 = vrot.slane %v71, 2
    %vm108 = vcmask 1046528
    %v109 = vsel %vm108, %v78, %v96
    %v110 = vsel %vm108, %v79, %v97
    %v111 = vsel %vm108, %v80, %v98
    %v112 = vsel %vm108, %v81, %v99
    %v113 = vsel %vm108, %v82, %v100
    %v114 = vsel %vm108, %v83, %v101
    %vm115 = vcmask 31744
    %v117 = vsel %vm115, %v109, 0
    %v119 = vsel %vm115, %v96, 0
    %121 = vmatprep.subr.mxu0 0.0
    %122 = vmatpush1.xpose.msra.mxu0 0.0
    %123 = vmatprep.subr.mxu0 0.0
    %124 = vmatpush1.xpose.msra.mxu0 0.0
    %125 = vmatprep.subr.mxu0 0.0
    %126 = vmatpush1.xpose.msra.mxu0 0.0
    %127 = vmatprep.subr.mxu0 0.0
    %128 = vmatpush1.xpose.msra.mxu0 0.0
    %129 = vmatprep.subr.mxu0 0.0
    %130 = vmatpush1.xpose.msra.mxu0 0.0
    %131 = vmatprep.subr.mxu0 0.0
    %132 = vmatpush1.xpose.msra.mxu0 0.0
    %133 = vmatprep.subr.mxu0 0.0
    %134 = vmatpush1.xpose.msra.mxu0 0.0
    %135 = vmatprep.subr.mxu0 0.0
    %136 = vmatpush1.xpose.msra.mxu0 0.0
    %137 = vmatprep.subr.mxu0 0.0
    %138 = vmatpush1.xpose.msra.mxu0 0.0
    %139 = vmatprep.subr.mxu0 0.0
    %140 = vmatpush1.xpose.msra.mxu0 0.0
    %141 = vmatprep.subr.mxu0 0.0
    %142 = vmatpush1.xpose.msra.mxu0 0.0
    %143 = vmatprep.subr.mxu0 0.0
    %144 = vmatpush1.xpose.msra.mxu0 0.0
    %145 = vmatprep.subr.mxu0 0.0
    %146 = vmatpush1.xpose.msra.mxu0 0.0
    %147 = vmatprep.subr.mxu0 0.0
    %148 = vmatpush1.xpose.msra.mxu0 0.0
    %149 = vmatprep.subr.mxu0 0.0
    %150 = vmatpush1.xpose.msra.mxu0 %v119
    %151 = vmatprep.subr.mxu0 0.0
    %152 = vmatpush1.xpose.msra.mxu0 %v117
    %153 = vmatprep.subr.mxu0 0.0
    %154 = vmatpush2.xpose.msra.mxu0 0.0
    %155 = vmatprep.subr.mxu0 0.0
    %156 = vmatpush2.xpose.msra.mxu0 0.0
    %157 = vmatprep.subr.mxu0 0.0
    %158 = vmatpush2.xpose.msra.mxu0 0.0
    %159 = vmatprep.subr.mxu0 0.0
    %160 = vmatpush2.xpose.msra.mxu0 0.0
    %161 = vmatprep.subr.mxu0 0.0
    %162 = vmatpush2.xpose.msra.mxu0 0.0
    %163 = vmatprep.subr.mxu0 0.0
    %164 = vmatpush2.xpose.msra.mxu0 0.0
    %165 = vmatprep.subr.mxu0 0.0
    %166 = vmatpush2.xpose.msra.mxu0 0.0
    %167 = vmatprep.subr.mxu0 0.0
    %168 = vmatpush2.xpose.msra.mxu0 0.0
    %169 = vmatprep.subr.mxu0 0.0
    %170 = vmatpush2.xpose.msra.mxu0 0.0
    %171 = vmatprep.subr.mxu0 0.0
    %172 = vmatpush2.xpose.msra.mxu0 0.0
    %173 = vmatprep.subr.mxu0 0.0
    %174 = vmatpush2.xpose.msra.mxu0 0.0
    %175 = vmatprep.subr.mxu0 0.0
    %176 = vmatpush2.xpose.msra.mxu0 0.0
    %177 = vmatprep.subr.mxu0 0.0
    %178 = vmatpush2.xpose.msra.mxu0 0.0
    %179 = vmatprep.subr.mxu0 0.0
    %180 = vmatpush2.xpose.msra.mxu0 0.0
    %181 = vmatprep.subr.mxu0 0.0
    %182 = vmatpush2.xpose.msra.mxu0 0.0
    %183 = vmatprep.subr.mxu0 0.0
    %184 = vmatpush2.xpose.msra.mxu0 0.0
    %185 = vmatprep.mubr.f32.mxu0 0.0
    %186 = vmatmul.mubr.f32.gmra.mxu0 %v117
    %v187 = vpop.f32.mrf.mxu0
    %v188 = vadd.f32 0.0, %v187
    %v189 = vpop.f32.mrf.mxu0
    %190 = vmatprep.mubr.f32.mxu0 0.0
    %191 = vmatmul.mubr.f32.gmra.mxu0 %v119
    %v192 = vpop.f32.mrf.mxu0
    %v193 = vadd.f32 0.0, %v192
    %v194 = vpop.f32.mrf.mxu0
    %195 = vdwg.mxu0
    %v197 = vsel %vm115, %v110, 0
    %v199 = vsel %vm115, %v97, 0
    %201 = vmatprep.subr.mxu0 0.0
    %202 = vmatpush1.xpose.msra.mxu0 0.0
    %203 = vmatprep.subr.mxu0 0.0
    %204 = vmatpush1.xpose.msra.mxu0 0.0
    %205 = vmatprep.subr.mxu0 0.0
    %206 = vmatpush1.xpose.msra.mxu0 0.0
    %207 = vmatprep.subr.mxu0 0.0
    %208 = vmatpush1.xpose.msra.mxu0 0.0
    %209 = vmatprep.subr.mxu0 0.0
    %210 = vmatpush1.xpose.msra.mxu0 0.0
    %211 = vmatprep.subr.mxu0 0.0
    %212 = vmatpush1.xpose.msra.mxu0 0.0
    %213 = vmatprep.subr.mxu0 0.0
    %214 = vmatpush1.xpose.msra.mxu0 0.0
    %215 = vmatprep.subr.mxu0 0.0
    %216 = vmatpush1.xpose.msra.mxu0 0.0
    %217 = vmatprep.subr.mxu0 0.0
    %218 = vmatpush1.xpose.msra.mxu0 0.0
    %219 = vmatprep.subr.mxu0 0.0
    %220 = vmatpush1.xpose.msra.mxu0 0.0
    %221 = vmatprep.subr.mxu0 0.0
    %222 = vmatpush1.xpose.msra.mxu0 0.0
    %223 = vmatprep.subr.mxu0 0.0
    %224 = vmatpush1.xpose.msra.mxu0 0.0
    %225 = vmatprep.subr.mxu0 0.0
    %226 = vmatpush1.xpose.msra.mxu0 0.0
    %227 = vmatprep.subr.mxu0 0.0
    %228 = vmatpush1.xpose.msra.mxu0 0.0
    %229 = vmatprep.subr.mxu0 0.0
    %230 = vmatpush1.xpose.msra.mxu0 %v199
    %231 = vmatprep.subr.mxu0 0.0
    %232 = vmatpush1.xpose.msra.mxu0 %v197
    %233 = vmatprep.subr.mxu0 0.0
    %234 = vmatpush2.xpose.msra.mxu0 0.0
    %235 = vmatprep.subr.mxu0 0.0
    %236 = vmatpush2.xpose.msra.mxu0 0.0
    %237 = vmatprep.subr.mxu0 0.0
    %238 = vmatpush2.xpose.msra.mxu0 0.0
    %239 = vmatprep.subr.mxu0 0.0
    %240 = vmatpush2.xpose.msra.mxu0 0.0
    %241 = vmatprep.subr.mxu0 0.0
    %242 = vmatpush2.xpose.msra.mxu0 0.0
    %243 = vmatprep.subr.mxu0 0.0
    %244 = vmatpush2.xpose.msra.mxu0 0.0
    %245 = vmatprep.subr.mxu0 0.0
    %246 = vmatpush2.xpose.msra.mxu0 0.0
    %247 = vmatprep.subr.mxu0 0.0
    %248 = vmatpush2.xpose.msra.mxu0 0.0
    %249 = vmatprep.subr.mxu0 0.0
    %250 = vmatpush2.xpose.msra.mxu0 0.0
    %251 = vmatprep.subr.mxu0 0.0
    %252 = vmatpush2.xpose.msra.mxu0 0.0
    %253 = vmatprep.subr.mxu0 0.0
    %254 = vmatpush2.xpose.msra.mxu0 0.0
    %255 = vmatprep.subr.mxu0 0.0
    %256 = vmatpush2.xpose.msra.mxu0 0.0
    %257 = vmatprep.subr.mxu0 0.0
    %258 = vmatpush2.xpose.msra.mxu0 0.0
    %259 = vmatprep.subr.mxu0 0.0
    %260 = vmatpush2.xpose.msra.mxu0 0.0
    %261 = vmatprep.subr.mxu0 0.0
    %262 = vmatpush2.xpose.msra.mxu0 0.0
    %263 = vmatprep.subr.mxu0 0.0
    %264 = vmatpush2.xpose.msra.mxu0 0.0
    %265 = vmatprep.mubr.f32.mxu0 0.0
    %266 = vmatmul.mubr.f32.gmra.mxu0 %v197
    %v267 = vpop.f32.mrf.mxu0
    %v268 = vadd.f32 0.0, %v267
    %v269 = vpop.f32.mrf.mxu0
    %270 = vmatprep.mubr.f32.mxu0 0.0
    %271 = vmatmul.mubr.f32.gmra.mxu0 %v199
    %v272 = vpop.f32.mrf.mxu0
    %v273 = vadd.f32 0.0, %v272
    %v274 = vpop.f32.mrf.mxu0
    %275 = vdwg.mxu0
    %v277 = vsel %vm115, %v111, 0
    %v279 = vsel %vm115, %v98, 0
    %281 = vmatprep.subr.mxu0 0.0
    %282 = vmatpush1.xpose.msra.mxu0 0.0
    %283 = vmatprep.subr.mxu0 0.0
    %284 = vmatpush1.xpose.msra.mxu0 0.0
    %285 = vmatprep.subr.mxu0 0.0
    %286 = vmatpush1.xpose.msra.mxu0 0.0
    %287 = vmatprep.subr.mxu0 0.0
    %288 = vmatpush1.xpose.msra.mxu0 0.0
    %289 = vmatprep.subr.mxu0 0.0
    %290 = vmatpush1.xpose.msra.mxu0 0.0
    %291 = vmatprep.subr.mxu0 0.0
    %292 = vmatpush1.xpose.msra.mxu0 0.0
    %293 = vmatprep.subr.mxu0 0.0
    %294 = vmatpush1.xpose.msra.mxu0 0.0
    %295 = vmatprep.subr.mxu0 0.0
    %296 = vmatpush1.xpose.msra.mxu0 0.0
    %297 = vmatprep.subr.mxu0 0.0
    %298 = vmatpush1.xpose.msra.mxu0 0.0
    %299 = vmatprep.subr.mxu0 0.0
    %300 = vmatpush1.xpose.msra.mxu0 0.0
    %301 = vmatprep.subr.mxu0 0.0
    %302 = vmatpush1.xpose.msra.mxu0 0.0
    %303 = vmatprep.subr.mxu0 0.0
    %304 = vmatpush1.xpose.msra.mxu0 0.0
    %305 = vmatprep.subr.mxu0 0.0
    %306 = vmatpush1.xpose.msra.mxu0 0.0
    %307 = vmatprep.subr.mxu0 0.0
    %308 = vmatpush1.xpose.msra.mxu0 0.0
    %309 = vmatprep.subr.mxu0 0.0
    %310 = vmatpush1.xpose.msra.mxu0 %v279
    %311 = vmatprep.subr.mxu0 0.0
    %312 = vmatpush1.xpose.msra.mxu0 %v277
    %313 = vmatprep.subr.mxu0 0.0
    %314 = vmatpush2.xpose.msra.mxu0 0.0
    %315 = vmatprep.subr.mxu0 0.0
    %316 = vmatpush2.xpose.msra.mxu0 0.0
    %317 = vmatprep.subr.mxu0 0.0
    %318 = vmatpush2.xpose.msra.mxu0 0.0
    %319 = vmatprep.subr.mxu0 0.0
    %320 = vmatpush2.xpose.msra.mxu0 0.0
    %321 = vmatprep.subr.mxu0 0.0
    %322 = vmatpush2.xpose.msra.mxu0 0.0
    %323 = vmatprep.subr.mxu0 0.0
    %324 = vmatpush2.xpose.msra.mxu0 0.0
    %325 = vmatprep.subr.mxu0 0.0
    %326 = vmatpush2.xpose.msra.mxu0 0.0
    %327 = vmatprep.subr.mxu0 0.0
    %328 = vmatpush2.xpose.msra.mxu0 0.0
    %329 = vmatprep.subr.mxu0 0.0
    %330 = vmatpush2.xpose.msra.mxu0 0.0
    %331 = vmatprep.subr.mxu0 0.0
    %332 = vmatpush2.xpose.msra.mxu0 0.0
    %333 = vmatprep.subr.mxu0 0.0
    %334 = vmatpush2.xpose.msra.mxu0 0.0
    %335 = vmatprep.subr.mxu0 0.0
    %336 = vmatpush2.xpose.msra.mxu0 0.0
    %337 = vmatprep.subr.mxu0 0.0
    %338 = vmatpush2.xpose.msra.mxu0 0.0
    %339 = vmatprep.subr.mxu0 0.0
    %340 = vmatpush2.xpose.msra.mxu0 0.0
    %341 = vmatprep.subr.mxu0 0.0
    %342 = vmatpush2.xpose.msra.mxu0 0.0
    %343 = vmatprep.subr.mxu0 0.0
    %344 = vmatpush2.xpose.msra.mxu0 0.0
    %345 = vmatprep.mubr.f32.mxu0 0.0
    %346 = vmatmul.mubr.f32.gmra.mxu0 %v277
    %v347 = vpop.f32.mrf.mxu0
    %v348 = vadd.f32 0.0, %v347
    %v349 = vpop.f32.mrf.mxu0
    %350 = vmatprep.mubr.f32.mxu0 0.0
    %351 = vmatmul.mubr.f32.gmra.mxu0 %v279
    %v352 = vpop.f32.mrf.mxu0
    %v353 = vadd.f32 0.0, %v352
    %v354 = vpop.f32.mrf.mxu0
    %355 = vdwg.mxu0
    %v357 = vsel %vm115, %v112, 0
    %v359 = vsel %vm115, %v99, 0
    %361 = vmatprep.subr.mxu0 0.0
    %362 = vmatpush1.xpose.msra.mxu0 0.0
    %363 = vmatprep.subr.mxu0 0.0
    %364 = vmatpush1.xpose.msra.mxu0 0.0
    %365 = vmatprep.subr.mxu0 0.0
    %366 = vmatpush1.xpose.msra.mxu0 0.0
    %367 = vmatprep.subr.mxu0 0.0
    %368 = vmatpush1.xpose.msra.mxu0 0.0
    %369 = vmatprep.subr.mxu0 0.0
    %370 = vmatpush1.xpose.msra.mxu0 0.0
    %371 = vmatprep.subr.mxu0 0.0
    %372 = vmatpush1.xpose.msra.mxu0 0.0
    %373 = vmatprep.subr.mxu0 0.0
    %374 = vmatpush1.xpose.msra.mxu0 0.0
    %375 = vmatprep.subr.mxu0 0.0
    %376 = vmatpush1.xpose.msra.mxu0 0.0
    %377 = vmatprep.subr.mxu0 0.0
    %378 = vmatpush1.xpose.msra.mxu0 0.0
    %379 = vmatprep.subr.mxu0 0.0
    %380 = vmatpush1.xpose.msra.mxu0 0.0
    %381 = vmatprep.subr.mxu0 0.0
    %382 = vmatpush1.xpose.msra.mxu0 0.0
    %383 = vmatprep.subr.mxu0 0.0
    %384 = vmatpush1.xpose.msra.mxu0 0.0
    %385 = vmatprep.subr.mxu0 0.0
    %386 = vmatpush1.xpose.msra.mxu0 0.0
    %387 = vmatprep.subr.mxu0 0.0
    %388 = vmatpush1.xpose.msra.mxu0 0.0
    %389 = vmatprep.subr.mxu0 0.0
    %390 = vmatpush1.xpose.msra.mxu0 %v359
    %391 = vmatprep.subr.mxu0 0.0
    %392 = vmatpush1.xpose.msra.mxu0 %v357
    %393 = vmatprep.subr.mxu0 0.0
    %394 = vmatpush2.xpose.msra.mxu0 0.0
    %395 = vmatprep.subr.mxu0 0.0
    %396 = vmatpush2.xpose.msra.mxu0 0.0
    %397 = vmatprep.subr.mxu0 0.0
    %398 = vmatpush2.xpose.msra.mxu0 0.0
    %399 = vmatprep.subr.mxu0 0.0
    %400 = vmatpush2.xpose.msra.mxu0 0.0
    %401 = vmatprep.subr.mxu0 0.0
    %402 = vmatpush2.xpose.msra.mxu0 0.0
    %403 = vmatprep.subr.mxu0 0.0
    %404 = vmatpush2.xpose.msra.mxu0 0.0
    %405 = vmatprep.subr.mxu0 0.0
    %406 = vmatpush2.xpose.msra.mxu0 0.0
    %407 = vmatprep.subr.mxu0 0.0
    %408 = vmatpush2.xpose.msra.mxu0 0.0
    %409 = vmatprep.subr.mxu0 0.0
    %410 = vmatpush2.xpose.msra.mxu0 0.0
    %411 = vmatprep.subr.mxu0 0.0
    %412 = vmatpush2.xpose.msra.mxu0 0.0
    %413 = vmatprep.subr.mxu0 0.0
    %414 = vmatpush2.xpose.msra.mxu0 0.0
    %415 = vmatprep.subr.mxu0 0.0
    %416 = vmatpush2.xpose.msra.mxu0 0.0
    %417 = vmatprep.subr.mxu0 0.0
    %418 = vmatpush2.xpose.msra.mxu0 0.0
    %419 = vmatprep.subr.mxu0 0.0
    %420 = vmatpush2.xpose.msra.mxu0 0.0
    %421 = vmatprep.subr.mxu0 0.0
    %422 = vmatpush2.xpose.msra.mxu0 0.0
    %423 = vmatprep.subr.mxu0 0.0
    %424 = vmatpush2.xpose.msra.mxu0 0.0
    %425 = vmatprep.mubr.f32.mxu0 0.0
    %426 = vmatmul.mubr.f32.gmra.mxu0 %v357
    %v427 = vpop.f32.mrf.mxu0
    %v428 = vadd.f32 0.0, %v427
    %v429 = vpop.f32.mrf.mxu0
    %430 = vmatprep.mubr.f32.mxu0 0.0
    %431 = vmatmul.mubr.f32.gmra.mxu0 %v359
    %v432 = vpop.f32.mrf.mxu0
    %v433 = vadd.f32 0.0, %v432
    %v434 = vpop.f32.mrf.mxu0
    %435 = vdwg.mxu0
    %v437 = vsel %vm115, %v113, 0
    %v439 = vsel %vm115, %v100, 0
    %441 = vmatprep.subr.mxu0 0.0
    %442 = vmatpush1.xpose.msra.mxu0 0.0
    %443 = vmatprep.subr.mxu0 0.0
    %444 = vmatpush1.xpose.msra.mxu0 0.0
    %445 = vmatprep.subr.mxu0 0.0
    %446 = vmatpush1.xpose.msra.mxu0 0.0
    %447 = vmatprep.subr.mxu0 0.0
    %448 = vmatpush1.xpose.msra.mxu0 0.0
    %449 = vmatprep.subr.mxu0 0.0
    %450 = vmatpush1.xpose.msra.mxu0 0.0
    %451 = vmatprep.subr.mxu0 0.0
    %452 = vmatpush1.xpose.msra.mxu0 0.0
    %453 = vmatprep.subr.mxu0 0.0
    %454 = vmatpush1.xpose.msra.mxu0 0.0
    %455 = vmatprep.subr.mxu0 0.0
    %456 = vmatpush1.xpose.msra.mxu0 0.0
    %457 = vmatprep.subr.mxu0 0.0
    %458 = vmatpush1.xpose.msra.mxu0 0.0
    %459 = vmatprep.subr.mxu0 0.0
    %460 = vmatpush1.xpose.msra.mxu0 0.0
    %461 = vmatprep.subr.mxu0 0.0
    %462 = vmatpush1.xpose.msra.mxu0 0.0
    %463 = vmatprep.subr.mxu0 0.0
    %464 = vmatpush1.xpose.msra.mxu0 0.0
    %465 = vmatprep.subr.mxu0 0.0
    %466 = vmatpush1.xpose.msra.mxu0 0.0
    %467 = vmatprep.subr.mxu0 0.0
    %468 = vmatpush1.xpose.msra.mxu0 0.0
    %469 = vmatprep.subr.mxu0 0.0
    %470 = vmatpush1.xpose.msra.mxu0 %v439
    %471 = vmatprep.subr.mxu0 0.0
    %472 = vmatpush1.xpose.msra.mxu0 %v437
    %473 = vmatprep.subr.mxu0 0.0
    %474 = vmatpush2.xpose.msra.mxu0 0.0
    %475 = vmatprep.subr.mxu0 0.0
    %476 = vmatpush2.xpose.msra.mxu0 0.0
    %477 = vmatprep.subr.mxu0 0.0
    %478 = vmatpush2.xpose.msra.mxu0 0.0
    %479 = vmatprep.subr.mxu0 0.0
    %480 = vmatpush2.xpose.msra.mxu0 0.0
    %481 = vmatprep.subr.mxu0 0.0
    %482 = vmatpush2.xpose.msra.mxu0 0.0
    %483 = vmatprep.subr.mxu0 0.0
    %484 = vmatpush2.xpose.msra.mxu0 0.0
    %485 = vmatprep.subr.mxu0 0.0
    %486 = vmatpush2.xpose.msra.mxu0 0.0
    %487 = vmatprep.subr.mxu0 0.0
    %488 = vmatpush2.xpose.msra.mxu0 0.0
    %489 = vmatprep.subr.mxu0 0.0
    %490 = vmatpush2.xpose.msra.mxu0 0.0
    %491 = vmatprep.subr.mxu0 0.0
    %492 = vmatpush2.xpose.msra.mxu0 0.0
    %493 = vmatprep.subr.mxu0 0.0
    %494 = vmatpush2.xpose.msra.mxu0 0.0
    %495 = vmatprep.subr.mxu0 0.0
    %496 = vmatpush2.xpose.msra.mxu0 0.0
    %497 = vmatprep.subr.mxu0 0.0
    %498 = vmatpush2.xpose.msra.mxu0 0.0
    %499 = vmatprep.subr.mxu0 0.0
    %500 = vmatpush2.xpose.msra.mxu0 0.0
    %501 = vmatprep.subr.mxu0 0.0
    %502 = vmatpush2.xpose.msra.mxu0 0.0
    %503 = vmatprep.subr.mxu0 0.0
    %504 = vmatpush2.xpose.msra.mxu0 0.0
    %505 = vmatprep.mubr.f32.mxu0 0.0
    %506 = vmatmul.mubr.f32.gmra.mxu0 %v437
    %v507 = vpop.f32.mrf.mxu0
    %v508 = vadd.f32 0.0, %v507
    %v509 = vpop.f32.mrf.mxu0
    %510 = vmatprep.mubr.f32.mxu0 0.0
    %511 = vmatmul.mubr.f32.gmra.mxu0 %v439
    %v512 = vpop.f32.mrf.mxu0
    %v513 = vadd.f32 0.0, %v512
    %v514 = vpop.f32.mrf.mxu0
    %515 = vdwg.mxu0
    %v517 = vsel %vm115, %v114, 0
    %v519 = vsel %vm115, %v101, 0
    %521 = vmatprep.subr.mxu0 0.0
    %522 = vmatpush1.xpose.msra.mxu0 0.0
    %523 = vmatprep.subr.mxu0 0.0
    %524 = vmatpush1.xpose.msra.mxu0 0.0
    %525 = vmatprep.subr.mxu0 0.0
    %526 = vmatpush1.xpose.msra.mxu0 0.0
    %527 = vmatprep.subr.mxu0 0.0
    %528 = vmatpush1.xpose.msra.mxu0 0.0
    %529 = vmatprep.subr.mxu0 0.0
    %530 = vmatpush1.xpose.msra.mxu0 0.0
    %531 = vmatprep.subr.mxu0 0.0
    %532 = vmatpush1.xpose.msra.mxu0 0.0
    %533 = vmatprep.subr.mxu0 0.0
    %534 = vmatpush1.xpose.msra.mxu0 0.0
    %535 = vmatprep.subr.mxu0 0.0
    %536 = vmatpush1.xpose.msra.mxu0 0.0
    %537 = vmatprep.subr.mxu0 0.0
    %538 = vmatpush1.xpose.msra.mxu0 0.0
    %539 = vmatprep.subr.mxu0 0.0
    %540 = vmatpush1.xpose.msra.mxu0 0.0
    %541 = vmatprep.subr.mxu0 0.0
    %542 = vmatpush1.xpose.msra.mxu0 0.0
    %543 = vmatprep.subr.mxu0 0.0
    %544 = vmatpush1.xpose.msra.mxu0 0.0
    %545 = vmatprep.subr.mxu0 0.0
    %546 = vmatpush1.xpose.msra.mxu0 0.0
    %547 = vmatprep.subr.mxu0 0.0
    %548 = vmatpush1.xpose.msra.mxu0 0.0
    %549 = vmatprep.subr.mxu0 0.0
    %550 = vmatpush1.xpose.msra.mxu0 %v519
    %551 = vmatprep.subr.mxu0 0.0
    %552 = vmatpush1.xpose.msra.mxu0 %v517
    %553 = vmatprep.subr.mxu0 0.0
    %554 = vmatpush2.xpose.msra.mxu0 0.0
    %555 = vmatprep.subr.mxu0 0.0
    %556 = vmatpush2.xpose.msra.mxu0 0.0
    %557 = vmatprep.subr.mxu0 0.0
    %558 = vmatpush2.xpose.msra.mxu0 0.0
    %559 = vmatprep.subr.mxu0 0.0
    %560 = vmatpush2.xpose.msra.mxu0 0.0
    %561 = vmatprep.subr.mxu0 0.0
    %562 = vmatpush2.xpose.msra.mxu0 0.0
    %563 = vmatprep.subr.mxu0 0.0
    %564 = vmatpush2.xpose.msra.mxu0 0.0
    %565 = vmatprep.subr.mxu0 0.0
    %566 = vmatpush2.xpose.msra.mxu0 0.0
    %567 = vmatprep.subr.mxu0 0.0
    %568 = vmatpush2.xpose.msra.mxu0 0.0
    %569 = vmatprep.subr.mxu0 0.0
    %570 = vmatpush2.xpose.msra.mxu0 0.0
    %571 = vmatprep.subr.mxu0 0.0
    %572 = vmatpush2.xpose.msra.mxu0 0.0
    %573 = vmatprep.subr.mxu0 0.0
    %574 = vmatpush2.xpose.msra.mxu0 0.0
    %575 = vmatprep.subr.mxu0 0.0
    %576 = vmatpush2.xpose.msra.mxu0 0.0
    %577 = vmatprep.subr.mxu0 0.0
    %578 = vmatpush2.xpose.msra.mxu0 0.0
    %579 = vmatprep.subr.mxu0 0.0
    %580 = vmatpush2.xpose.msra.mxu0 0.0
    %581 = vmatprep.subr.mxu0 0.0
    %582 = vmatpush2.xpose.msra.mxu0 0.0
    %583 = vmatprep.subr.mxu0 0.0
    %584 = vmatpush2.xpose.msra.mxu0 0.0
    %585 = vmatprep.mubr.f32.mxu0 0.0
    %586 = vmatmul.mubr.f32.gmra.mxu0 %v517
    %v587 = vpop.f32.mrf.mxu0
    %v588 = vadd.f32 0.0, %v587
    %v589 = vpop.f32.mrf.mxu0
    %590 = vmatprep.mubr.f32.mxu0 0.0
    %591 = vmatmul.mubr.f32.gmra.mxu0 %v519
    %v592 = vpop.f32.mrf.mxu0
    %v593 = vadd.f32 0.0, %v592
    %v594 = vpop.f32.mrf.mxu0
    %595 = vdwg.mxu0
    %vm608 = vcmask 1040384
    %v609 = vrot.slane %v188, 7
    %v610 = vrot.slane %v193, 7
    %v611 = vsel %vm608, %v609, %v610
    %v612 = vrot.slane %v268, 7
    %v613 = vrot.slane %v273, 7
    %v614 = vsel %vm608, %v612, %v613
    %v615 = vrot.slane %v348, 7
    %v616 = vrot.slane %v353, 7
    %v617 = vsel %vm608, %v615, %v616
    %v618 = vrot.slane %v428, 7
    %v619 = vrot.slane %v433, 7
    %v620 = vsel %vm608, %v618, %v619
    %v621 = vrot.slane %v508, 7
    %v622 = vrot.slane %v513, 7
    %v623 = vsel %vm608, %v621, %v622
    %v624 = vrot.slane %v588, 7
    %v625 = vrot.slane %v593, 7
    %v626 = vsel %vm608, %v624, %v625
    %627 = vrot.lane.b32.xlu0 %v611, 121
    %v628 = vpop.permute.xlu0 %627
    %629 = vrot.lane.b32.xlu0 %v614, 121
    %v630 = vpop.permute.xlu0 %629
    %631 = vrot.lane.b32.xlu0 %v617, 121
    %v632 = vpop.permute.xlu0 %631
    %633 = vrot.lane.b32.xlu0 %v620, 121
    %v634 = vpop.permute.xlu0 %633
    %635 = vrot.lane.b32.xlu0 %v623, 121
    %v636 = vpop.permute.xlu0 %635
    %637 = vrot.lane.b32.xlu0 %v626, 121
    %v638 = vpop.permute.xlu0 %637
    %645 = vrot.lane.b32.xlu0 %v188, 121
    %v646 = vpop.permute.xlu0 %645
    %647 = vrot.lane.b32.xlu0 %v268, 121
    %v648 = vpop.permute.xlu0 %647
    %649 = vrot.lane.b32.xlu0 %v348, 121
    %v650 = vpop.permute.xlu0 %649
    %651 = vrot.lane.b32.xlu0 %v428, 121
    %v652 = vpop.permute.xlu0 %651
    %653 = vrot.lane.b32.xlu0 %v508, 121
    %v654 = vpop.permute.xlu0 %653
    %655 = vrot.lane.b32.xlu0 %v588, 121
    %v656 = vpop.permute.xlu0 %655
    %v663 = vsub.f32 %v188, 1.0
    %v664 = vsub.f32 %v268, 1.0
    %v665 = vsub.f32 %v348, 1.0
    %v666 = vsub.f32 %v428, 1.0
    %v667 = vsub.f32 %v508, 1.0
    %v668 = vsub.f32 %v588, 1.0
    %v669 = vsub.f32 %v628, 1.0
    %v670 = vsub.f32 %v630, 1.0
    %v671 = vsub.f32 %v632, 1.0
    %v672 = vsub.f32 %v634, 1.0
    %v673 = vsub.f32 %v636, 1.0
    %v674 = vsub.f32 %v638, 1.0
    %v675 = vsub.f32 %v646, 1.0
    %v676 = vsub.f32 %v648, 1.0
    %v677 = vsub.f32 %v650, 1.0
    %v678 = vsub.f32 %v652, 1.0
    %v679 = vsub.f32 %v654, 1.0
    %v680 = vsub.f32 %v656, 1.0
    %v681 = vadd.f32 %v663, 1.0
    %v682 = vadd.f32 %v664, 1.0
    %v683 = vadd.f32 %v665, 1.0
    %v684 = vadd.f32 %v666, 1.0
    %v685 = vadd.f32 %v667, 1.0
    %v686 = vadd.f32 %v668, 1.0
    %v687 = vadd.f32 %v669, 1.0
    %v688 = vadd.f32 %v670, 1.0
    %v689 = vadd.f32 %v671, 1.0
    %v690 = vadd.f32 %v672, 1.0
    %v691 = vadd.f32 %v673, 1.0
    %v692 = vadd.f32 %v674, 1.0
    %v693 = vadd.f32 %v675, 1.0
    %v694 = vadd.f32 %v676, 1.0
    %v695 = vadd.f32 %v677, 1.0
    %v696 = vadd.f32 %v678, 1.0
    %v697 = vadd.f32 %v679, 1.0
    %v698 = vadd.f32 %v680, 1.0
    %v717 = vrot.slane %v682, 7
    %vm718 = vcmask 1041409
    %v719 = vsel %vm718, %v717, %v681
    %v720 = vrot.slane %v683, 6
    %vm721 = vcmask 1042434
    %v722 = vsel %vm721, %v720, %v719
    %v723 = vrot.slane %v684, 5
    %vm724 = vcmask 1043459
    %v725 = vsel %vm724, %v723, %v722
    %v726 = vrot.slane %v685, 4
    %vm727 = vcmask 1044484
    %v728 = vsel %vm727, %v726, %v725
    %v729 = vrot.slane %v686, 3
    %vm730 = vcmask 1045509
    %v731 = vsel %vm730, %v729, %v728
    %v732 = vrot.slane %v687, 2
    %vm733 = vcmask 1046534
    %v734 = vsel %vm733, %v732, %v731
    %v735 = vrot.slane %v688, 1
    %vm736 = vcmask 1047559
    %v737 = vsel %vm736, %v735, %v734
    %v738 = vrot.slane %v690, 7
    %v739 = vsel %vm718, %v738, %v689
    %v740 = vrot.slane %v691, 6
    %v741 = vsel %vm721, %v740, %v739
    %v742 = vrot.slane %v692, 5
    %v743 = vsel %vm724, %v742, %v741
    %v744 = vrot.slane %v693, 4
    %v745 = vsel %vm727, %v744, %v743
    %v746 = vrot.slane %v694, 3
    %v747 = vsel %vm730, %v746, %v745
    %v748 = vrot.slane %v695, 2
    %v749 = vsel %vm733, %v748, %v747
    %v750 = vrot.slane %v696, 1
    %v751 = vsel %vm736, %v750, %v749
    %v752 = vrot.slane %v698, 7
    %v753 = vsel %vm718, %v752, %v697
    %754 = vrot.lane.b32.xlu0 %v737, 1
    %v755 = vpop.permute.xlu0 %754
    %756 = vrot.lane.b32.xlu0 %v751, 1
    %v757 = vpop.permute.xlu0 %756
    %758 = vrot.lane.b32.xlu0 %v753, 1
    %v759 = vpop.permute.xlu0 %758
    %vm763 = vcmask 7168
    %v764 = vsel %vm763, 0.0, %v755
    %v765 = vsel %vm763, 0.0, %v757
    %v766 = vsel %vm763, 0.0, %v759
    %v770 = vrot.slane %v764, 1
    %v771 = vrot.slane %v764, 2
    %v772 = vrot.slane %v764, 3
    %v773 = vrot.slane %v764, 4
    %v774 = vrot.slane %v764, 5
    %v775 = vrot.slane %v764, 6
    %v776 = vrot.slane %v764, 7
    %v777 = vrot.slane %v765, 1
    %v778 = vrot.slane %v765, 2
    %v779 = vrot.slane %v765, 3
    %v780 = vrot.slane %v765, 4
    %v781 = vrot.slane %v765, 5
    %v782 = vrot.slane %v765, 6
    %v783 = vrot.slane %v765, 7
    %v784 = vrot.slane %v766, 1
    %v803 = vadd.f32 %v681, %v764
    %v804 = vadd.f32 %v682, %v770
    %v805 = vadd.f32 %v683, %v771
    %v806 = vadd.f32 %v684, %v772
    %v807 = vadd.f32 %v685, %v773
    %v808 = vadd.f32 %v686, %v774
    %v809 = vadd.f32 %v687, %v775
    %v810 = vadd.f32 %v688, %v776
    %v811 = vadd.f32 %v689, %v765
    %v812 = vadd.f32 %v690, %v777
    %v813 = vadd.f32 %v691, %v778
    %v814 = vadd.f32 %v692, %v779
    %v815 = vadd.f32 %v693, %v780
    %v816 = vadd.f32 %v694, %v781
    %v817 = vadd.f32 %v695, %v782
    %v818 = vadd.f32 %v696, %v783
    %v819 = vadd.f32 %v697, %v766
    %v820 = vadd.f32 %v698, %v784
    %v839 = vrot.slane %v804, 7
    %v840 = vsel %vm718, %v839, %v803
    %v841 = vrot.slane %v805, 6
    %v842 = vsel %vm721, %v841, %v840
    %v843 = vrot.slane %v806, 5
    %v844 = vsel %vm724, %v843, %v842
    %v845 = vrot.slane %v807, 4
    %v846 = vsel %vm727, %v845, %v844
    %v847 = vrot.slane %v808, 3
    %v848 = vsel %vm730, %v847, %v846
    %v849 = vrot.slane %v809, 2
    %v850 = vsel %vm733, %v849, %v848
    %v851 = vrot.slane %v810, 1
    %v852 = vsel %vm736, %v851, %v850
    %v853 = vrot.slane %v812, 7
    %v854 = vsel %vm718, %v853, %v811
    %v855 = vrot.slane %v813, 6
    %v856 = vsel %vm721, %v855, %v854
    %v857 = vrot.slane %v814, 5
    %v858 = vsel %vm724, %v857, %v856
    %v859 = vrot.slane %v815, 4
    %v860 = vsel %vm727, %v859, %v858
    %v861 = vrot.slane %v816, 3
    %v862 = vsel %vm730, %v861, %v860
    %v863 = vrot.slane %v817, 2
    %v864 = vsel %vm733, %v863, %v862
    %v865 = vrot.slane %v818, 1
    %v866 = vsel %vm736, %v865, %v864
    %v867 = vrot.slane %v820, 7
    %v868 = vsel %vm718, %v867, %v819
    %869 = vrot.lane.b32.xlu0 %v852, 2
    %v870 = vpop.permute.xlu0 %869
    %871 = vrot.lane.b32.xlu0 %v866, 2
    %v872 = vpop.permute.xlu0 %871
    %873 = vrot.lane.b32.xlu0 %v868, 2
    %v874 = vpop.permute.xlu0 %873
    %vm878 = vcmask 15360
    %v879 = vsel %vm878, 0.0, %v870
    %v880 = vsel %vm878, 0.0, %v872
    %v881 = vsel %vm878, 0.0, %v874
    %v885 = vrot.slane %v879, 1
    %v886 = vrot.slane %v879, 2
    %v887 = vrot.slane %v879, 3
    %v888 = vrot.slane %v879, 4
    %v889 = vrot.slane %v879, 5
    %v890 = vrot.slane %v879, 6
    %v891 = vrot.slane %v879, 7
    %v892 = vrot.slane %v880, 1
    %v893 = vrot.slane %v880, 2
    %v894 = vrot.slane %v880, 3
    %v895 = vrot.slane %v880, 4
    %v896 = vrot.slane %v880, 5
    %v897 = vrot.slane %v880, 6
    %v898 = vrot.slane %v880, 7
    %v899 = vrot.slane %v881, 1
    %v918 = vadd.f32 %v803, %v879
    %v919 = vadd.f32 %v804, %v885
    %v920 = vadd.f32 %v805, %v886
    %v921 = vadd.f32 %v806, %v887
    %v922 = vadd.f32 %v807, %v888
    %v923 = vadd.f32 %v808, %v889
    %v924 = vadd.f32 %v809, %v890
    %v925 = vadd.f32 %v810, %v891
    %v926 = vadd.f32 %v811, %v880
    %v927 = vadd.f32 %v812, %v892
    %v928 = vadd.f32 %v813, %v893
    %v929 = vadd.f32 %v814, %v894
    %v930 = vadd.f32 %v815, %v895
    %v931 = vadd.f32 %v816, %v896
    %v932 = vadd.f32 %v817, %v897
    %v933 = vadd.f32 %v818, %v898
    %v934 = vadd.f32 %v819, %v881
    %v935 = vadd.f32 %v820, %v899
    %v954 = vrot.slane %v919, 7
    %v955 = vsel %vm718, %v954, %v918
    %v956 = vrot.slane %v920, 6
    %v957 = vsel %vm721, %v956, %v955
    %v958 = vrot.slane %v921, 5
    %v959 = vsel %vm724, %v958, %v957
    %v960 = vrot.slane %v922, 4
    %v961 = vsel %vm727, %v960, %v959
    %v962 = vrot.slane %v923, 3
    %v963 = vsel %vm730, %v962, %v961
    %v964 = vrot.slane %v924, 2
    %v965 = vsel %vm733, %v964, %v963
    %v966 = vrot.slane %v925, 1
    %v967 = vsel %vm736, %v966, %v965
    %v968 = vrot.slane %v927, 7
    %v969 = vsel %vm718, %v968, %v926
    %v970 = vrot.slane %v928, 6
    %v971 = vsel %vm721, %v970, %v969
    %v972 = vrot.slane %v929, 5
    %v973 = vsel %vm724, %v972, %v971
    %v974 = vrot.slane %v930, 4
    %v975 = vsel %vm727, %v974, %v973
    %v976 = vrot.slane %v931, 3
    %v977 = vsel %vm730, %v976, %v975
    %v978 = vrot.slane %v932, 2
    %v979 = vsel %vm733, %v978, %v977
    %v980 = vrot.slane %v933, 1
    %v981 = vsel %vm736, %v980, %v979
    %v982 = vrot.slane %v935, 7
    %v983 = vsel %vm718, %v982, %v934
    %984 = vrot.lane.b32.xlu0 %v967, 4
    %v985 = vpop.permute.xlu0 %984
    %986 = vrot.lane.b32.xlu0 %v981, 4
    %v987 = vpop.permute.xlu0 %986
    %988 = vrot.lane.b32.xlu0 %v983, 4
    %v989 = vpop.permute.xlu0 %988
    %v993 = vsel %vm115, 0.0, %v985
    %v994 = vsel %vm115, 0.0, %v987
    %v995 = vsel %vm115, 0.0, %v989
    %v999 = vrot.slane %v993, 1
    %v1000 = vrot.slane %v993, 2
    %v1001 = vrot.slane %v993, 3
    %v1002 = vrot.slane %v993, 4
    %v1003 = vrot.slane %v993, 5
    %v1004 = vrot.slane %v993, 6
    %v1005 = vrot.slane %v993, 7
    %v1006 = vrot.slane %v994, 1
    %v1007 = vrot.slane %v994, 2
    %v1008 = vrot.slane %v994, 3
    %v1009 = vrot.slane %v994, 4
    %v1010 = vrot.slane %v994, 5
    %v1011 = vrot.slane %v994, 6
    %v1012 = vrot.slane %v994, 7
    %v1013 = vrot.slane %v995, 1
    %v1032 = vadd.f32 %v918, %v993
    %v1033 = vadd.f32 %v919, %v999
    %v1034 = vadd.f32 %v920, %v1000
    %v1035 = vadd.f32 %v921, %v1001
    %v1036 = vadd.f32 %v922, %v1002
    %v1037 = vadd.f32 %v923, %v1003
    %v1038 = vadd.f32 %v924, %v1004
    %v1039 = vadd.f32 %v925, %v1005
    %v1040 = vadd.f32 %v926, %v994
    %v1041 = vadd.f32 %v927, %v1006
    %v1042 = vadd.f32 %v928, %v1007
    %v1043 = vadd.f32 %v929, %v1008
    %v1044 = vadd.f32 %v930, %v1009
    %v1045 = vadd.f32 %v931, %v1010
    %v1046 = vadd.f32 %v932, %v1011
    %v1047 = vadd.f32 %v933, %v1012
    %v1048 = vadd.f32 %v934, %v995
    %v1049 = vadd.f32 %v935, %v1013
    %v1050 = vadd.f32 %v1032, 1.0
    %v1051 = vadd.f32 %v1033, 1.0
    %v1052 = vadd.f32 %v1034, 1.0
    %v1053 = vadd.f32 %v1035, 1.0
    %v1054 = vadd.f32 %v1036, 1.0
    %v1055 = vadd.f32 %v1037, 1.0
    %v1056 = vadd.f32 %v1038, 1.0
    %v1057 = vadd.f32 %v1039, 1.0
    %v1058 = vadd.f32 %v1040, 1.0
    %v1059 = vadd.f32 %v1041, 1.0
    %v1060 = vadd.f32 %v1042, 1.0
    %v1061 = vadd.f32 %v1043, 1.0
    %v1062 = vadd.f32 %v1044, 1.0
    %v1063 = vadd.f32 %v1045, 1.0
    %v1064 = vadd.f32 %v1046, 1.0
    %v1065 = vadd.f32 %v1047, 1.0
    %v1066 = vadd.f32 %v1048, 1.0
    %v1067 = vadd.f32 %v1049, 1.0
    %v1068 = vsub.f32 %v1032, %v681
    %v1069 = vsub.f32 %v1033, %v682
    %v1070 = vsub.f32 %v1034, %v683
    %v1071 = vsub.f32 %v1035, %v684
    %v1072 = vsub.f32 %v1036, %v685
    %v1073 = vsub.f32 %v1037, %v686
    %v1074 = vsub.f32 %v1038, %v687
    %v1075 = vsub.f32 %v1039, %v688
    %v1076 = vsub.f32 %v1040, %v689
    %v1077 = vsub.f32 %v1041, %v690
    %v1078 = vsub.f32 %v1042, %v691
    %v1079 = vsub.f32 %v1043, %v692
    %v1080 = vsub.f32 %v1044, %v693
    %v1081 = vsub.f32 %v1045, %v694
    %v1082 = vsub.f32 %v1046, %v695
    %v1083 = vsub.f32 %v1047, %v696
    %v1084 = vsub.f32 %v1048, %v697
    %v1085 = vsub.f32 %v1049, %v698
    %v1086 = vadd.f32 %v1068, 1.0
    %v1087 = vadd.f32 %v1069, 1.0
    %v1088 = vadd.f32 %v1070, 1.0
    %v1089 = vadd.f32 %v1071, 1.0
    %v1090 = vadd.f32 %v1072, 1.0
    %v1091 = vadd.f32 %v1073, 1.0
    %v1092 = vadd.f32 %v1074, 1.0
    %v1093 = vadd.f32 %v1075, 1.0
    %v1094 = vadd.f32 %v1076, 1.0
    %v1095 = vadd.f32 %v1077, 1.0
    %v1096 = vadd.f32 %v1078, 1.0
    %v1097 = vadd.f32 %v1079, 1.0
    %v1098 = vadd.f32 %v1080, 1.0
    %v1099 = vadd.f32 %v1081, 1.0
    %v1100 = vadd.f32 %v1082, 1.0
    %v1101 = vadd.f32 %v1083, 1.0
    %v1102 = vadd.f32 %v1084, 1.0
    %v1103 = vadd.f32 %v1085, 1.0
    %v1122 = vrot.slane %v663, 1
    %v1123 = vrot.slane %v664, 1
    %v1124 = vrot.slane %v665, 1
    %v1125 = vrot.slane %v666, 1
    %v1126 = vrot.slane %v667, 1
    %v1127 = vrot.slane %v668, 1
    %v1128 = vrot.slane %v669, 1
    %v1129 = vrot.slane %v670, 1
    %v1130 = vrot.slane %v671, 1
    %v1131 = vrot.slane %v672, 1
    %v1132 = vrot.slane %v673, 1
    %v1133 = vrot.slane %v674, 1
    %v1134 = vrot.slane %v675, 1
    %v1135 = vrot.slane %v676, 1
    %v1136 = vrot.slane %v677, 1
    %v1137 = vrot.slane %v678, 1
    %v1138 = vrot.slane %v679, 1
    %v1139 = vrot.slane %v680, 1
    %v1158 = vmul.f32 %v1086, %v1122
    %v1159 = vmul.f32 %v1087, %v1123
    %v1160 = vmul.f32 %v1088, %v1124
    %v1161 = vmul.f32 %v1089, %v1125
    %v1162 = vmul.f32 %v1090, %v1126
    %v1163 = vmul.f32 %v1091, %v1127
    %v1164 = vmul.f32 %v1092, %v1128
    %v1165 = vmul.f32 %v1093, %v1129
    %v1166 = vmul.f32 %v1094, %v1130
    %v1167 = vmul.f32 %v1095, %v1131
    %v1168 = vmul.f32 %v1096, %v1132
    %v1169 = vmul.f32 %v1097, %v1133
    %v1170 = vmul.f32 %v1098, %v1134
    %v1171 = vmul.f32 %v1099, %v1135
    %v1172 = vmul.f32 %v1100, %v1136
    %v1173 = vmul.f32 %v1101, %v1137
    %v1174 = vmul.f32 %v1102, %v1138
    %v1175 = vmul.f32 %v1103, %v1139
    %v1176 = vadd.f32 %v1050, %v1158
    %v1177 = vadd.f32 %v1051, %v1159
    %v1178 = vadd.f32 %v1052, %v1160
    %v1179 = vadd.f32 %v1053, %v1161
    %v1180 = vadd.f32 %v1054, %v1162
    %v1181 = vadd.f32 %v1055, %v1163
    %v1182 = vadd.f32 %v1056, %v1164
    %v1183 = vadd.f32 %v1057, %v1165
    %v1184 = vadd.f32 %v1058, %v1166
    %v1185 = vadd.f32 %v1059, %v1167
    %v1186 = vadd.f32 %v1060, %v1168
    %v1187 = vadd.f32 %v1061, %v1169
    %v1188 = vadd.f32 %v1062, %v1170
    %v1189 = vadd.f32 %v1063, %v1171
    %v1190 = vadd.f32 %v1064, %v1172
    %v1191 = vadd.f32 %v1065, %v1173
    %v1192 = vadd.f32 %v1066, %v1174
    %v1193 = vadd.f32 %v1067, %v1175
    %v1212 = vrot.slane %v1177, 7
    %v1213 = vsel %vm718, %v1212, %v1176
    %v1214 = vrot.slane %v1178, 6
    %v1215 = vsel %vm721, %v1214, %v1213
    %v1216 = vrot.slane %v1179, 5
    %v1217 = vsel %vm724, %v1216, %v1215
    %v1218 = vrot.slane %v1180, 4
    %v1219 = vsel %vm727, %v1218, %v1217
    %v1220 = vrot.slane %v1181, 3
    %v1221 = vsel %vm730, %v1220, %v1219
    %v1222 = vrot.slane %v1182, 2
    %v1223 = vsel %vm733, %v1222, %v1221
    %v1224 = vrot.slane %v1183, 1
    %v1225 = vsel %vm736, %v1224, %v1223
    %v1226 = vrot.slane %v1185, 7
    %v1227 = vsel %vm718, %v1226, %v1184
    %v1228 = vrot.slane %v1186, 6
    %v1229 = vsel %vm721, %v1228, %v1227
    %v1230 = vrot.slane %v1187, 5
    %v1231 = vsel %vm724, %v1230, %v1229
    %v1232 = vrot.slane %v1188, 4
    %v1233 = vsel %vm727, %v1232, %v1231
    %v1234 = vrot.slane %v1189, 3
    %v1235 = vsel %vm730, %v1234, %v1233
    %v1236 = vrot.slane %v1190, 2
    %v1237 = vsel %vm733, %v1236, %v1235
    %v1238 = vrot.slane %v1191, 1
    %v1239 = vsel %vm736, %v1238, %v1237
    %v1240 = vrot.slane %v1193, 7
    %v1241 = vsel %vm718, %v1240, %v1192
    %1242 = vrot.lane.b32.xlu0 %v1225, 1
    %v1243 = vpop.permute.xlu0 %1242
    %1244 = vrot.lane.b32.xlu0 %v1239, 1
    %v1245 = vpop.permute.xlu0 %1244
    %1246 = vrot.lane.b32.xlu0 %v1241, 1
    %v1247 = vpop.permute.xlu0 %1246
    %v1251 = vsel %vm763, 0.0, %v1243
    %v1252 = vsel %vm763, 0.0, %v1245
    %v1253 = vsel %vm763, 0.0, %v1247
    %v1257 = vrot.slane %v1251, 1
    %v1258 = vrot.slane %v1251, 2
    %v1259 = vrot.slane %v1251, 3
    %v1260 = vrot.slane %v1251, 4
    %v1261 = vrot.slane %v1251, 5
    %v1262 = vrot.slane %v1251, 6
    %v1263 = vrot.slane %v1251, 7
    %v1264 = vrot.slane %v1252, 1
    %v1265 = vrot.slane %v1252, 2
    %v1266 = vrot.slane %v1252, 3
    %v1267 = vrot.slane %v1252, 4
    %v1268 = vrot.slane %v1252, 5
    %v1269 = vrot.slane %v1252, 6
    %v1270 = vrot.slane %v1252, 7
    %v1271 = vrot.slane %v1253, 1
    %v1290 = vadd.f32 %v1176, %v1251
    %v1291 = vadd.f32 %v1177, %v1257
    %v1292 = vadd.f32 %v1178, %v1258
    %v1293 = vadd.f32 %v1179, %v1259
    %v1294 = vadd.f32 %v1180, %v1260
    %v1295 = vadd.f32 %v1181, %v1261
    %v1296 = vadd.f32 %v1182, %v1262
    %v1297 = vadd.f32 %v1183, %v1263
    %v1298 = vadd.f32 %v1184, %v1252
    %v1299 = vadd.f32 %v1185, %v1264
    %v1300 = vadd.f32 %v1186, %v1265
    %v1301 = vadd.f32 %v1187, %v1266
    %v1302 = vadd.f32 %v1188, %v1267
    %v1303 = vadd.f32 %v1189, %v1268
    %v1304 = vadd.f32 %v1190, %v1269
    %v1305 = vadd.f32 %v1191, %v1270
    %v1306 = vadd.f32 %v1192, %v1253
    %v1307 = vadd.f32 %v1193, %v1271
    %v1326 = vrot.slane %v1291, 7
    %v1327 = vsel %vm718, %v1326, %v1290
    %v1328 = vrot.slane %v1292, 6
    %v1329 = vsel %vm721, %v1328, %v1327
    %v1330 = vrot.slane %v1293, 5
    %v1331 = vsel %vm724, %v1330, %v1329
    %v1332 = vrot.slane %v1294, 4
    %v1333 = vsel %vm727, %v1332, %v1331
    %v1334 = vrot.slane %v1295, 3
    %v1335 = vsel %vm730, %v1334, %v1333
    %v1336 = vrot.slane %v1296, 2
    %v1337 = vsel %vm733, %v1336, %v1335
    %v1338 = vrot.slane %v1297, 1
    %v1339 = vsel %vm736, %v1338, %v1337
    %v1340 = vrot.slane %v1299, 7
    %v1341 = vsel %vm718, %v1340, %v1298
    %v1342 = vrot.slane %v1300, 6
    %v1343 = vsel %vm721, %v1342, %v1341
    %v1344 = vrot.slane %v1301, 5
    %v1345 = vsel %vm724, %v1344, %v1343
    %v1346 = vrot.slane %v1302, 4
    %v1347 = vsel %vm727, %v1346, %v1345
    %v1348 = vrot.slane %v1303, 3
    %v1349 = vsel %vm730, %v1348, %v1347
    %v1350 = vrot.slane %v1304, 2
    %v1351 = vsel %vm733, %v1350, %v1349
    %v1352 = vrot.slane %v1305, 1
    %v1353 = vsel %vm736, %v1352, %v1351
    %v1354 = vrot.slane %v1307, 7
    %v1355 = vsel %vm718, %v1354, %v1306
    %1356 = vrot.lane.b32.xlu0 %v1339, 2
    %v1357 = vpop.permute.xlu0 %1356
    %1358 = vrot.lane.b32.xlu0 %v1353, 2
    %v1359 = vpop.permute.xlu0 %1358
    %1360 = vrot.lane.b32.xlu0 %v1355, 2
    %v1361 = vpop.permute.xlu0 %1360
    %v1365 = vsel %vm878, 0.0, %v1357
    %v1366 = vsel %vm878, 0.0, %v1359
    %v1367 = vsel %vm878, 0.0, %v1361
    %v1371 = vrot.slane %v1365, 1
    %v1372 = vrot.slane %v1365, 2
    %v1373 = vrot.slane %v1365, 3
    %v1374 = vrot.slane %v1365, 4
    %v1375 = vrot.slane %v1365, 5
    %v1376 = vrot.slane %v1365, 6
    %v1377 = vrot.slane %v1365, 7
    %v1378 = vrot.slane %v1366, 1
    %v1379 = vrot.slane %v1366, 2
    %v1380 = vrot.slane %v1366, 3
    %v1381 = vrot.slane %v1366, 4
    %v1382 = vrot.slane %v1366, 5
    %v1383 = vrot.slane %v1366, 6
    %v1384 = vrot.slane %v1366, 7
    %v1385 = vrot.slane %v1367, 1
    %v1404 = vadd.f32 %v1290, %v1365
    %v1405 = vadd.f32 %v1291, %v1371
    %v1406 = vadd.f32 %v1292, %v1372
    %v1407 = vadd.f32 %v1293, %v1373
    %v1408 = vadd.f32 %v1294, %v1374
    %v1409 = vadd.f32 %v1295, %v1375
    %v1410 = vadd.f32 %v1296, %v1376
    %v1411 = vadd.f32 %v1297, %v1377
    %v1412 = vadd.f32 %v1298, %v1366
    %v1413 = vadd.f32 %v1299, %v1378
    %v1414 = vadd.f32 %v1300, %v1379
    %v1415 = vadd.f32 %v1301, %v1380
    %v1416 = vadd.f32 %v1302, %v1381
    %v1417 = vadd.f32 %v1303, %v1382
    %v1418 = vadd.f32 %v1304, %v1383
    %v1419 = vadd.f32 %v1305, %v1384
    %v1420 = vadd.f32 %v1306, %v1367
    %v1421 = vadd.f32 %v1307, %v1385
    %v1440 = vrot.slane %v1405, 7
    %v1441 = vsel %vm718, %v1440, %v1404
    %v1442 = vrot.slane %v1406, 6
    %v1443 = vsel %vm721, %v1442, %v1441
    %v1444 = vrot.slane %v1407, 5
    %v1445 = vsel %vm724, %v1444, %v1443
    %v1446 = vrot.slane %v1408, 4
    %v1447 = vsel %vm727, %v1446, %v1445
    %v1448 = vrot.slane %v1409, 3
    %v1449 = vsel %vm730, %v1448, %v1447
    %v1450 = vrot.slane %v1410, 2
    %v1451 = vsel %vm733, %v1450, %v1449
    %v1452 = vrot.slane %v1411, 1
    %v1453 = vsel %vm736, %v1452, %v1451
    %v1454 = vrot.slane %v1413, 7
    %v1455 = vsel %vm718, %v1454, %v1412
    %v1456 = vrot.slane %v1414, 6
    %v1457 = vsel %vm721, %v1456, %v1455
    %v1458 = vrot.slane %v1415, 5
    %v1459 = vsel %vm724, %v1458, %v1457
    %v1460 = vrot.slane %v1416, 4
    %v1461 = vsel %vm727, %v1460, %v1459
    %v1462 = vrot.slane %v1417, 3
    %v1463 = vsel %vm730, %v1462, %v1461
    %v1464 = vrot.slane %v1418, 2
    %v1465 = vsel %vm733, %v1464, %v1463
    %v1466 = vrot.slane %v1419, 1
    %v1467 = vsel %vm736, %v1466, %v1465
    %v1468 = vrot.slane %v1421, 7
    %v1469 = vsel %vm718, %v1468, %v1420
    %1470 = vrot.lane.b32.xlu0 %v1453, 4
    %v1471 = vpop.permute.xlu0 %1470
    %1472 = vrot.lane.b32.xlu0 %v1467, 4
    %v1473 = vpop.permute.xlu0 %1472
    %1474 = vrot.lane.b32.xlu0 %v1469, 4
    %v1475 = vpop.permute.xlu0 %1474
    %v1479 = vsel %vm115, 0.0, %v1471
    %v1480 = vsel %vm115, 0.0, %v1473
    %v1481 = vsel %vm115, 0.0, %v1475
    %v1485 = vrot.slane %v1479, 1
    %v1486 = vrot.slane %v1479, 2
    %v1487 = vrot.slane %v1479, 3
    %v1488 = vrot.slane %v1479, 4
    %v1489 = vrot.slane %v1479, 5
    %v1490 = vrot.slane %v1479, 6
    %v1491 = vrot.slane %v1479, 7
    %v1492 = vrot.slane %v1480, 1
    %v1493 = vrot.slane %v1480, 2
    %v1494 = vrot.slane %v1480, 3
    %v1495 = vrot.slane %v1480, 4
    %v1496 = vrot.slane %v1480, 5
    %v1497 = vrot.slane %v1480, 6
    %v1498 = vrot.slane %v1480, 7
    %v1499 = vrot.slane %v1481, 1
    %v1518 = vadd.f32 %v1404, %v1479
    %v1519 = vadd.f32 %v1405, %v1485
    %v1520 = vadd.f32 %v1406, %v1486
    %v1521 = vadd.f32 %v1407, %v1487
    %v1522 = vadd.f32 %v1408, %v1488
    %v1523 = vadd.f32 %v1409, %v1489
    %v1524 = vadd.f32 %v1410, %v1490
    %v1525 = vadd.f32 %v1411, %v1491
    %v1526 = vadd.f32 %v1412, %v1480
    %v1527 = vadd.f32 %v1413, %v1492
    %v1528 = vadd.f32 %v1414, %v1493
    %v1529 = vadd.f32 %v1415, %v1494
    %v1530 = vadd.f32 %v1416, %v1495
    %v1531 = vadd.f32 %v1417, %v1496
    %v1532 = vadd.f32 %v1418, %v1497
    %v1533 = vadd.f32 %v1419, %v1498
    %v1534 = vadd.f32 %v1420, %v1481
    %v1535 = vadd.f32 %v1421, %v1499
    %v1536 = vadd.f32 %v1518, 1.0
    %v1537 = vadd.f32 %v1519, 1.0
    %v1538 = vadd.f32 %v1520, 1.0
    %v1539 = vadd.f32 %v1521, 1.0
    %v1540 = vadd.f32 %v1522, 1.0
    %v1541 = vadd.f32 %v1523, 1.0
    %v1542 = vadd.f32 %v1524, 1.0
    %v1543 = vadd.f32 %v1525, 1.0
    %v1544 = vadd.f32 %v1526, 1.0
    %v1545 = vadd.f32 %v1527, 1.0
    %v1546 = vadd.f32 %v1528, 1.0
    %v1547 = vadd.f32 %v1529, 1.0
    %v1548 = vadd.f32 %v1530, 1.0
    %v1549 = vadd.f32 %v1531, 1.0
    %v1550 = vadd.f32 %v1532, 1.0
    %v1551 = vadd.f32 %v1533, 1.0
    %v1552 = vadd.f32 %v1534, 1.0
    %v1553 = vadd.f32 %v1535, 1.0
    %v1554 = vsub.f32 %v1518, %v1176
    %v1555 = vsub.f32 %v1519, %v1177
    %v1556 = vsub.f32 %v1520, %v1178
    %v1557 = vsub.f32 %v1521, %v1179
    %v1558 = vsub.f32 %v1522, %v1180
    %v1559 = vsub.f32 %v1523, %v1181
    %v1560 = vsub.f32 %v1524, %v1182
    %v1561 = vsub.f32 %v1525, %v1183
    %v1562 = vsub.f32 %v1526, %v1184
    %v1563 = vsub.f32 %v1527, %v1185
    %v1564 = vsub.f32 %v1528, %v1186
    %v1565 = vsub.f32 %v1529, %v1187
    %v1566 = vsub.f32 %v1530, %v1188
    %v1567 = vsub.f32 %v1531, %v1189
    %v1568 = vsub.f32 %v1532, %v1190
    %v1569 = vsub.f32 %v1533, %v1191
    %v1570 = vsub.f32 %v1534, %v1192
    %v1571 = vsub.f32 %v1535, %v1193
    %v1572 = vadd.f32 %v1554, 1.0
    %v1573 = vadd.f32 %v1555, 1.0
    %v1574 = vadd.f32 %v1556, 1.0
    %v1575 = vadd.f32 %v1557, 1.0
    %v1576 = vadd.f32 %v1558, 1.0
    %v1577 = vadd.f32 %v1559, 1.0
    %v1578 = vadd.f32 %v1560, 1.0
    %v1579 = vadd.f32 %v1561, 1.0
    %v1580 = vadd.f32 %v1562, 1.0
    %v1581 = vadd.f32 %v1563, 1.0
    %v1582 = vadd.f32 %v1564, 1.0
    %v1583 = vadd.f32 %v1565, 1.0
    %v1584 = vadd.f32 %v1566, 1.0
    %v1585 = vadd.f32 %v1567, 1.0
    %v1586 = vadd.f32 %v1568, 1.0
    %v1587 = vadd.f32 %v1569, 1.0
    %v1588 = vadd.f32 %v1570, 1.0
    %v1589 = vadd.f32 %v1571, 1.0
    %v1590 = vrot.slane %v663, 2
    %v1591 = vrot.slane %v664, 2
    %v1592 = vrot.slane %v665, 2
    %v1593 = vrot.slane %v666, 2
    %v1594 = vrot.slane %v667, 2
    %v1595 = vrot.slane %v668, 2
    %v1596 = vrot.slane %v669, 2
    %v1597 = vrot.slane %v670, 2
    %v1598 = vrot.slane %v671, 2
    %v1599 = vrot.slane %v672, 2
    %v1600 = vrot.slane %v673, 2
    %v1601 = vrot.slane %v674, 2
    %v1602 = vrot.slane %v675, 2
    %v1603 = vrot.slane %v676, 2
    %v1604 = vrot.slane %v677, 2
    %v1605 = vrot.slane %v678, 2
    %v1606 = vrot.slane %v679, 2
    %v1607 = vrot.slane %v680, 2
    %v1626 = vmul.f32 %v1572, %v1590
    %v1627 = vmul.f32 %v1573, %v1591
    %v1628 = vmul.f32 %v1574, %v1592
    %v1629 = vmul.f32 %v1575, %v1593
    %v1630 = vmul.f32 %v1576, %v1594
    %v1631 = vmul.f32 %v1577, %v1595
    %v1632 = vmul.f32 %v1578, %v1596
    %v1633 = vmul.f32 %v1579, %v1597
    %v1634 = vmul.f32 %v1580, %v1598
    %v1635 = vmul.f32 %v1581, %v1599
    %v1636 = vmul.f32 %v1582, %v1600
    %v1637 = vmul.f32 %v1583, %v1601
    %v1638 = vmul.f32 %v1584, %v1602
    %v1639 = vmul.f32 %v1585, %v1603
    %v1640 = vmul.f32 %v1586, %v1604
    %v1641 = vmul.f32 %v1587, %v1605
    %v1642 = vmul.f32 %v1588, %v1606
    %v1643 = vmul.f32 %v1589, %v1607
    %v1644 = vadd.f32 %v1536, %v1626
    %v1645 = vadd.f32 %v1537, %v1627
    %v1646 = vadd.f32 %v1538, %v1628
    %v1647 = vadd.f32 %v1539, %v1629
    %v1648 = vadd.f32 %v1540, %v1630
    %v1649 = vadd.f32 %v1541, %v1631
    %v1650 = vadd.f32 %v1542, %v1632
    %v1651 = vadd.f32 %v1543, %v1633
    %v1652 = vadd.f32 %v1544, %v1634
    %v1653 = vadd.f32 %v1545, %v1635
    %v1654 = vadd.f32 %v1546, %v1636
    %v1655 = vadd.f32 %v1547, %v1637
    %v1656 = vadd.f32 %v1548, %v1638
    %v1657 = vadd.f32 %v1549, %v1639
    %v1658 = vadd.f32 %v1550, %v1640
    %v1659 = vadd.f32 %v1551, %v1641
    %v1660 = vadd.f32 %v1552, %v1642
    %v1661 = vadd.f32 %v1553, %v1643
    %v1680 = vrot.slane %v1645, 7
    %v1681 = vsel %vm718, %v1680, %v1644
    %v1682 = vrot.slane %v1646, 6
    %v1683 = vsel %vm721, %v1682, %v1681
    %v1684 = vrot.slane %v1647, 5
    %v1685 = vsel %vm724, %v1684, %v1683
    %v1686 = vrot.slane %v1648, 4
    %v1687 = vsel %vm727, %v1686, %v1685
    %v1688 = vrot.slane %v1649, 3
    %v1689 = vsel %vm730, %v1688, %v1687
    %v1690 = vrot.slane %v1650, 2
    %v1691 = vsel %vm733, %v1690, %v1689
    %v1692 = vrot.slane %v1651, 1
    %v1693 = vsel %vm736, %v1692, %v1691
    %v1694 = vrot.slane %v1653, 7
    %v1695 = vsel %vm718, %v1694, %v1652
    %v1696 = vrot.slane %v1654, 6
    %v1697 = vsel %vm721, %v1696, %v1695
    %v1698 = vrot.slane %v1655, 5
    %v1699 = vsel %vm724, %v1698, %v1697
    %v1700 = vrot.slane %v1656, 4
    %v1701 = vsel %vm727, %v1700, %v1699
    %v1702 = vrot.slane %v1657, 3
    %v1703 = vsel %vm730, %v1702, %v1701
    %v1704 = vrot.slane %v1658, 2
    %v1705 = vsel %vm733, %v1704, %v1703
    %v1706 = vrot.slane %v1659, 1
    %v1707 = vsel %vm736, %v1706, %v1705
    %v1708 = vrot.slane %v1661, 7
    %v1709 = vsel %vm718, %v1708, %v1660
    %1710 = vrot.lane.b32.xlu0 %v1693, 1
    %v1711 = vpop.permute.xlu0 %1710
    %1712 = vrot.lane.b32.xlu0 %v1707, 1
    %v1713 = vpop.permute.xlu0 %1712
    %1714 = vrot.lane.b32.xlu0 %v1709, 1
    %v1715 = vpop.permute.xlu0 %1714
    %v1719 = vsel %vm763, 0.0, %v1711
    %v1720 = vsel %vm763, 0.0, %v1713
    %v1721 = vsel %vm763, 0.0, %v1715
    %v1725 = vrot.slane %v1719, 1
    %v1726 = vrot.slane %v1719, 2
    %v1727 = vrot.slane %v1719, 3
    %v1728 = vrot.slane %v1719, 4
    %v1729 = vrot.slane %v1719, 5
    %v1730 = vrot.slane %v1719, 6
    %v1731 = vrot.slane %v1719, 7
    %v1732 = vrot.slane %v1720, 1
    %v1733 = vrot.slane %v1720, 2
    %v1734 = vrot.slane %v1720, 3
    %v1735 = vrot.slane %v1720, 4
    %v1736 = vrot.slane %v1720, 5
    %v1737 = vrot.slane %v1720, 6
    %v1738 = vrot.slane %v1720, 7
    %v1739 = vrot.slane %v1721, 1
    %v1758 = vadd.f32 %v1644, %v1719
    %v1759 = vadd.f32 %v1645, %v1725
    %v1760 = vadd.f32 %v1646, %v1726
    %v1761 = vadd.f32 %v1647, %v1727
    %v1762 = vadd.f32 %v1648, %v1728
    %v1763 = vadd.f32 %v1649, %v1729
    %v1764 = vadd.f32 %v1650, %v1730
    %v1765 = vadd.f32 %v1651, %v1731
    %v1766 = vadd.f32 %v1652, %v1720
    %v1767 = vadd.f32 %v1653, %v1732
    %v1768 = vadd.f32 %v1654, %v1733
    %v1769 = vadd.f32 %v1655, %v1734
    %v1770 = vadd.f32 %v1656, %v1735
    %v1771 = vadd.f32 %v1657, %v1736
    %v1772 = vadd.f32 %v1658, %v1737
    %v1773 = vadd.f32 %v1659, %v1738
    %v1774 = vadd.f32 %v1660, %v1721
    %v1775 = vadd.f32 %v1661, %v1739
    %v1794 = vrot.slane %v1759, 7
    %v1795 = vsel %vm718, %v1794, %v1758
    %v1796 = vrot.slane %v1760, 6
    %v1797 = vsel %vm721, %v1796, %v1795
    %v1798 = vrot.slane %v1761, 5
    %v1799 = vsel %vm724, %v1798, %v1797
    %v1800 = vrot.slane %v1762, 4
    %v1801 = vsel %vm727, %v1800, %v1799
    %v1802 = vrot.slane %v1763, 3
    %v1803 = vsel %vm730, %v1802, %v1801
    %v1804 = vrot.slane %v1764, 2
    %v1805 = vsel %vm733, %v1804, %v1803
    %v1806 = vrot.slane %v1765, 1
    %v1807 = vsel %vm736, %v1806, %v1805
    %v1808 = vrot.slane %v1767, 7
    %v1809 = vsel %vm718, %v1808, %v1766
    %v1810 = vrot.slane %v1768, 6
    %v1811 = vsel %vm721, %v1810, %v1809
    %v1812 = vrot.slane %v1769, 5
    %v1813 = vsel %vm724, %v1812, %v1811
    %v1814 = vrot.slane %v1770, 4
    %v1815 = vsel %vm727, %v1814, %v1813
    %v1816 = vrot.slane %v1771, 3
    %v1817 = vsel %vm730, %v1816, %v1815
    %v1818 = vrot.slane %v1772, 2
    %v1819 = vsel %vm733, %v1818, %v1817
    %v1820 = vrot.slane %v1773, 1
    %v1821 = vsel %vm736, %v1820, %v1819
    %v1822 = vrot.slane %v1775, 7
    %v1823 = vsel %vm718, %v1822, %v1774
    %1824 = vrot.lane.b32.xlu0 %v1807, 2
    %v1825 = vpop.permute.xlu0 %1824
    %1826 = vrot.lane.b32.xlu0 %v1821, 2
    %v1827 = vpop.permute.xlu0 %1826
    %1828 = vrot.lane.b32.xlu0 %v1823, 2
    %v1829 = vpop.permute.xlu0 %1828
    %v1833 = vsel %vm878, 0.0, %v1825
    %v1834 = vsel %vm878, 0.0, %v1827
    %v1835 = vsel %vm878, 0.0, %v1829
    %v1839 = vrot.slane %v1833, 1
    %v1840 = vrot.slane %v1833, 2
    %v1841 = vrot.slane %v1833, 3
    %v1842 = vrot.slane %v1833, 4
    %v1843 = vrot.slane %v1833, 5
    %v1844 = vrot.slane %v1833, 6
    %v1845 = vrot.slane %v1833, 7
    %v1846 = vrot.slane %v1834, 1
    %v1847 = vrot.slane %v1834, 2
    %v1848 = vrot.slane %v1834, 3
    %v1849 = vrot.slane %v1834, 4
    %v1850 = vrot.slane %v1834, 5
    %v1851 = vrot.slane %v1834, 6
    %v1852 = vrot.slane %v1834, 7
    %v1853 = vrot.slane %v1835, 1
    %v1872 = vadd.f32 %v1758, %v1833
    %v1873 = vadd.f32 %v1759, %v1839
    %v1874 = vadd.f32 %v1760, %v1840
    %v1875 = vadd.f32 %v1761, %v1841
    %v1876 = vadd.f32 %v1762, %v1842
    %v1877 = vadd.f32 %v1763, %v1843
    %v1878 = vadd.f32 %v1764, %v1844
    %v1879 = vadd.f32 %v1765, %v1845
    %v1880 = vadd.f32 %v1766, %v1834
    %v1881 = vadd.f32 %v1767, %v1846
    %v1882 = vadd.f32 %v1768, %v1847
    %v1883 = vadd.f32 %v1769, %v1848
    %v1884 = vadd.f32 %v1770, %v1849
    %v1885 = vadd.f32 %v1771, %v1850
    %v1886 = vadd.f32 %v1772, %v1851
    %v1887 = vadd.f32 %v1773, %v1852
    %v1888 = vadd.f32 %v1774, %v1835
    %v1889 = vadd.f32 %v1775, %v1853
    %v1908 = vrot.slane %v1873, 7
    %v1909 = vsel %vm718, %v1908, %v1872
    %v1910 = vrot.slane %v1874, 6
    %v1911 = vsel %vm721, %v1910, %v1909
    %v1912 = vrot.slane %v1875, 5
    %v1913 = vsel %vm724, %v1912, %v1911
    %v1914 = vrot.slane %v1876, 4
    %v1915 = vsel %vm727, %v1914, %v1913
    %v1916 = vrot.slane %v1877, 3
    %v1917 = vsel %vm730, %v1916, %v1915
    %v1918 = vrot.slane %v1878, 2
    %v1919 = vsel %vm733, %v1918, %v1917
    %v1920 = vrot.slane %v1879, 1
    %v1921 = vsel %vm736, %v1920, %v1919
    %v1922 = vrot.slane %v1881, 7
    %v1923 = vsel %vm718, %v1922, %v1880
    %v1924 = vrot.slane %v1882, 6
    %v1925 = vsel %vm721, %v1924, %v1923
    %v1926 = vrot.slane %v1883, 5
    %v1927 = vsel %vm724, %v1926, %v1925
    %v1928 = vrot.slane %v1884, 4
    %v1929 = vsel %vm727, %v1928, %v1927
    %v1930 = vrot.slane %v1885, 3
    %v1931 = vsel %vm730, %v1930, %v1929
    %v1932 = vrot.slane %v1886, 2
    %v1933 = vsel %vm733, %v1932, %v1931
    %v1934 = vrot.slane %v1887, 1
    %v1935 = vsel %vm736, %v1934, %v1933
    %v1936 = vrot.slane %v1889, 7
    %v1937 = vsel %vm718, %v1936, %v1888
    %1938 = vrot.lane.b32.xlu0 %v1921, 4
    %v1939 = vpop.permute.xlu0 %1938
    %1940 = vrot.lane.b32.xlu0 %v1935, 4
    %v1941 = vpop.permute.xlu0 %1940
    %1942 = vrot.lane.b32.xlu0 %v1937, 4
    %v1943 = vpop.permute.xlu0 %1942
    %v1947 = vsel %vm115, 0.0, %v1939
    %v1948 = vsel %vm115, 0.0, %v1941
    %v1949 = vsel %vm115, 0.0, %v1943
    %v1953 = vrot.slane %v1947, 1
    %v1954 = vrot.slane %v1947, 2
    %v1955 = vrot.slane %v1947, 3
    %v1956 = vrot.slane %v1947, 4
    %v1957 = vrot.slane %v1947, 5
    %v1958 = vrot.slane %v1947, 6
    %v1959 = vrot.slane %v1947, 7
    %v1960 = vrot.slane %v1948, 1
    %v1961 = vrot.slane %v1948, 2
    %v1962 = vrot.slane %v1948, 3
    %v1963 = vrot.slane %v1948, 4
    %v1964 = vrot.slane %v1948, 5
    %v1965 = vrot.slane %v1948, 6
    %v1966 = vrot.slane %v1948, 7
    %v1967 = vrot.slane %v1949, 1
    %v1986 = vadd.f32 %v1872, %v1947
    %v1987 = vadd.f32 %v1873, %v1953
    %v1988 = vadd.f32 %v1874, %v1954
    %v1989 = vadd.f32 %v1875, %v1955
    %v1990 = vadd.f32 %v1876, %v1956
    %v1991 = vadd.f32 %v1877, %v1957
    %v1992 = vadd.f32 %v1878, %v1958
    %v1993 = vadd.f32 %v1879, %v1959
    %v1994 = vadd.f32 %v1880, %v1948
    %v1995 = vadd.f32 %v1881, %v1960
    %v1996 = vadd.f32 %v1882, %v1961
    %v1997 = vadd.f32 %v1883, %v1962
    %v1998 = vadd.f32 %v1884, %v1963
    %v1999 = vadd.f32 %v1885, %v1964
    %v2000 = vadd.f32 %v1886, %v1965
    %v2001 = vadd.f32 %v1887, %v1966
    %v2002 = vadd.f32 %v1888, %v1949
    %v2003 = vadd.f32 %v1889, %v1967
    %v2004 = vadd.f32 %v1986, 1.0
    %v2005 = vadd.f32 %v1987, 1.0
    %v2006 = vadd.f32 %v1988, 1.0
    %v2007 = vadd.f32 %v1989, 1.0
    %v2008 = vadd.f32 %v1990, 1.0
    %v2009 = vadd.f32 %v1991, 1.0
    %v2010 = vadd.f32 %v1992, 1.0
    %v2011 = vadd.f32 %v1993, 1.0
    %v2012 = vadd.f32 %v1994, 1.0
    %v2013 = vadd.f32 %v1995, 1.0
    %v2014 = vadd.f32 %v1996, 1.0
    %v2015 = vadd.f32 %v1997, 1.0
    %v2016 = vadd.f32 %v1998, 1.0
    %v2017 = vadd.f32 %v1999, 1.0
    %v2018 = vadd.f32 %v2000, 1.0
    %v2019 = vadd.f32 %v2001, 1.0
    %v2020 = vadd.f32 %v2002, 1.0
    %v2021 = vadd.f32 %v2003, 1.0
    %v2022 = vsub.f32 %v1986, %v1644
    %v2023 = vsub.f32 %v1987, %v1645
    %v2024 = vsub.f32 %v1988, %v1646
    %v2025 = vsub.f32 %v1989, %v1647
    %v2026 = vsub.f32 %v1990, %v1648
    %v2027 = vsub.f32 %v1991, %v1649
    %v2028 = vsub.f32 %v1992, %v1650
    %v2029 = vsub.f32 %v1993, %v1651
    %v2030 = vsub.f32 %v1994, %v1652
    %v2031 = vsub.f32 %v1995, %v1653
    %v2032 = vsub.f32 %v1996, %v1654
    %v2033 = vsub.f32 %v1997, %v1655
    %v2034 = vsub.f32 %v1998, %v1656
    %v2035 = vsub.f32 %v1999, %v1657
    %v2036 = vsub.f32 %v2000, %v1658
    %v2037 = vsub.f32 %v2001, %v1659
    %v2038 = vsub.f32 %v2002, %v1660
    %v2039 = vsub.f32 %v2003, %v1661
    %v2040 = vadd.f32 %v2022, 1.0
    %v2041 = vadd.f32 %v2023, 1.0
    %v2042 = vadd.f32 %v2024, 1.0
    %v2043 = vadd.f32 %v2025, 1.0
    %v2044 = vadd.f32 %v2026, 1.0
    %v2045 = vadd.f32 %v2027, 1.0
    %v2046 = vadd.f32 %v2028, 1.0
    %v2047 = vadd.f32 %v2029, 1.0
    %v2048 = vadd.f32 %v2030, 1.0
    %v2049 = vadd.f32 %v2031, 1.0
    %v2050 = vadd.f32 %v2032, 1.0
    %v2051 = vadd.f32 %v2033, 1.0
    %v2052 = vadd.f32 %v2034, 1.0
    %v2053 = vadd.f32 %v2035, 1.0
    %v2054 = vadd.f32 %v2036, 1.0
    %v2055 = vadd.f32 %v2037, 1.0
    %v2056 = vadd.f32 %v2038, 1.0
    %v2057 = vadd.f32 %v2039, 1.0
    %v2058 = vrot.slane %v663, 3
    %v2059 = vrot.slane %v664, 3
    %v2060 = vrot.slane %v665, 3
    %v2061 = vrot.slane %v666, 3
    %v2062 = vrot.slane %v667, 3
    %v2063 = vrot.slane %v668, 3
    %v2064 = vrot.slane %v669, 3
    %v2065 = vrot.slane %v670, 3
    %v2066 = vrot.slane %v671, 3
    %v2067 = vrot.slane %v672, 3
    %v2068 = vrot.slane %v673, 3
    %v2069 = vrot.slane %v674, 3
    %v2070 = vrot.slane %v675, 3
    %v2071 = vrot.slane %v676, 3
    %v2072 = vrot.slane %v677, 3
    %v2073 = vrot.slane %v678, 3
    %v2074 = vrot.slane %v679, 3
    %v2075 = vrot.slane %v680, 3
    %v2094 = vmul.f32 %v2040, %v2058
    %v2095 = vmul.f32 %v2041, %v2059
    %v2096 = vmul.f32 %v2042, %v2060
    %v2097 = vmul.f32 %v2043, %v2061
    %v2098 = vmul.f32 %v2044, %v2062
    %v2099 = vmul.f32 %v2045, %v2063
    %v2100 = vmul.f32 %v2046, %v2064
    %v2101 = vmul.f32 %v2047, %v2065
    %v2102 = vmul.f32 %v2048, %v2066
    %v2103 = vmul.f32 %v2049, %v2067
    %v2104 = vmul.f32 %v2050, %v2068
    %v2105 = vmul.f32 %v2051, %v2069
    %v2106 = vmul.f32 %v2052, %v2070
    %v2107 = vmul.f32 %v2053, %v2071
    %v2108 = vmul.f32 %v2054, %v2072
    %v2109 = vmul.f32 %v2055, %v2073
    %v2110 = vmul.f32 %v2056, %v2074
    %v2111 = vmul.f32 %v2057, %v2075
    %v2112 = vadd.f32 %v2004, %v2094
    %v2113 = vadd.f32 %v2005, %v2095
    %v2114 = vadd.f32 %v2006, %v2096
    %v2115 = vadd.f32 %v2007, %v2097
    %v2116 = vadd.f32 %v2008, %v2098
    %v2117 = vadd.f32 %v2009, %v2099
    %v2118 = vadd.f32 %v2010, %v2100
    %v2119 = vadd.f32 %v2011, %v2101
    %v2120 = vadd.f32 %v2012, %v2102
    %v2121 = vadd.f32 %v2013, %v2103
    %v2122 = vadd.f32 %v2014, %v2104
    %v2123 = vadd.f32 %v2015, %v2105
    %v2124 = vadd.f32 %v2016, %v2106
    %v2125 = vadd.f32 %v2017, %v2107
    %v2126 = vadd.f32 %v2018, %v2108
    %v2127 = vadd.f32 %v2019, %v2109
    %v2128 = vadd.f32 %v2020, %v2110
    %v2129 = vadd.f32 %v2021, %v2111
    %v2148 = vrot.slane %v2113, 7
    %v2149 = vsel %vm718, %v2148, %v2112
    %v2150 = vrot.slane %v2114, 6
    %v2151 = vsel %vm721, %v2150, %v2149
    %v2152 = vrot.slane %v2115, 5
    %v2153 = vsel %vm724, %v2152, %v2151
    %v2154 = vrot.slane %v2116, 4
    %v2155 = vsel %vm727, %v2154, %v2153
    %v2156 = vrot.slane %v2117, 3
    %v2157 = vsel %vm730, %v2156, %v2155
    %v2158 = vrot.slane %v2118, 2
    %v2159 = vsel %vm733, %v2158, %v2157
    %v2160 = vrot.slane %v2119, 1
    %v2161 = vsel %vm736, %v2160, %v2159
    %v2162 = vrot.slane %v2121, 7
    %v2163 = vsel %vm718, %v2162, %v2120
    %v2164 = vrot.slane %v2122, 6
    %v2165 = vsel %vm721, %v2164, %v2163
    %v2166 = vrot.slane %v2123, 5
    %v2167 = vsel %vm724, %v2166, %v2165
    %v2168 = vrot.slane %v2124, 4
    %v2169 = vsel %vm727, %v2168, %v2167
    %v2170 = vrot.slane %v2125, 3
    %v2171 = vsel %vm730, %v2170, %v2169
    %v2172 = vrot.slane %v2126, 2
    %v2173 = vsel %vm733, %v2172, %v2171
    %v2174 = vrot.slane %v2127, 1
    %v2175 = vsel %vm736, %v2174, %v2173
    %v2176 = vrot.slane %v2129, 7
    %v2177 = vsel %vm718, %v2176, %v2128
    %2178 = vrot.lane.b32.xlu0 %v2161, 1
    %v2179 = vpop.permute.xlu0 %2178
    %2180 = vrot.lane.b32.xlu0 %v2175, 1
    %v2181 = vpop.permute.xlu0 %2180
    %2182 = vrot.lane.b32.xlu0 %v2177, 1
    %v2183 = vpop.permute.xlu0 %2182
    %v2187 = vsel %vm763, 0.0, %v2179
    %v2188 = vsel %vm763, 0.0, %v2181
    %v2189 = vsel %vm763, 0.0, %v2183
    %v2193 = vrot.slane %v2187, 1
    %v2194 = vrot.slane %v2187, 2
    %v2195 = vrot.slane %v2187, 3
    %v2196 = vrot.slane %v2187, 4
    %v2197 = vrot.slane %v2187, 5
    %v2198 = vrot.slane %v2187, 6
    %v2199 = vrot.slane %v2187, 7
    %v2200 = vrot.slane %v2188, 1
    %v2201 = vrot.slane %v2188, 2
    %v2202 = vrot.slane %v2188, 3
    %v2203 = vrot.slane %v2188, 4
    %v2204 = vrot.slane %v2188, 5
    %v2205 = vrot.slane %v2188, 6
    %v2206 = vrot.slane %v2188, 7
    %v2207 = vrot.slane %v2189, 1
    %v2226 = vadd.f32 %v2112, %v2187
    %v2227 = vadd.f32 %v2113, %v2193
    %v2228 = vadd.f32 %v2114, %v2194
    %v2229 = vadd.f32 %v2115, %v2195
    %v2230 = vadd.f32 %v2116, %v2196
    %v2231 = vadd.f32 %v2117, %v2197
    %v2232 = vadd.f32 %v2118, %v2198
    %v2233 = vadd.f32 %v2119, %v2199
    %v2234 = vadd.f32 %v2120, %v2188
    %v2235 = vadd.f32 %v2121, %v2200
    %v2236 = vadd.f32 %v2122, %v2201
    %v2237 = vadd.f32 %v2123, %v2202
    %v2238 = vadd.f32 %v2124, %v2203
    %v2239 = vadd.f32 %v2125, %v2204
    %v2240 = vadd.f32 %v2126, %v2205
    %v2241 = vadd.f32 %v2127, %v2206
    %v2242 = vadd.f32 %v2128, %v2189
    %v2243 = vadd.f32 %v2129, %v2207
    %v2262 = vrot.slane %v2227, 7
    %v2263 = vsel %vm718, %v2262, %v2226
    %v2264 = vrot.slane %v2228, 6
    %v2265 = vsel %vm721, %v2264, %v2263
    %v2266 = vrot.slane %v2229, 5
    %v2267 = vsel %vm724, %v2266, %v2265
    %v2268 = vrot.slane %v2230, 4
    %v2269 = vsel %vm727, %v2268, %v2267
    %v2270 = vrot.slane %v2231, 3
    %v2271 = vsel %vm730, %v2270, %v2269
    %v2272 = vrot.slane %v2232, 2
    %v2273 = vsel %vm733, %v2272, %v2271
    %v2274 = vrot.slane %v2233, 1
    %v2275 = vsel %vm736, %v2274, %v2273
    %v2276 = vrot.slane %v2235, 7
    %v2277 = vsel %vm718, %v2276, %v2234
    %v2278 = vrot.slane %v2236, 6
    %v2279 = vsel %vm721, %v2278, %v2277
    %v2280 = vrot.slane %v2237, 5
    %v2281 = vsel %vm724, %v2280, %v2279
    %v2282 = vrot.slane %v2238, 4
    %v2283 = vsel %vm727, %v2282, %v2281
    %v2284 = vrot.slane %v2239, 3
    %v2285 = vsel %vm730, %v2284, %v2283
    %v2286 = vrot.slane %v2240, 2
    %v2287 = vsel %vm733, %v2286, %v2285
    %v2288 = vrot.slane %v2241, 1
    %v2289 = vsel %vm736, %v2288, %v2287
    %v2290 = vrot.slane %v2243, 7
    %v2291 = vsel %vm718, %v2290, %v2242
    %2292 = vrot.lane.b32.xlu0 %v2275, 2
    %v2293 = vpop.permute.xlu0 %2292
    %2294 = vrot.lane.b32.xlu0 %v2289, 2
    %v2295 = vpop.permute.xlu0 %2294
    %2296 = vrot.lane.b32.xlu0 %v2291, 2
    %v2297 = vpop.permute.xlu0 %2296
    %v2301 = vsel %vm878, 0.0, %v2293
    %v2302 = vsel %vm878, 0.0, %v2295
    %v2303 = vsel %vm878, 0.0, %v2297
    %v2307 = vrot.slane %v2301, 1
    %v2308 = vrot.slane %v2301, 2
    %v2309 = vrot.slane %v2301, 3
    %v2310 = vrot.slane %v2301, 4
    %v2311 = vrot.slane %v2301, 5
    %v2312 = vrot.slane %v2301, 6
    %v2313 = vrot.slane %v2301, 7
    %v2314 = vrot.slane %v2302, 1
    %v2315 = vrot.slane %v2302, 2
    %v2316 = vrot.slane %v2302, 3
    %v2317 = vrot.slane %v2302, 4
    %v2318 = vrot.slane %v2302, 5
    %v2319 = vrot.slane %v2302, 6
    %v2320 = vrot.slane %v2302, 7
    %v2321 = vrot.slane %v2303, 1
    %v2340 = vadd.f32 %v2226, %v2301
    %v2341 = vadd.f32 %v2227, %v2307
    %v2342 = vadd.f32 %v2228, %v2308
    %v2343 = vadd.f32 %v2229, %v2309
    %v2344 = vadd.f32 %v2230, %v2310
    %v2345 = vadd.f32 %v2231, %v2311
    %v2346 = vadd.f32 %v2232, %v2312
    %v2347 = vadd.f32 %v2233, %v2313
    %v2348 = vadd.f32 %v2234, %v2302
    %v2349 = vadd.f32 %v2235, %v2314
    %v2350 = vadd.f32 %v2236, %v2315
    %v2351 = vadd.f32 %v2237, %v2316
    %v2352 = vadd.f32 %v2238, %v2317
    %v2353 = vadd.f32 %v2239, %v2318
    %v2354 = vadd.f32 %v2240, %v2319
    %v2355 = vadd.f32 %v2241, %v2320
    %v2356 = vadd.f32 %v2242, %v2303
    %v2357 = vadd.f32 %v2243, %v2321
    %v2376 = vrot.slane %v2341, 7
    %v2377 = vsel %vm718, %v2376, %v2340
    %v2378 = vrot.slane %v2342, 6
    %v2379 = vsel %vm721, %v2378, %v2377
    %v2380 = vrot.slane %v2343, 5
    %v2381 = vsel %vm724, %v2380, %v2379
    %v2382 = vrot.slane %v2344, 4
    %v2383 = vsel %vm727, %v2382, %v2381
    %v2384 = vrot.slane %v2345, 3
    %v2385 = vsel %vm730, %v2384, %v2383
    %v2386 = vrot.slane %v2346, 2
    %v2387 = vsel %vm733, %v2386, %v2385
    %v2388 = vrot.slane %v2347, 1
    %v2389 = vsel %vm736, %v2388, %v2387
    %v2390 = vrot.slane %v2349, 7
    %v2391 = vsel %vm718, %v2390, %v2348
    %v2392 = vrot.slane %v2350, 6
    %v2393 = vsel %vm721, %v2392, %v2391
    %v2394 = vrot.slane %v2351, 5
    %v2395 = vsel %vm724, %v2394, %v2393
    %v2396 = vrot.slane %v2352, 4
    %v2397 = vsel %vm727, %v2396, %v2395
    %v2398 = vrot.slane %v2353, 3
    %v2399 = vsel %vm730, %v2398, %v2397
    %v2400 = vrot.slane %v2354, 2
    %v2401 = vsel %vm733, %v2400, %v2399
    %v2402 = vrot.slane %v2355, 1
    %v2403 = vsel %vm736, %v2402, %v2401
    %v2404 = vrot.slane %v2357, 7
    %v2405 = vsel %vm718, %v2404, %v2356
    %2406 = vrot.lane.b32.xlu0 %v2389, 4
    %v2407 = vpop.permute.xlu0 %2406
    %2408 = vrot.lane.b32.xlu0 %v2403, 4
    %v2409 = vpop.permute.xlu0 %2408
    %2410 = vrot.lane.b32.xlu0 %v2405, 4
    %v2411 = vpop.permute.xlu0 %2410
    %v2415 = vsel %vm115, 0.0, %v2407
    %v2416 = vsel %vm115, 0.0, %v2409
    %v2417 = vsel %vm115, 0.0, %v2411
    %v2421 = vrot.slane %v2415, 1
    %v2422 = vrot.slane %v2415, 2
    %v2423 = vrot.slane %v2415, 3
    %v2424 = vrot.slane %v2415, 4
    %v2425 = vrot.slane %v2415, 5
    %v2426 = vrot.slane %v2415, 6
    %v2427 = vrot.slane %v2415, 7
    %v2428 = vrot.slane %v2416, 1
    %v2429 = vrot.slane %v2416, 2
    %v2430 = vrot.slane %v2416, 3
    %v2431 = vrot.slane %v2416, 4
    %v2432 = vrot.slane %v2416, 5
    %v2433 = vrot.slane %v2416, 6
    %v2434 = vrot.slane %v2416, 7
    %v2435 = vrot.slane %v2417, 1
    %v2454 = vadd.f32 %v2340, %v2415
    %v2455 = vadd.f32 %v2341, %v2421
    %v2456 = vadd.f32 %v2342, %v2422
    %v2457 = vadd.f32 %v2343, %v2423
    %v2458 = vadd.f32 %v2344, %v2424
    %v2459 = vadd.f32 %v2345, %v2425
    %v2460 = vadd.f32 %v2346, %v2426
    %v2461 = vadd.f32 %v2347, %v2427
    %v2462 = vadd.f32 %v2348, %v2416
    %v2463 = vadd.f32 %v2349, %v2428
    %v2464 = vadd.f32 %v2350, %v2429
    %v2465 = vadd.f32 %v2351, %v2430
    %v2466 = vadd.f32 %v2352, %v2431
    %v2467 = vadd.f32 %v2353, %v2432
    %v2468 = vadd.f32 %v2354, %v2433
    %v2469 = vadd.f32 %v2355, %v2434
    %v2470 = vadd.f32 %v2356, %v2417
    %v2471 = vadd.f32 %v2357, %v2435
    %v2472 = vadd.f32 %v2454, 1.0
    %v2473 = vadd.f32 %v2455, 1.0
    %v2474 = vadd.f32 %v2456, 1.0
    %v2475 = vadd.f32 %v2457, 1.0
    %v2476 = vadd.f32 %v2458, 1.0
    %v2477 = vadd.f32 %v2459, 1.0
    %v2478 = vadd.f32 %v2460, 1.0
    %v2479 = vadd.f32 %v2461, 1.0
    %v2480 = vadd.f32 %v2462, 1.0
    %v2481 = vadd.f32 %v2463, 1.0
    %v2482 = vadd.f32 %v2464, 1.0
    %v2483 = vadd.f32 %v2465, 1.0
    %v2484 = vadd.f32 %v2466, 1.0
    %v2485 = vadd.f32 %v2467, 1.0
    %v2486 = vadd.f32 %v2468, 1.0
    %v2487 = vadd.f32 %v2469, 1.0
    %v2488 = vadd.f32 %v2470, 1.0
    %v2489 = vadd.f32 %v2471, 1.0
    %v2490 = vsub.f32 %v2454, %v2112
    %v2491 = vsub.f32 %v2455, %v2113
    %v2492 = vsub.f32 %v2456, %v2114
    %v2493 = vsub.f32 %v2457, %v2115
    %v2494 = vsub.f32 %v2458, %v2116
    %v2495 = vsub.f32 %v2459, %v2117
    %v2496 = vsub.f32 %v2460, %v2118
    %v2497 = vsub.f32 %v2461, %v2119
    %v2498 = vsub.f32 %v2462, %v2120
    %v2499 = vsub.f32 %v2463, %v2121
    %v2500 = vsub.f32 %v2464, %v2122
    %v2501 = vsub.f32 %v2465, %v2123
    %v2502 = vsub.f32 %v2466, %v2124
    %v2503 = vsub.f32 %v2467, %v2125
    %v2504 = vsub.f32 %v2468, %v2126
    %v2505 = vsub.f32 %v2469, %v2127
    %v2506 = vsub.f32 %v2470, %v2128
    %v2507 = vsub.f32 %v2471, %v2129
    %v2508 = vadd.f32 %v2490, 1.0
    %v2509 = vadd.f32 %v2491, 1.0
    %v2510 = vadd.f32 %v2492, 1.0
    %v2511 = vadd.f32 %v2493, 1.0
    %v2512 = vadd.f32 %v2494, 1.0
    %v2513 = vadd.f32 %v2495, 1.0
    %v2514 = vadd.f32 %v2496, 1.0
    %v2515 = vadd.f32 %v2497, 1.0
    %v2516 = vadd.f32 %v2498, 1.0
    %v2517 = vadd.f32 %v2499, 1.0
    %v2518 = vadd.f32 %v2500, 1.0
    %v2519 = vadd.f32 %v2501, 1.0
    %v2520 = vadd.f32 %v2502, 1.0
    %v2521 = vadd.f32 %v2503, 1.0
    %v2522 = vadd.f32 %v2504, 1.0
    %v2523 = vadd.f32 %v2505, 1.0
    %v2524 = vadd.f32 %v2506, 1.0
    %v2525 = vadd.f32 %v2507, 1.0
    %v2526 = vrot.slane %v663, 4
    %v2527 = vrot.slane %v664, 4
    %v2528 = vrot.slane %v665, 4
    %v2529 = vrot.slane %v666, 4
    %v2530 = vrot.slane %v667, 4
    %v2531 = vrot.slane %v668, 4
    %v2532 = vrot.slane %v669, 4
    %v2533 = vrot.slane %v670, 4
    %v2534 = vrot.slane %v671, 4
    %v2535 = vrot.slane %v672, 4
    %v2536 = vrot.slane %v673, 4
    %v2537 = vrot.slane %v674, 4
    %v2538 = vrot.slane %v675, 4
    %v2539 = vrot.slane %v676, 4
    %v2540 = vrot.slane %v677, 4
    %v2541 = vrot.slane %v678, 4
    %v2542 = vrot.slane %v679, 4
    %v2543 = vrot.slane %v680, 4
    %v2562 = vmul.f32 %v2508, %v2526
    %v2563 = vmul.f32 %v2509, %v2527
    %v2564 = vmul.f32 %v2510, %v2528
    %v2565 = vmul.f32 %v2511, %v2529
    %v2566 = vmul.f32 %v2512, %v2530
    %v2567 = vmul.f32 %v2513, %v2531
    %v2568 = vmul.f32 %v2514, %v2532
    %v2569 = vmul.f32 %v2515, %v2533
    %v2570 = vmul.f32 %v2516, %v2534
    %v2571 = vmul.f32 %v2517, %v2535
    %v2572 = vmul.f32 %v2518, %v2536
    %v2573 = vmul.f32 %v2519, %v2537
    %v2574 = vmul.f32 %v2520, %v2538
    %v2575 = vmul.f32 %v2521, %v2539
    %v2576 = vmul.f32 %v2522, %v2540
    %v2577 = vmul.f32 %v2523, %v2541
    %v2578 = vmul.f32 %v2524, %v2542
    %v2579 = vmul.f32 %v2525, %v2543
    %v2580 = vadd.f32 %v2472, %v2562
    %v2581 = vadd.f32 %v2473, %v2563
    %v2582 = vadd.f32 %v2474, %v2564
    %v2583 = vadd.f32 %v2475, %v2565
    %v2584 = vadd.f32 %v2476, %v2566
    %v2585 = vadd.f32 %v2477, %v2567
    %v2586 = vadd.f32 %v2478, %v2568
    %v2587 = vadd.f32 %v2479, %v2569
    %v2588 = vadd.f32 %v2480, %v2570
    %v2589 = vadd.f32 %v2481, %v2571
    %v2590 = vadd.f32 %v2482, %v2572
    %v2591 = vadd.f32 %v2483, %v2573
    %v2592 = vadd.f32 %v2484, %v2574
    %v2593 = vadd.f32 %v2485, %v2575
    %v2594 = vadd.f32 %v2486, %v2576
    %v2595 = vadd.f32 %v2487, %v2577
    %v2596 = vadd.f32 %v2488, %v2578
    %v2597 = vadd.f32 %v2489, %v2579
    %v2616 = vrot.slane %v2581, 7
    %v2617 = vsel %vm718, %v2616, %v2580
    %v2618 = vrot.slane %v2582, 6
    %v2619 = vsel %vm721, %v2618, %v2617
    %v2620 = vrot.slane %v2583, 5
    %v2621 = vsel %vm724, %v2620, %v2619
    %v2622 = vrot.slane %v2584, 4
    %v2623 = vsel %vm727, %v2622, %v2621
    %v2624 = vrot.slane %v2585, 3
    %v2625 = vsel %vm730, %v2624, %v2623
    %v2626 = vrot.slane %v2586, 2
    %v2627 = vsel %vm733, %v2626, %v2625
    %v2628 = vrot.slane %v2587, 1
    %v2629 = vsel %vm736, %v2628, %v2627
    %v2630 = vrot.slane %v2589, 7
    %v2631 = vsel %vm718, %v2630, %v2588
    %v2632 = vrot.slane %v2590, 6
    %v2633 = vsel %vm721, %v2632, %v2631
    %v2634 = vrot.slane %v2591, 5
    %v2635 = vsel %vm724, %v2634, %v2633
    %v2636 = vrot.slane %v2592, 4
    %v2637 = vsel %vm727, %v2636, %v2635
    %v2638 = vrot.slane %v2593, 3
    %v2639 = vsel %vm730, %v2638, %v2637
    %v2640 = vrot.slane %v2594, 2
    %v2641 = vsel %vm733, %v2640, %v2639
    %v2642 = vrot.slane %v2595, 1
    %v2643 = vsel %vm736, %v2642, %v2641
    %v2644 = vrot.slane %v2597, 7
    %v2645 = vsel %vm718, %v2644, %v2596
    %2646 = vrot.lane.b32.xlu0 %v2629, 1
    %v2647 = vpop.permute.xlu0 %2646
    %2648 = vrot.lane.b32.xlu0 %v2643, 1
    %v2649 = vpop.permute.xlu0 %2648
    %2650 = vrot.lane.b32.xlu0 %v2645, 1
    %v2651 = vpop.permute.xlu0 %2650
    %v2655 = vsel %vm763, 0.0, %v2647
    %v2656 = vsel %vm763, 0.0, %v2649
    %v2657 = vsel %vm763, 0.0, %v2651
    %v2661 = vrot.slane %v2655, 1
    %v2662 = vrot.slane %v2655, 2
    %v2663 = vrot.slane %v2655, 3
    %v2664 = vrot.slane %v2655, 4
    %v2665 = vrot.slane %v2655, 5
    %v2666 = vrot.slane %v2655, 6
    %v2667 = vrot.slane %v2655, 7
    %v2668 = vrot.slane %v2656, 1
    %v2669 = vrot.slane %v2656, 2
    %v2670 = vrot.slane %v2656, 3
    %v2671 = vrot.slane %v2656, 4
    %v2672 = vrot.slane %v2656, 5
    %v2673 = vrot.slane %v2656, 6
    %v2674 = vrot.slane %v2656, 7
    %v2675 = vrot.slane %v2657, 1
    %v2694 = vadd.f32 %v2580, %v2655
    %v2695 = vadd.f32 %v2581, %v2661
    %v2696 = vadd.f32 %v2582, %v2662
    %v2697 = vadd.f32 %v2583, %v2663
    %v2698 = vadd.f32 %v2584, %v2664
    %v2699 = vadd.f32 %v2585, %v2665
    %v2700 = vadd.f32 %v2586, %v2666
    %v2701 = vadd.f32 %v2587, %v2667
    %v2702 = vadd.f32 %v2588, %v2656
    %v2703 = vadd.f32 %v2589, %v2668
    %v2704 = vadd.f32 %v2590, %v2669
    %v2705 = vadd.f32 %v2591, %v2670
    %v2706 = vadd.f32 %v2592, %v2671
    %v2707 = vadd.f32 %v2593, %v2672
    %v2708 = vadd.f32 %v2594, %v2673
    %v2709 = vadd.f32 %v2595, %v2674
    %v2710 = vadd.f32 %v2596, %v2657
    %v2711 = vadd.f32 %v2597, %v2675
    %v2730 = vrot.slane %v2695, 7
    %v2731 = vsel %vm718, %v2730, %v2694
    %v2732 = vrot.slane %v2696, 6
    %v2733 = vsel %vm721, %v2732, %v2731
    %v2734 = vrot.slane %v2697, 5
    %v2735 = vsel %vm724, %v2734, %v2733
    %v2736 = vrot.slane %v2698, 4
    %v2737 = vsel %vm727, %v2736, %v2735
    %v2738 = vrot.slane %v2699, 3
    %v2739 = vsel %vm730, %v2738, %v2737
    %v2740 = vrot.slane %v2700, 2
    %v2741 = vsel %vm733, %v2740, %v2739
    %v2742 = vrot.slane %v2701, 1
    %v2743 = vsel %vm736, %v2742, %v2741
    %v2744 = vrot.slane %v2703, 7
    %v2745 = vsel %vm718, %v2744, %v2702
    %v2746 = vrot.slane %v2704, 6
    %v2747 = vsel %vm721, %v2746, %v2745
    %v2748 = vrot.slane %v2705, 5
    %v2749 = vsel %vm724, %v2748, %v2747
    %v2750 = vrot.slane %v2706, 4
    %v2751 = vsel %vm727, %v2750, %v2749
    %v2752 = vrot.slane %v2707, 3
    %v2753 = vsel %vm730, %v2752, %v2751
    %v2754 = vrot.slane %v2708, 2
    %v2755 = vsel %vm733, %v2754, %v2753
    %v2756 = vrot.slane %v2709, 1
    %v2757 = vsel %vm736, %v2756, %v2755
    %v2758 = vrot.slane %v2711, 7
    %v2759 = vsel %vm718, %v2758, %v2710
    %2760 = vrot.lane.b32.xlu0 %v2743, 2
    %v2761 = vpop.permute.xlu0 %2760
    %2762 = vrot.lane.b32.xlu0 %v2757, 2
    %v2763 = vpop.permute.xlu0 %2762
    %2764 = vrot.lane.b32.xlu0 %v2759, 2
    %v2765 = vpop.permute.xlu0 %2764
    %v2769 = vsel %vm878, 0.0, %v2761
    %v2770 = vsel %vm878, 0.0, %v2763
    %v2771 = vsel %vm878, 0.0, %v2765
    %v2775 = vrot.slane %v2769, 1
    %v2776 = vrot.slane %v2769, 2
    %v2777 = vrot.slane %v2769, 3
    %v2778 = vrot.slane %v2769, 4
    %v2779 = vrot.slane %v2769, 5
    %v2780 = vrot.slane %v2769, 6
    %v2781 = vrot.slane %v2769, 7
    %v2782 = vrot.slane %v2770, 1
    %v2783 = vrot.slane %v2770, 2
    %v2784 = vrot.slane %v2770, 3
    %v2785 = vrot.slane %v2770, 4
    %v2786 = vrot.slane %v2770, 5
    %v2787 = vrot.slane %v2770, 6
    %v2788 = vrot.slane %v2770, 7
    %v2789 = vrot.slane %v2771, 1
    %v2808 = vadd.f32 %v2694, %v2769
    %v2809 = vadd.f32 %v2695, %v2775
    %v2810 = vadd.f32 %v2696, %v2776
    %v2811 = vadd.f32 %v2697, %v2777
    %v2812 = vadd.f32 %v2698, %v2778
    %v2813 = vadd.f32 %v2699, %v2779
    %v2814 = vadd.f32 %v2700, %v2780
    %v2815 = vadd.f32 %v2701, %v2781
    %v2816 = vadd.f32 %v2702, %v2770
    %v2817 = vadd.f32 %v2703, %v2782
    %v2818 = vadd.f32 %v2704, %v2783
    %v2819 = vadd.f32 %v2705, %v2784
    %v2820 = vadd.f32 %v2706, %v2785
    %v2821 = vadd.f32 %v2707, %v2786
    %v2822 = vadd.f32 %v2708, %v2787
    %v2823 = vadd.f32 %v2709, %v2788
    %v2824 = vadd.f32 %v2710, %v2771
    %v2825 = vadd.f32 %v2711, %v2789
    %v2844 = vrot.slane %v2809, 7
    %v2845 = vsel %vm718, %v2844, %v2808
    %v2846 = vrot.slane %v2810, 6
    %v2847 = vsel %vm721, %v2846, %v2845
    %v2848 = vrot.slane %v2811, 5
    %v2849 = vsel %vm724, %v2848, %v2847
    %v2850 = vrot.slane %v2812, 4
    %v2851 = vsel %vm727, %v2850, %v2849
    %v2852 = vrot.slane %v2813, 3
    %v2853 = vsel %vm730, %v2852, %v2851
    %v2854 = vrot.slane %v2814, 2
    %v2855 = vsel %vm733, %v2854, %v2853
    %v2856 = vrot.slane %v2815, 1
    %v2857 = vsel %vm736, %v2856, %v2855
    %v2858 = vrot.slane %v2817, 7
    %v2859 = vsel %vm718, %v2858, %v2816
    %v2860 = vrot.slane %v2818, 6
    %v2861 = vsel %vm721, %v2860, %v2859
    %v2862 = vrot.slane %v2819, 5
    %v2863 = vsel %vm724, %v2862, %v2861
    %v2864 = vrot.slane %v2820, 4
    %v2865 = vsel %vm727, %v2864, %v2863
    %v2866 = vrot.slane %v2821, 3
    %v2867 = vsel %vm730, %v2866, %v2865
    %v2868 = vrot.slane %v2822, 2
    %v2869 = vsel %vm733, %v2868, %v2867
    %v2870 = vrot.slane %v2823, 1
    %v2871 = vsel %vm736, %v2870, %v2869
    %v2872 = vrot.slane %v2825, 7
    %v2873 = vsel %vm718, %v2872, %v2824
    %2874 = vrot.lane.b32.xlu0 %v2857, 4
    %v2875 = vpop.permute.xlu0 %2874
    %2876 = vrot.lane.b32.xlu0 %v2871, 4
    %v2877 = vpop.permute.xlu0 %2876
    %2878 = vrot.lane.b32.xlu0 %v2873, 4
    %v2879 = vpop.permute.xlu0 %2878
    %v2883 = vsel %vm115, 0.0, %v2875
    %v2884 = vsel %vm115, 0.0, %v2877
    %v2885 = vsel %vm115, 0.0, %v2879
    %v2889 = vrot.slane %v2883, 1
    %v2890 = vrot.slane %v2883, 2
    %v2891 = vrot.slane %v2883, 3
    %v2892 = vrot.slane %v2883, 4
    %v2893 = vrot.slane %v2883, 5
    %v2894 = vrot.slane %v2883, 6
    %v2895 = vrot.slane %v2883, 7
    %v2896 = vrot.slane %v2884, 1
    %v2897 = vrot.slane %v2884, 2
    %v2898 = vrot.slane %v2884, 3
    %v2899 = vrot.slane %v2884, 4
    %v2900 = vrot.slane %v2884, 5
    %v2901 = vrot.slane %v2884, 6
    %v2902 = vrot.slane %v2884, 7
    %v2903 = vrot.slane %v2885, 1
    %v2922 = vadd.f32 %v2808, %v2883
    %v2923 = vadd.f32 %v2809, %v2889
    %v2924 = vadd.f32 %v2810, %v2890
    %v2925 = vadd.f32 %v2811, %v2891
    %v2926 = vadd.f32 %v2812, %v2892
    %v2927 = vadd.f32 %v2813, %v2893
    %v2928 = vadd.f32 %v2814, %v2894
    %v2929 = vadd.f32 %v2815, %v2895
    %v2930 = vadd.f32 %v2816, %v2884
    %v2931 = vadd.f32 %v2817, %v2896
    %v2932 = vadd.f32 %v2818, %v2897
    %v2933 = vadd.f32 %v2819, %v2898
    %v2934 = vadd.f32 %v2820, %v2899
    %v2935 = vadd.f32 %v2821, %v2900
    %v2936 = vadd.f32 %v2822, %v2901
    %v2937 = vadd.f32 %v2823, %v2902
    %v2938 = vadd.f32 %v2824, %v2885
    %v2939 = vadd.f32 %v2825, %v2903
    %v2940 = vadd.f32 %v2922, 1.0
    %v2941 = vadd.f32 %v2923, 1.0
    %v2942 = vadd.f32 %v2924, 1.0
    %v2943 = vadd.f32 %v2925, 1.0
    %v2944 = vadd.f32 %v2926, 1.0
    %v2945 = vadd.f32 %v2927, 1.0
    %v2946 = vadd.f32 %v2928, 1.0
    %v2947 = vadd.f32 %v2929, 1.0
    %v2948 = vadd.f32 %v2930, 1.0
    %v2949 = vadd.f32 %v2931, 1.0
    %v2950 = vadd.f32 %v2932, 1.0
    %v2951 = vadd.f32 %v2933, 1.0
    %v2952 = vadd.f32 %v2934, 1.0
    %v2953 = vadd.f32 %v2935, 1.0
    %v2954 = vadd.f32 %v2936, 1.0
    %v2955 = vadd.f32 %v2937, 1.0
    %v2956 = vadd.f32 %v2938, 1.0
    %v2957 = vadd.f32 %v2939, 1.0
    %v2958 = vsub.f32 %v2922, %v2580
    %v2959 = vsub.f32 %v2923, %v2581
    %v2960 = vsub.f32 %v2924, %v2582
    %v2961 = vsub.f32 %v2925, %v2583
    %v2962 = vsub.f32 %v2926, %v2584
    %v2963 = vsub.f32 %v2927, %v2585
    %v2964 = vsub.f32 %v2928, %v2586
    %v2965 = vsub.f32 %v2929, %v2587
    %v2966 = vsub.f32 %v2930, %v2588
    %v2967 = vsub.f32 %v2931, %v2589
    %v2968 = vsub.f32 %v2932, %v2590
    %v2969 = vsub.f32 %v2933, %v2591
    %v2970 = vsub.f32 %v2934, %v2592
    %v2971 = vsub.f32 %v2935, %v2593
    %v2972 = vsub.f32 %v2936, %v2594
    %v2973 = vsub.f32 %v2937, %v2595
    %v2974 = vsub.f32 %v2938, %v2596
    %v2975 = vsub.f32 %v2939, %v2597
    %v2976 = vadd.f32 %v2958, 1.0
    %v2977 = vadd.f32 %v2959, 1.0
    %v2978 = vadd.f32 %v2960, 1.0
    %v2979 = vadd.f32 %v2961, 1.0
    %v2980 = vadd.f32 %v2962, 1.0
    %v2981 = vadd.f32 %v2963, 1.0
    %v2982 = vadd.f32 %v2964, 1.0
    %v2983 = vadd.f32 %v2965, 1.0
    %v2984 = vadd.f32 %v2966, 1.0
    %v2985 = vadd.f32 %v2967, 1.0
    %v2986 = vadd.f32 %v2968, 1.0
    %v2987 = vadd.f32 %v2969, 1.0
    %v2988 = vadd.f32 %v2970, 1.0
    %v2989 = vadd.f32 %v2971, 1.0
    %v2990 = vadd.f32 %v2972, 1.0
    %v2991 = vadd.f32 %v2973, 1.0
    %v2992 = vadd.f32 %v2974, 1.0
    %v2993 = vadd.f32 %v2975, 1.0
    %v2994 = vrot.slane %v663, 5
    %v2995 = vrot.slane %v664, 5
    %v2996 = vrot.slane %v665, 5
    %v2997 = vrot.slane %v666, 5
    %v2998 = vrot.slane %v667, 5
    %v2999 = vrot.slane %v668, 5
    %v3000 = vrot.slane %v669, 5
    %v3001 = vrot.slane %v670, 5
    %v3002 = vrot.slane %v671, 5
    %v3003 = vrot.slane %v672, 5
    %v3004 = vrot.slane %v673, 5
    %v3005 = vrot.slane %v674, 5
    %v3006 = vrot.slane %v675, 5
    %v3007 = vrot.slane %v676, 5
    %v3008 = vrot.slane %v677, 5
    %v3009 = vrot.slane %v678, 5
    %v3010 = vrot.slane %v679, 5
    %v3011 = vrot.slane %v680, 5
    %v3030 = vmul.f32 %v2976, %v2994
    %v3031 = vmul.f32 %v2977, %v2995
    %v3032 = vmul.f32 %v2978, %v2996
    %v3033 = vmul.f32 %v2979, %v2997
    %v3034 = vmul.f32 %v2980, %v2998
    %v3035 = vmul.f32 %v2981, %v2999
    %v3036 = vmul.f32 %v2982, %v3000
    %v3037 = vmul.f32 %v2983, %v3001
    %v3038 = vmul.f32 %v2984, %v3002
    %v3039 = vmul.f32 %v2985, %v3003
    %v3040 = vmul.f32 %v2986, %v3004
    %v3041 = vmul.f32 %v2987, %v3005
    %v3042 = vmul.f32 %v2988, %v3006
    %v3043 = vmul.f32 %v2989, %v3007
    %v3044 = vmul.f32 %v2990, %v3008
    %v3045 = vmul.f32 %v2991, %v3009
    %v3046 = vmul.f32 %v2992, %v3010
    %v3047 = vmul.f32 %v2993, %v3011
    %v3048 = vadd.f32 %v2940, %v3030
    %v3049 = vadd.f32 %v2941, %v3031
    %v3050 = vadd.f32 %v2942, %v3032
    %v3051 = vadd.f32 %v2943, %v3033
    %v3052 = vadd.f32 %v2944, %v3034
    %v3053 = vadd.f32 %v2945, %v3035
    %v3054 = vadd.f32 %v2946, %v3036
    %v3055 = vadd.f32 %v2947, %v3037
    %v3056 = vadd.f32 %v2948, %v3038
    %v3057 = vadd.f32 %v2949, %v3039
    %v3058 = vadd.f32 %v2950, %v3040
    %v3059 = vadd.f32 %v2951, %v3041
    %v3060 = vadd.f32 %v2952, %v3042
    %v3061 = vadd.f32 %v2953, %v3043
    %v3062 = vadd.f32 %v2954, %v3044
    %v3063 = vadd.f32 %v2955, %v3045
    %v3064 = vadd.f32 %v2956, %v3046
    %v3065 = vadd.f32 %v2957, %v3047
    %v3084 = vrot.slane %v3049, 7
    %v3085 = vsel %vm718, %v3084, %v3048
    %v3086 = vrot.slane %v3050, 6
    %v3087 = vsel %vm721, %v3086, %v3085
    %v3088 = vrot.slane %v3051, 5
    %v3089 = vsel %vm724, %v3088, %v3087
    %v3090 = vrot.slane %v3052, 4
    %v3091 = vsel %vm727, %v3090, %v3089
    %v3092 = vrot.slane %v3053, 3
    %v3093 = vsel %vm730, %v3092, %v3091
    %v3094 = vrot.slane %v3054, 2
    %v3095 = vsel %vm733, %v3094, %v3093
    %v3096 = vrot.slane %v3055, 1
    %v3097 = vsel %vm736, %v3096, %v3095
    %v3098 = vrot.slane %v3057, 7
    %v3099 = vsel %vm718, %v3098, %v3056
    %v3100 = vrot.slane %v3058, 6
    %v3101 = vsel %vm721, %v3100, %v3099
    %v3102 = vrot.slane %v3059, 5
    %v3103 = vsel %vm724, %v3102, %v3101
    %v3104 = vrot.slane %v3060, 4
    %v3105 = vsel %vm727, %v3104, %v3103
    %v3106 = vrot.slane %v3061, 3
    %v3107 = vsel %vm730, %v3106, %v3105
    %v3108 = vrot.slane %v3062, 2
    %v3109 = vsel %vm733, %v3108, %v3107
    %v3110 = vrot.slane %v3063, 1
    %v3111 = vsel %vm736, %v3110, %v3109
    %v3112 = vrot.slane %v3065, 7
    %v3113 = vsel %vm718, %v3112, %v3064
    %3114 = vrot.lane.b32.xlu0 %v3097, 1
    %v3115 = vpop.permute.xlu0 %3114
    %3116 = vrot.lane.b32.xlu0 %v3111, 1
    %v3117 = vpop.permute.xlu0 %3116
    %3118 = vrot.lane.b32.xlu0 %v3113, 1
    %v3119 = vpop.permute.xlu0 %3118
    %v3123 = vsel %vm763, 0.0, %v3115
    %v3124 = vsel %vm763, 0.0, %v3117
    %v3125 = vsel %vm763, 0.0, %v3119
    %v3129 = vrot.slane %v3123, 1
    %v3130 = vrot.slane %v3123, 2
    %v3131 = vrot.slane %v3123, 3
    %v3132 = vrot.slane %v3123, 4
    %v3133 = vrot.slane %v3123, 5
    %v3134 = vrot.slane %v3123, 6
    %v3135 = vrot.slane %v3123, 7
    %v3136 = vrot.slane %v3124, 1
    %v3137 = vrot.slane %v3124, 2
    %v3138 = vrot.slane %v3124, 3
    %v3139 = vrot.slane %v3124, 4
    %v3140 = vrot.slane %v3124, 5
    %v3141 = vrot.slane %v3124, 6
    %v3142 = vrot.slane %v3124, 7
    %v3143 = vrot.slane %v3125, 1
    %v3162 = vadd.f32 %v3048, %v3123
    %v3163 = vadd.f32 %v3049, %v3129
    %v3164 = vadd.f32 %v3050, %v3130
    %v3165 = vadd.f32 %v3051, %v3131
    %v3166 = vadd.f32 %v3052, %v3132
    %v3167 = vadd.f32 %v3053, %v3133
    %v3168 = vadd.f32 %v3054, %v3134
    %v3169 = vadd.f32 %v3055, %v3135
    %v3170 = vadd.f32 %v3056, %v3124
    %v3171 = vadd.f32 %v3057, %v3136
    %v3172 = vadd.f32 %v3058, %v3137
    %v3173 = vadd.f32 %v3059, %v3138
    %v3174 = vadd.f32 %v3060, %v3139
    %v3175 = vadd.f32 %v3061, %v3140
    %v3176 = vadd.f32 %v3062, %v3141
    %v3177 = vadd.f32 %v3063, %v3142
    %v3178 = vadd.f32 %v3064, %v3125
    %v3179 = vadd.f32 %v3065, %v3143
    %v3198 = vrot.slane %v3163, 7
    %v3199 = vsel %vm718, %v3198, %v3162
    %v3200 = vrot.slane %v3164, 6
    %v3201 = vsel %vm721, %v3200, %v3199
    %v3202 = vrot.slane %v3165, 5
    %v3203 = vsel %vm724, %v3202, %v3201
    %v3204 = vrot.slane %v3166, 4
    %v3205 = vsel %vm727, %v3204, %v3203
    %v3206 = vrot.slane %v3167, 3
    %v3207 = vsel %vm730, %v3206, %v3205
    %v3208 = vrot.slane %v3168, 2
    %v3209 = vsel %vm733, %v3208, %v3207
    %v3210 = vrot.slane %v3169, 1
    %v3211 = vsel %vm736, %v3210, %v3209
    %v3212 = vrot.slane %v3171, 7
    %v3213 = vsel %vm718, %v3212, %v3170
    %v3214 = vrot.slane %v3172, 6
    %v3215 = vsel %vm721, %v3214, %v3213
    %v3216 = vrot.slane %v3173, 5
    %v3217 = vsel %vm724, %v3216, %v3215
    %v3218 = vrot.slane %v3174, 4
    %v3219 = vsel %vm727, %v3218, %v3217
    %v3220 = vrot.slane %v3175, 3
    %v3221 = vsel %vm730, %v3220, %v3219
    %v3222 = vrot.slane %v3176, 2
    %v3223 = vsel %vm733, %v3222, %v3221
    %v3224 = vrot.slane %v3177, 1
    %v3225 = vsel %vm736, %v3224, %v3223
    %v3226 = vrot.slane %v3179, 7
    %v3227 = vsel %vm718, %v3226, %v3178
    %3228 = vrot.lane.b32.xlu0 %v3211, 2
    %v3229 = vpop.permute.xlu0 %3228
    %3230 = vrot.lane.b32.xlu0 %v3225, 2
    %v3231 = vpop.permute.xlu0 %3230
    %3232 = vrot.lane.b32.xlu0 %v3227, 2
    %v3233 = vpop.permute.xlu0 %3232
    %v3237 = vsel %vm878, 0.0, %v3229
    %v3238 = vsel %vm878, 0.0, %v3231
    %v3239 = vsel %vm878, 0.0, %v3233
    %v3243 = vrot.slane %v3237, 1
    %v3244 = vrot.slane %v3237, 2
    %v3245 = vrot.slane %v3237, 3
    %v3246 = vrot.slane %v3237, 4
    %v3247 = vrot.slane %v3237, 5
    %v3248 = vrot.slane %v3237, 6
    %v3249 = vrot.slane %v3237, 7
    %v3250 = vrot.slane %v3238, 1
    %v3251 = vrot.slane %v3238, 2
    %v3252 = vrot.slane %v3238, 3
    %v3253 = vrot.slane %v3238, 4
    %v3254 = vrot.slane %v3238, 5
    %v3255 = vrot.slane %v3238, 6
    %v3256 = vrot.slane %v3238, 7
    %v3257 = vrot.slane %v3239, 1
    %v3276 = vadd.f32 %v3162, %v3237
    %v3277 = vadd.f32 %v3163, %v3243
    %v3278 = vadd.f32 %v3164, %v3244
    %v3279 = vadd.f32 %v3165, %v3245
    %v3280 = vadd.f32 %v3166, %v3246
    %v3281 = vadd.f32 %v3167, %v3247
    %v3282 = vadd.f32 %v3168, %v3248
    %v3283 = vadd.f32 %v3169, %v3249
    %v3284 = vadd.f32 %v3170, %v3238
    %v3285 = vadd.f32 %v3171, %v3250
    %v3286 = vadd.f32 %v3172, %v3251
    %v3287 = vadd.f32 %v3173, %v3252
    %v3288 = vadd.f32 %v3174, %v3253
    %v3289 = vadd.f32 %v3175, %v3254
    %v3290 = vadd.f32 %v3176, %v3255
    %v3291 = vadd.f32 %v3177, %v3256
    %v3292 = vadd.f32 %v3178, %v3239
    %v3293 = vadd.f32 %v3179, %v3257
    %v3312 = vrot.slane %v3277, 7
    %v3313 = vsel %vm718, %v3312, %v3276
    %v3314 = vrot.slane %v3278, 6
    %v3315 = vsel %vm721, %v3314, %v3313
    %v3316 = vrot.slane %v3279, 5
    %v3317 = vsel %vm724, %v3316, %v3315
    %v3318 = vrot.slane %v3280, 4
    %v3319 = vsel %vm727, %v3318, %v3317
    %v3320 = vrot.slane %v3281, 3
    %v3321 = vsel %vm730, %v3320, %v3319
    %v3322 = vrot.slane %v3282, 2
    %v3323 = vsel %vm733, %v3322, %v3321
    %v3324 = vrot.slane %v3283, 1
    %v3325 = vsel %vm736, %v3324, %v3323
    %v3326 = vrot.slane %v3285, 7
    %v3327 = vsel %vm718, %v3326, %v3284
    %v3328 = vrot.slane %v3286, 6
    %v3329 = vsel %vm721, %v3328, %v3327
    %v3330 = vrot.slane %v3287, 5
    %v3331 = vsel %vm724, %v3330, %v3329
    %v3332 = vrot.slane %v3288, 4
    %v3333 = vsel %vm727, %v3332, %v3331
    %v3334 = vrot.slane %v3289, 3
    %v3335 = vsel %vm730, %v3334, %v3333
    %v3336 = vrot.slane %v3290, 2
    %v3337 = vsel %vm733, %v3336, %v3335
    %v3338 = vrot.slane %v3291, 1
    %v3339 = vsel %vm736, %v3338, %v3337
    %v3340 = vrot.slane %v3293, 7
    %v3341 = vsel %vm718, %v3340, %v3292
    %3342 = vrot.lane.b32.xlu0 %v3325, 4
    %v3343 = vpop.permute.xlu0 %3342
    %3344 = vrot.lane.b32.xlu0 %v3339, 4
    %v3345 = vpop.permute.xlu0 %3344
    %3346 = vrot.lane.b32.xlu0 %v3341, 4
    %v3347 = vpop.permute.xlu0 %3346
    %v3351 = vsel %vm115, 0.0, %v3343
    %v3352 = vsel %vm115, 0.0, %v3345
    %v3353 = vsel %vm115, 0.0, %v3347
    %v3357 = vrot.slane %v3351, 1
    %v3358 = vrot.slane %v3351, 2
    %v3359 = vrot.slane %v3351, 3
    %v3360 = vrot.slane %v3351, 4
    %v3361 = vrot.slane %v3351, 5
    %v3362 = vrot.slane %v3351, 6
    %v3363 = vrot.slane %v3351, 7
    %v3364 = vrot.slane %v3352, 1
    %v3365 = vrot.slane %v3352, 2
    %v3366 = vrot.slane %v3352, 3
    %v3367 = vrot.slane %v3352, 4
    %v3368 = vrot.slane %v3352, 5
    %v3369 = vrot.slane %v3352, 6
    %v3370 = vrot.slane %v3352, 7
    %v3371 = vrot.slane %v3353, 1
    %v3390 = vadd.f32 %v3276, %v3351
    %v3391 = vadd.f32 %v3277, %v3357
    %v3392 = vadd.f32 %v3278, %v3358
    %v3393 = vadd.f32 %v3279, %v3359
    %v3394 = vadd.f32 %v3280, %v3360
    %v3395 = vadd.f32 %v3281, %v3361
    %v3396 = vadd.f32 %v3282, %v3362
    %v3397 = vadd.f32 %v3283, %v3363
    %v3398 = vadd.f32 %v3284, %v3352
    %v3399 = vadd.f32 %v3285, %v3364
    %v3400 = vadd.f32 %v3286, %v3365
    %v3401 = vadd.f32 %v3287, %v3366
    %v3402 = vadd.f32 %v3288, %v3367
    %v3403 = vadd.f32 %v3289, %v3368
    %v3404 = vadd.f32 %v3290, %v3369
    %v3405 = vadd.f32 %v3291, %v3370
    %v3406 = vadd.f32 %v3292, %v3353
    %v3407 = vadd.f32 %v3293, %v3371
    %v3408 = vadd.f32 %v3390, 1.0
    %v3409 = vadd.f32 %v3391, 1.0
    %v3410 = vadd.f32 %v3392, 1.0
    %v3411 = vadd.f32 %v3393, 1.0
    %v3412 = vadd.f32 %v3394, 1.0
    %v3413 = vadd.f32 %v3395, 1.0
    %v3414 = vadd.f32 %v3396, 1.0
    %v3415 = vadd.f32 %v3397, 1.0
    %v3416 = vadd.f32 %v3398, 1.0
    %v3417 = vadd.f32 %v3399, 1.0
    %v3418 = vadd.f32 %v3400, 1.0
    %v3419 = vadd.f32 %v3401, 1.0
    %v3420 = vadd.f32 %v3402, 1.0
    %v3421 = vadd.f32 %v3403, 1.0
    %v3422 = vadd.f32 %v3404, 1.0
    %v3423 = vadd.f32 %v3405, 1.0
    %v3424 = vadd.f32 %v3406, 1.0
    %v3425 = vadd.f32 %v3407, 1.0
    %v3426 = vsub.f32 %v3390, %v3048
    %v3427 = vsub.f32 %v3391, %v3049
    %v3428 = vsub.f32 %v3392, %v3050
    %v3429 = vsub.f32 %v3393, %v3051
    %v3430 = vsub.f32 %v3394, %v3052
    %v3431 = vsub.f32 %v3395, %v3053
    %v3432 = vsub.f32 %v3396, %v3054
    %v3433 = vsub.f32 %v3397, %v3055
    %v3434 = vsub.f32 %v3398, %v3056
    %v3435 = vsub.f32 %v3399, %v3057
    %v3436 = vsub.f32 %v3400, %v3058
    %v3437 = vsub.f32 %v3401, %v3059
    %v3438 = vsub.f32 %v3402, %v3060
    %v3439 = vsub.f32 %v3403, %v3061
    %v3440 = vsub.f32 %v3404, %v3062
    %v3441 = vsub.f32 %v3405, %v3063
    %v3442 = vsub.f32 %v3406, %v3064
    %v3443 = vsub.f32 %v3407, %v3065
    %v3444 = vadd.f32 %v3426, 1.0
    %v3445 = vadd.f32 %v3427, 1.0
    %v3446 = vadd.f32 %v3428, 1.0
    %v3447 = vadd.f32 %v3429, 1.0
    %v3448 = vadd.f32 %v3430, 1.0
    %v3449 = vadd.f32 %v3431, 1.0
    %v3450 = vadd.f32 %v3432, 1.0
    %v3451 = vadd.f32 %v3433, 1.0
    %v3452 = vadd.f32 %v3434, 1.0
    %v3453 = vadd.f32 %v3435, 1.0
    %v3454 = vadd.f32 %v3436, 1.0
    %v3455 = vadd.f32 %v3437, 1.0
    %v3456 = vadd.f32 %v3438, 1.0
    %v3457 = vadd.f32 %v3439, 1.0
    %v3458 = vadd.f32 %v3440, 1.0
    %v3459 = vadd.f32 %v3441, 1.0
    %v3460 = vadd.f32 %v3442, 1.0
    %v3461 = vadd.f32 %v3443, 1.0
    %v3462 = vrot.slane %v663, 6
    %v3463 = vrot.slane %v664, 6
    %v3464 = vrot.slane %v665, 6
    %v3465 = vrot.slane %v666, 6
    %v3466 = vrot.slane %v667, 6
    %v3467 = vrot.slane %v668, 6
    %v3468 = vrot.slane %v669, 6
    %v3469 = vrot.slane %v670, 6
    %v3470 = vrot.slane %v671, 6
    %v3471 = vrot.slane %v672, 6
    %v3472 = vrot.slane %v673, 6
    %v3473 = vrot.slane %v674, 6
    %v3474 = vrot.slane %v675, 6
    %v3475 = vrot.slane %v676, 6
    %v3476 = vrot.slane %v677, 6
    %v3477 = vrot.slane %v678, 6
    %v3478 = vrot.slane %v679, 6
    %v3479 = vrot.slane %v680, 6
    %v3498 = vmul.f32 %v3444, %v3462
    %v3499 = vmul.f32 %v3445, %v3463
    %v3500 = vmul.f32 %v3446, %v3464
    %v3501 = vmul.f32 %v3447, %v3465
    %v3502 = vmul.f32 %v3448, %v3466
    %v3503 = vmul.f32 %v3449, %v3467
    %v3504 = vmul.f32 %v3450, %v3468
    %v3505 = vmul.f32 %v3451, %v3469
    %v3506 = vmul.f32 %v3452, %v3470
    %v3507 = vmul.f32 %v3453, %v3471
    %v3508 = vmul.f32 %v3454, %v3472
    %v3509 = vmul.f32 %v3455, %v3473
    %v3510 = vmul.f32 %v3456, %v3474
    %v3511 = vmul.f32 %v3457, %v3475
    %v3512 = vmul.f32 %v3458, %v3476
    %v3513 = vmul.f32 %v3459, %v3477
    %v3514 = vmul.f32 %v3460, %v3478
    %v3515 = vmul.f32 %v3461, %v3479
    %v3516 = vadd.f32 %v3408, %v3498
    %v3517 = vadd.f32 %v3409, %v3499
    %v3518 = vadd.f32 %v3410, %v3500
    %v3519 = vadd.f32 %v3411, %v3501
    %v3520 = vadd.f32 %v3412, %v3502
    %v3521 = vadd.f32 %v3413, %v3503
    %v3522 = vadd.f32 %v3414, %v3504
    %v3523 = vadd.f32 %v3415, %v3505
    %v3524 = vadd.f32 %v3416, %v3506
    %v3525 = vadd.f32 %v3417, %v3507
    %v3526 = vadd.f32 %v3418, %v3508
    %v3527 = vadd.f32 %v3419, %v3509
    %v3528 = vadd.f32 %v3420, %v3510
    %v3529 = vadd.f32 %v3421, %v3511
    %v3530 = vadd.f32 %v3422, %v3512
    %v3531 = vadd.f32 %v3423, %v3513
    %v3532 = vadd.f32 %v3424, %v3514
    %v3533 = vadd.f32 %v3425, %v3515
    %v3552 = vrot.slane %v3517, 7
    %v3553 = vsel %vm718, %v3552, %v3516
    %v3554 = vrot.slane %v3518, 6
    %v3555 = vsel %vm721, %v3554, %v3553
    %v3556 = vrot.slane %v3519, 5
    %v3557 = vsel %vm724, %v3556, %v3555
    %v3558 = vrot.slane %v3520, 4
    %v3559 = vsel %vm727, %v3558, %v3557
    %v3560 = vrot.slane %v3521, 3
    %v3561 = vsel %vm730, %v3560, %v3559
    %v3562 = vrot.slane %v3522, 2
    %v3563 = vsel %vm733, %v3562, %v3561
    %v3564 = vrot.slane %v3523, 1
    %v3565 = vsel %vm736, %v3564, %v3563
    %v3566 = vrot.slane %v3525, 7
    %v3567 = vsel %vm718, %v3566, %v3524
    %v3568 = vrot.slane %v3526, 6
    %v3569 = vsel %vm721, %v3568, %v3567
    %v3570 = vrot.slane %v3527, 5
    %v3571 = vsel %vm724, %v3570, %v3569
    %v3572 = vrot.slane %v3528, 4
    %v3573 = vsel %vm727, %v3572, %v3571
    %v3574 = vrot.slane %v3529, 3
    %v3575 = vsel %vm730, %v3574, %v3573
    %v3576 = vrot.slane %v3530, 2
    %v3577 = vsel %vm733, %v3576, %v3575
    %v3578 = vrot.slane %v3531, 1
    %v3579 = vsel %vm736, %v3578, %v3577
    %v3580 = vrot.slane %v3533, 7
    %v3581 = vsel %vm718, %v3580, %v3532
    %3582 = vrot.lane.b32.xlu0 %v3565, 1
    %v3583 = vpop.permute.xlu0 %3582
    %3584 = vrot.lane.b32.xlu0 %v3579, 1
    %v3585 = vpop.permute.xlu0 %3584
    %3586 = vrot.lane.b32.xlu0 %v3581, 1
    %v3587 = vpop.permute.xlu0 %3586
    %v3591 = vsel %vm763, 0.0, %v3583
    %v3592 = vsel %vm763, 0.0, %v3585
    %v3593 = vsel %vm763, 0.0, %v3587
    %v3597 = vrot.slane %v3591, 1
    %v3598 = vrot.slane %v3591, 2
    %v3599 = vrot.slane %v3591, 3
    %v3600 = vrot.slane %v3591, 4
    %v3601 = vrot.slane %v3591, 5
    %v3602 = vrot.slane %v3591, 6
    %v3603 = vrot.slane %v3591, 7
    %v3604 = vrot.slane %v3592, 1
    %v3605 = vrot.slane %v3592, 2
    %v3606 = vrot.slane %v3592, 3
    %v3607 = vrot.slane %v3592, 4
    %v3608 = vrot.slane %v3592, 5
    %v3609 = vrot.slane %v3592, 6
    %v3610 = vrot.slane %v3592, 7
    %v3611 = vrot.slane %v3593, 1
    %v3630 = vadd.f32 %v3516, %v3591
    %v3631 = vadd.f32 %v3517, %v3597
    %v3632 = vadd.f32 %v3518, %v3598
    %v3633 = vadd.f32 %v3519, %v3599
    %v3634 = vadd.f32 %v3520, %v3600
    %v3635 = vadd.f32 %v3521, %v3601
    %v3636 = vadd.f32 %v3522, %v3602
    %v3637 = vadd.f32 %v3523, %v3603
    %v3638 = vadd.f32 %v3524, %v3592
    %v3639 = vadd.f32 %v3525, %v3604
    %v3640 = vadd.f32 %v3526, %v3605
    %v3641 = vadd.f32 %v3527, %v3606
    %v3642 = vadd.f32 %v3528, %v3607
    %v3643 = vadd.f32 %v3529, %v3608
    %v3644 = vadd.f32 %v3530, %v3609
    %v3645 = vadd.f32 %v3531, %v3610
    %v3646 = vadd.f32 %v3532, %v3593
    %v3647 = vadd.f32 %v3533, %v3611
    %v3666 = vrot.slane %v3631, 7
    %v3667 = vsel %vm718, %v3666, %v3630
    %v3668 = vrot.slane %v3632, 6
    %v3669 = vsel %vm721, %v3668, %v3667
    %v3670 = vrot.slane %v3633, 5
    %v3671 = vsel %vm724, %v3670, %v3669
    %v3672 = vrot.slane %v3634, 4
    %v3673 = vsel %vm727, %v3672, %v3671
    %v3674 = vrot.slane %v3635, 3
    %v3675 = vsel %vm730, %v3674, %v3673
    %v3676 = vrot.slane %v3636, 2
    %v3677 = vsel %vm733, %v3676, %v3675
    %v3678 = vrot.slane %v3637, 1
    %v3679 = vsel %vm736, %v3678, %v3677
    %v3680 = vrot.slane %v3639, 7
    %v3681 = vsel %vm718, %v3680, %v3638
    %v3682 = vrot.slane %v3640, 6
    %v3683 = vsel %vm721, %v3682, %v3681
    %v3684 = vrot.slane %v3641, 5
    %v3685 = vsel %vm724, %v3684, %v3683
    %v3686 = vrot.slane %v3642, 4
    %v3687 = vsel %vm727, %v3686, %v3685
    %v3688 = vrot.slane %v3643, 3
    %v3689 = vsel %vm730, %v3688, %v3687
    %v3690 = vrot.slane %v3644, 2
    %v3691 = vsel %vm733, %v3690, %v3689
    %v3692 = vrot.slane %v3645, 1
    %v3693 = vsel %vm736, %v3692, %v3691
    %v3694 = vrot.slane %v3647, 7
    %v3695 = vsel %vm718, %v3694, %v3646
    %3696 = vrot.lane.b32.xlu0 %v3679, 2
    %v3697 = vpop.permute.xlu0 %3696
    %3698 = vrot.lane.b32.xlu0 %v3693, 2
    %v3699 = vpop.permute.xlu0 %3698
    %3700 = vrot.lane.b32.xlu0 %v3695, 2
    %v3701 = vpop.permute.xlu0 %3700
    %v3705 = vsel %vm878, 0.0, %v3697
    %v3706 = vsel %vm878, 0.0, %v3699
    %v3707 = vsel %vm878, 0.0, %v3701
    %v3711 = vrot.slane %v3705, 1
    %v3712 = vrot.slane %v3705, 2
    %v3713 = vrot.slane %v3705, 3
    %v3714 = vrot.slane %v3705, 4
    %v3715 = vrot.slane %v3705, 5
    %v3716 = vrot.slane %v3705, 6
    %v3717 = vrot.slane %v3705, 7
    %v3718 = vrot.slane %v3706, 1
    %v3719 = vrot.slane %v3706, 2
    %v3720 = vrot.slane %v3706, 3
    %v3721 = vrot.slane %v3706, 4
    %v3722 = vrot.slane %v3706, 5
    %v3723 = vrot.slane %v3706, 6
    %v3724 = vrot.slane %v3706, 7
    %v3725 = vrot.slane %v3707, 1
    %v3744 = vadd.f32 %v3630, %v3705
    %v3745 = vadd.f32 %v3631, %v3711
    %v3746 = vadd.f32 %v3632, %v3712
    %v3747 = vadd.f32 %v3633, %v3713
    %v3748 = vadd.f32 %v3634, %v3714
    %v3749 = vadd.f32 %v3635, %v3715
    %v3750 = vadd.f32 %v3636, %v3716
    %v3751 = vadd.f32 %v3637, %v3717
    %v3752 = vadd.f32 %v3638, %v3706
    %v3753 = vadd.f32 %v3639, %v3718
    %v3754 = vadd.f32 %v3640, %v3719
    %v3755 = vadd.f32 %v3641, %v3720
    %v3756 = vadd.f32 %v3642, %v3721
    %v3757 = vadd.f32 %v3643, %v3722
    %v3758 = vadd.f32 %v3644, %v3723
    %v3759 = vadd.f32 %v3645, %v3724
    %v3760 = vadd.f32 %v3646, %v3707
    %v3761 = vadd.f32 %v3647, %v3725
    %v3780 = vrot.slane %v3745, 7
    %v3781 = vsel %vm718, %v3780, %v3744
    %v3782 = vrot.slane %v3746, 6
    %v3783 = vsel %vm721, %v3782, %v3781
    %v3784 = vrot.slane %v3747, 5
    %v3785 = vsel %vm724, %v3784, %v3783
    %v3786 = vrot.slane %v3748, 4
    %v3787 = vsel %vm727, %v3786, %v3785
    %v3788 = vrot.slane %v3749, 3
    %v3789 = vsel %vm730, %v3788, %v3787
    %v3790 = vrot.slane %v3750, 2
    %v3791 = vsel %vm733, %v3790, %v3789
    %v3792 = vrot.slane %v3751, 1
    %v3793 = vsel %vm736, %v3792, %v3791
    %v3794 = vrot.slane %v3753, 7
    %v3795 = vsel %vm718, %v3794, %v3752
    %v3796 = vrot.slane %v3754, 6
    %v3797 = vsel %vm721, %v3796, %v3795
    %v3798 = vrot.slane %v3755, 5
    %v3799 = vsel %vm724, %v3798, %v3797
    %v3800 = vrot.slane %v3756, 4
    %v3801 = vsel %vm727, %v3800, %v3799
    %v3802 = vrot.slane %v3757, 3
    %v3803 = vsel %vm730, %v3802, %v3801
    %v3804 = vrot.slane %v3758, 2
    %v3805 = vsel %vm733, %v3804, %v3803
    %v3806 = vrot.slane %v3759, 1
    %v3807 = vsel %vm736, %v3806, %v3805
    %v3808 = vrot.slane %v3761, 7
    %v3809 = vsel %vm718, %v3808, %v3760
    %3810 = vrot.lane.b32.xlu0 %v3793, 4
    %v3811 = vpop.permute.xlu0 %3810
    %3812 = vrot.lane.b32.xlu0 %v3807, 4
    %v3813 = vpop.permute.xlu0 %3812
    %3814 = vrot.lane.b32.xlu0 %v3809, 4
    %v3815 = vpop.permute.xlu0 %3814
    %v3819 = vsel %vm115, 0.0, %v3811
    %v3820 = vsel %vm115, 0.0, %v3813
    %v3821 = vsel %vm115, 0.0, %v3815
    %v3825 = vrot.slane %v3819, 1
    %v3826 = vrot.slane %v3819, 2
    %v3827 = vrot.slane %v3819, 3
    %v3828 = vrot.slane %v3819, 4
    %v3829 = vrot.slane %v3819, 5
    %v3830 = vrot.slane %v3819, 6
    %v3831 = vrot.slane %v3819, 7
    %v3832 = vrot.slane %v3820, 1
    %v3833 = vrot.slane %v3820, 2
    %v3834 = vrot.slane %v3820, 3
    %v3835 = vrot.slane %v3820, 4
    %v3836 = vrot.slane %v3820, 5
    %v3837 = vrot.slane %v3820, 6
    %v3838 = vrot.slane %v3820, 7
    %v3839 = vrot.slane %v3821, 1
    %v3858 = vadd.f32 %v3744, %v3819
    %v3859 = vadd.f32 %v3745, %v3825
    %v3860 = vadd.f32 %v3746, %v3826
    %v3861 = vadd.f32 %v3747, %v3827
    %v3862 = vadd.f32 %v3748, %v3828
    %v3863 = vadd.f32 %v3749, %v3829
    %v3864 = vadd.f32 %v3750, %v3830
    %v3865 = vadd.f32 %v3751, %v3831
    %v3866 = vadd.f32 %v3752, %v3820
    %v3867 = vadd.f32 %v3753, %v3832
    %v3868 = vadd.f32 %v3754, %v3833
    %v3869 = vadd.f32 %v3755, %v3834
    %v3870 = vadd.f32 %v3756, %v3835
    %v3871 = vadd.f32 %v3757, %v3836
    %v3872 = vadd.f32 %v3758, %v3837
    %v3873 = vadd.f32 %v3759, %v3838
    %v3874 = vadd.f32 %v3760, %v3821
    %v3875 = vadd.f32 %v3761, %v3839
    %v3876 = vadd.f32 %v3858, 1.0
    %v3877 = vadd.f32 %v3859, 1.0
    %v3878 = vadd.f32 %v3860, 1.0
    %v3879 = vadd.f32 %v3861, 1.0
    %v3880 = vadd.f32 %v3862, 1.0
    %v3881 = vadd.f32 %v3863, 1.0
    %v3882 = vadd.f32 %v3864, 1.0
    %v3883 = vadd.f32 %v3865, 1.0
    %v3884 = vadd.f32 %v3866, 1.0
    %v3885 = vadd.f32 %v3867, 1.0
    %v3886 = vadd.f32 %v3868, 1.0
    %v3887 = vadd.f32 %v3869, 1.0
    %v3888 = vadd.f32 %v3870, 1.0
    %v3889 = vadd.f32 %v3871, 1.0
    %v3890 = vadd.f32 %v3872, 1.0
    %v3891 = vadd.f32 %v3873, 1.0
    %v3892 = vadd.f32 %v3874, 1.0
    %v3893 = vadd.f32 %v3875, 1.0
    %v3894 = vlaneseq
    %v3895 = vand.u32 %v3894, 127
    %v3896 = vlaneseq
    %v3897 = vshrl.u32 %v3896, 7
    %v3898 = vadd.s32 %v3897, 8
    %v3899 = vadd.s32 %v3897, 16
    %vm3900 = vcmp.lt.s32.totalorder %v3897, 12
    %vm3901 = vcmp.lt.s32.totalorder %v3898, 12
    %vm3902 = vcmp.lt.s32.totalorder %v3899, 12
    %v3903 = vsel %vm3900, 1.0, -2.0
    %v3904 = vsel %vm3901, 1.0, -2.0
    %v3905 = vsel %vm3902, 1.0, -2.0
    %vm3906 = vcmp.eq.s32.totalorder %v3895, 6
    %v3910 = vrot.slane %v3903, 1
    %v3911 = vrot.slane %v3903, 2
    %v3912 = vrot.slane %v3903, 3
    %v3913 = vrot.slane %v3903, 4
    %v3914 = vrot.slane %v3903, 5
    %v3915 = vrot.slane %v3903, 6
    %v3916 = vrot.slane %v3903, 7
    %v3917 = vrot.slane %v3904, 1
    %v3918 = vrot.slane %v3904, 2
    %v3919 = vrot.slane %v3904, 3
    %v3920 = vrot.slane %v3904, 4
    %v3921 = vrot.slane %v3904, 5
    %v3922 = vrot.slane %v3904, 6
    %v3923 = vrot.slane %v3904, 7
    %v3924 = vrot.slane %v3905, 1
    %v3943 = vmul.f32 %v3876, %v3903
    %v3944 = vmul.f32 %v3877, %v3910
    %v3945 = vmul.f32 %v3878, %v3911
    %v3946 = vmul.f32 %v3879, %v3912
    %v3947 = vmul.f32 %v3880, %v3913
    %v3948 = vmul.f32 %v3881, %v3914
    %v3949 = vmul.f32 %v3882, %v3915
    %v3950 = vmul.f32 %v3883, %v3916
    %v3951 = vmul.f32 %v3884, %v3904
    %v3952 = vmul.f32 %v3885, %v3917
    %v3953 = vmul.f32 %v3886, %v3918
    %v3954 = vmul.f32 %v3887, %v3919
    %v3955 = vmul.f32 %v3888, %v3920
    %v3956 = vmul.f32 %v3889, %v3921
    %v3957 = vmul.f32 %v3890, %v3922
    %v3958 = vmul.f32 %v3891, %v3923
    %v3959 = vmul.f32 %v3892, %v3905
    %v3960 = vmul.f32 %v3893, %v3924
    %v3979 = vrot.slane %v3944, 7
    %v3980 = vsel %vm718, %v3979, %v3943
    %v3981 = vrot.slane %v3945, 6
    %v3982 = vsel %vm721, %v3981, %v3980
    %v3983 = vrot.slane %v3946, 5
    %v3984 = vsel %vm724, %v3983, %v3982
    %v3985 = vrot.slane %v3947, 4
    %v3986 = vsel %vm727, %v3985, %v3984
    %v3987 = vrot.slane %v3948, 3
    %v3988 = vsel %vm730, %v3987, %v3986
    %v3989 = vrot.slane %v3949, 2
    %v3990 = vsel %vm733, %v3989, %v3988
    %v3991 = vrot.slane %v3950, 1
    %v3992 = vsel %vm736, %v3991, %v3990
    %v3993 = vrot.slane %v3952, 7
    %v3994 = vsel %vm718, %v3993, %v3951
    %v3995 = vrot.slane %v3953, 6
    %v3996 = vsel %vm721, %v3995, %v3994
    %v3997 = vrot.slane %v3954, 5
    %v3998 = vsel %vm724, %v3997, %v3996
    %v3999 = vrot.slane %v3955, 4
    %v4000 = vsel %vm727, %v3999, %v3998
    %v4001 = vrot.slane %v3956, 3
    %v4002 = vsel %vm730, %v4001, %v4000
    %v4003 = vrot.slane %v3957, 2
    %v4004 = vsel %vm733, %v4003, %v4002
    %v4005 = vrot.slane %v3958, 1
    %v4006 = vsel %vm736, %v4005, %v4004
    %v4007 = vrot.slane %v3960, 7
    %v4008 = vsel %vm718, %v4007, %v3959
    %v4012 = vsel %vm3906, %v3992, 0.0
    %v4013 = vsel %vm3906, %v4006, 0.0
    %v4014 = vsel %vm3906, %v4008, 0.0
    %vm4015 = vcmask 56320
    %v4016 = vsel %vm4015, %v4012, 0.0
    %v4017 = vsel %vm4015, %v4013, 0.0
    %v4018 = vadd.f32 %v4016, %v4017
    %vm4019 = vcmask 50176
    %v4020 = vsel %vm4019, %v4014, 0.0
    %v4021 = vadd.f32 %v4018, %v4020
    %4022 = vadd.xlane.f32.xlu0 %v4021
    %v4023 = vpop.xlane.xlu0 %4022
    %v4024 = vrot.slane %v4023, 4
    %v4025 = vadd.f32 %v4023, %v4024
    %v4026 = vrot.slane %v4025, 2
    %v4027 = vadd.f32 %v4025, %v4026
    %v4028 = vrot.slane %v4027, 1
    %v4029 = vadd.f32 %v4027, %v4028
    %s4030 = vtos %v4029
    %v4031 = vsub.f32 %v12, %v18
    %v4032 = vsub.f32 %v13, %v19
    %v4033 = vsub.f32 %v14, %v20
    %v4034 = vsub.f32 %v15, %v21
    %v4035 = vsub.f32 %v16, %v22
    %v4036 = vsub.f32 %v17, %v23
    %v4037 = vmul.f32 %v4031, %v4031
    %v4038 = vmul.f32 %v4032, %v4032
    %v4039 = vmul.f32 %v4033, %v4033
    %v4040 = vmul.f32 %v4034, %v4034
    %v4041 = vmul.f32 %v4035, %v4035
    %v4042 = vmul.f32 %v4036, %v4036
    %v4049 = vrot.slane %v4038, 7
    %v4050 = vsel %vm718, %v4049, %v4037
    %v4051 = vrot.slane %v4039, 6
    %v4052 = vsel %vm721, %v4051, %v4050
    %v4053 = vrot.slane %v4040, 5
    %v4054 = vsel %vm724, %v4053, %v4052
    %v4055 = vrot.slane %v4041, 4
    %v4056 = vsel %vm727, %v4055, %v4054
    %v4057 = vrot.slane %v4042, 3
    %v4058 = vsel %vm730, %v4057, %v4056
    %vm4060 = vcmask 29696
    %v4061 = vsel %vm4060, %v4058, 0.0
    %4062 = vadd.xlane.f32.xlu0 %v4061
    %v4063 = vpop.xlane.xlu0 %4062
    %v4064 = vrot.slane %v4063, 4
    %v4065 = vadd.f32 %v4063, %v4064
    %v4066 = vrot.slane %v4065, 2
    %v4067 = vadd.f32 %v4065, %v4066
    %v4068 = vrot.slane %v4067, 1
    %v4069 = vadd.f32 %v4067, %v4068
    %s4070 = vtos %v4069
    %vm4071 = vcmp.eq.s32.totalorder %v3897, 0
    %vm4072 = vcmp.eq.s32.totalorder %v3895, 0
    %vm4073 = vmand %vm4071, %vm4072
    %vm4074 = vcmp.eq.s32.totalorder %v3895, 1
    %vm4075 = vmand %vm4071, %vm4074
    %v4076 = vstv %s4070
    %v4077 = vsel %vm4075, %v4076, 0.0
    %v4078 = vstv %s4030
    %v4079 = vsel %vm4073, %v4078, %v4077
    %4080 = vst [vmem:[#allocation2] sm:$0xff] %v4079
    // Predicated region
    $region10: #{tpu_custom_call.1} parent=1 // pred_check
      _
    $region11: #{tpu_custom_call.1} parent=1 // pred_check_branch
      %4082 = sbr.rel (0) target = $region13
    $region12: #{tpu_custom_call.1} parent=1 // pred_region
      %s4084 = ssub.s32 128, 128
      %4085 = vsyncadd [#allocation3], %s4084
      %s4087 = sshll.u32 [#allocation2], 4
      %s4088 = int_to_ptr.vmem [resolvable:$true] %s4087
      %4090 = dma.vmem_to_hbm [thread:$0]  %s4088, 128, %s2, [#allocation3]
    $region13: #{tpu_custom_call.1} parent=1 // pred_fallthru
      _
    // Predicated region
    $region14: #{tpu_custom_call.1} parent=1 // pred_check
      _
    $region15: #{tpu_custom_call.1} parent=1 // pred_check_branch
      %4092 = sbr.rel (0) target = $region17
    $region16: #{tpu_custom_call.1} parent=1 // pred_region
      %4093 = dma.done [#allocation3], 128
    $region17: #{tpu_custom_call.1} parent=1 // pred_fallthru
      _
    %4094 = vsyncpa [#allocation3], 1

</llo_original>
